<compile_context>
chip_gen: v7x
topology: tpu7x:2x2x1
jax: 0.10.0
libtpu: 0.0.40
codegen_flags: <defaults>
</compile_context>

<pallas_src>
import functools
import math

import jax
import jax.numpy as jnp
from jax import lax
from jax.experimental import pallas as pl
from jax.experimental.pallas import tpu as pltpu


def _layernorm(x, w, b, eps=1e-5):
    mean = jnp.mean(x, axis=-1, keepdims=True)
    var = jnp.mean((x - mean) ** 2, axis=-1, keepdims=True)
    return (x - mean) * lax.rsqrt(var + eps) * w + b


def encoder_layer_kernel(x_ref, pos_ref,
                         wqk_ref, bqk_ref, wv_ref, bv_ref,
                         wo_ref, bo_ref,
                         ln1_w_ref, ln1_b_ref,
                         w1_ref, b1_ref, w2_ref, b2_ref,
                         ln2_w_ref, ln2_b_ref,
                         o_ref, attn_scratch, *, nhead, seq_len, ffn_tile):
    # Block is (M, D) token rows with M = bb * S (batch folded into the block).
    M, D = x_ref.shape
    S = seq_len
    bb = M // S
    dh = D // nhead

    x = x_ref[...]
    pos = pos_ref[...]
    x_f32 = x.astype(jnp.float32)
    qk_in = (x_f32 + pos.astype(jnp.float32)).astype(jnp.bfloat16)  # q = k = src + pos
    x16 = x.astype(jnp.bfloat16)

    # Fused Q/K projection (1/sqrt(dh) already folded into Q weights/bias
    # wrapper-side) + V projection.  bf16 operands, f32 accumulation.
    qk = jnp.dot(qk_in, wqk_ref[...], preferred_element_type=jnp.float32) + bqk_ref[0]
    v = jnp.dot(x16, wv_ref[...], preferred_element_type=jnp.float32) + bv_ref[0]
    qk16 = qk.astype(jnp.bfloat16)
    v16 = v.astype(jnp.bfloat16)

    # Multi-head scaled dot-product attention, batched over the bb folded batch
    # elements per head.  nhead is small & static -> unrolled loop.  Each head's
    # output is written at its lane offset into attn_scratch so the output
    # projection is a single full-K matmul.
    for h in range(nhead):
        lo, hi = h * dh, (h + 1) * dh
        qh = qk16[:, lo:hi].reshape(bb, S, dh)
        kh = qk16[:, D + lo:D + hi].reshape(bb, S, dh)
        vh = v16[:, lo:hi].reshape(bb, S, dh)
        s = jnp.einsum('bqd,bkd->bqk', qh, kh,
                       preferred_element_type=jnp.float32)        # (bb, S, S)
        s = s - jnp.max(s, axis=-1, keepdims=True)
        p = jnp.exp(s)
        p = p * pl.reciprocal(jnp.sum(p, axis=-1, keepdims=True), approx=True)
        oh = jnp.einsum('bqk,bkd->bqd', p.astype(jnp.bfloat16), vh,
                        preferred_element_type=jnp.float32)       # (bb, S, dh)
        attn_scratch[:, lo:hi] = oh.reshape(M, dh)

    attn = jnp.dot(attn_scratch[...].astype(jnp.bfloat16), wo_ref[...],
                   preferred_element_type=jnp.float32) + bo_ref[0]

    # TODO(synk): dropout / dropout1 / dropout2 are identity (eval semantics).
    y = _layernorm(x_f32 + attn, ln1_w_ref[0], ln1_b_ref[0])
    y16 = y.astype(jnp.bfloat16)

    # Feed-forward: linear2(relu(linear1(y))), tiled over the F axis so the
    # live (M, Ft) intermediate stays small (weights pre-transposed, bf16).
    F = w1_ref.shape[1]
    b1v = b1_ref[0]
    ff = jnp.zeros((M, D), jnp.float32)
    for f0 in range(0, F, ffn_tile):
        f1 = min(F, f0 + ffn_tile)
        h1 = jnp.dot(y16, w1_ref[:, f0:f1],
                     preferred_element_type=jnp.float32) + b1v[f0:f1]
        h1 = jnp.maximum(h1, 0.0).astype(jnp.bfloat16)
        ff = ff + jnp.dot(h1, w2_ref[f0:f1, :],
                          preferred_element_type=jnp.float32)
    ff = ff + b2_ref[0]

    z = _layernorm(y + ff, ln2_w_ref[0], ln2_b_ref[0])
    o_ref[...] = z.astype(o_ref.dtype)


def _choose_tuning():
    """Generation-aware block-size / VMEM-limit choices."""
    cap = None
    try:
        cap = int(pltpu.get_tpu_info().vmem_capacity_bytes)
    except Exception:
        cap = None
    if cap is not None and cap > 96 * 1024 * 1024:
        # v5e / v6e: 128 MiB VMEM, single TensorCore -> bigger serial blocks.
        return dict(target_rows=1024, prefer_even_grid=False,
                    vmem_limit=64 * 1024 * 1024)
    # v7x-class (64 MiB VMEM, 2 TCs) or unknown -> conservative VMEM, even grid.
    return dict(target_rows=512, prefer_even_grid=True,
                vmem_limit=48 * 1024 * 1024)


def _pick_batch_block(B, S, target_rows, prefer_even_grid):
    """Fold enough batch elements per grid step for ~target_rows matmul rows."""
    bb = max(1, min(B, max(1, target_rows // S)))
    while B % bb:
        bb -= 1
    # Prefer an even number of grid steps (feeds both v7x TensorCores) when each
    # step still carries enough rows to keep the MXU busy.
    if prefer_even_grid and (B // bb) % 2 == 1 and bb % 2 == 0 and (bb // 2) * S >= 256:
        bb //= 2
    return bb


def _encoder_layer_call(x2, pos2, p, nhead, S, bb, ffn_tile, vmem_limit,
                        single_buffer_weights):
    rows, D = x2.shape
    F = p["w1"].shape[1]
    M = bb * S

    row_spec = pl.BlockSpec((M, D), lambda i: (i, 0))

    def wspec(shape):
        idx = lambda i, _n=len(shape): (0,) * _n
        if single_buffer_weights:
            # Grid-invariant operands: no need for double buffering.
            return pl.BlockSpec(shape, idx, pipeline_mode=pl.Buffered(1))
        return pl.BlockSpec(shape, idx)

    kernel = functools.partial(encoder_layer_kernel, nhead=nhead, seq_len=S,
                               ffn_tile=ffn_tile)
    return pl.pallas_call(
        kernel,
        out_shape=jax.ShapeDtypeStruct((rows, D), x2.dtype),
        grid=(rows // M,),
        in_specs=[
            row_spec, row_spec,                          # x, pos (token rows)
            wspec((D, 2 * D)), wspec((1, 2 * D)),        # fused Wq|Wk (bf16), bq|bk
            wspec((D, D)), wspec((1, D)),                # Wv (bf16), bv
            wspec((D, D)), wspec((1, D)),                # out_proj (pre-T, bf16), bias
            wspec((1, D)), wspec((1, D)),                # ln1 w / b
            wspec((D, F)), wspec((1, F)),                # linear1 (pre-T, bf16), bias
            wspec((F, D)), wspec((1, D)),                # linear2 (pre-T, bf16), bias
            wspec((1, D)), wspec((1, D)),                # ln2 w / b
        ],
        out_specs=row_spec,
        scratch_shapes=[pltpu.VMEM((M, D), jnp.float32)],   # head reassembly
        compiler_params=pltpu.CompilerParams(
            dimension_semantics=("parallel",),
            vmem_limit_bytes=vmem_limit,
        ),
    )(x2, pos2,
      p["w_qk"], p["b_qk"], p["w_v"], p["b_v"],
      p["w_o"], p["b_o"], p["ln1_w"], p["ln1_b"],
      p["w1"], p["b1"], p["w2"], p["b2"], p["ln2_w"], p["ln2_b"])


_SINGLE_BUFFER_WEIGHTS_OK = None   # one-time probe for pipeline_mode=Buffered(1)


def encoder_layer(x, pos, p, nhead, tuning):
    """x, pos: (B, S, D) with pre-packed params p. One post-norm encoder layer."""
    global _SINGLE_BUFFER_WEIGHTS_OK
    B, S, D = x.shape
    assert D % nhead == 0, "d_model must be divisible by nhead"
    # TODO(synk): if S = h*w is not a multiple of 8, the per-head (bb, S, dh)
    # reshapes cross (8,128) tile boundaries and cost extra relayout copies.
    bb = _pick_batch_block(B, S, tuning["target_rows"], tuning["prefer_even_grid"])
    F = p["w1"].shape[1]
    ffn_tile = min(F, 512)

    x2 = x.reshape(B * S, D)
    pos2 = pos.reshape(B * S, D)
    args = (x2, pos2, p, nhead, S, bb, ffn_tile, tuning["vmem_limit"])

    if _SINGLE_BUFFER_WEIGHTS_OK is None:
        try:
            out = jax.block_until_ready(
                _encoder_layer_call(*args, single_buffer_weights=True))
            _SINGLE_BUFFER_WEIGHTS_OK = True
        except Exception:
            _SINGLE_BUFFER_WEIGHTS_OK = False
            out = _encoder_layer_call(*args, single_buffer_weights=False)
    else:
        out = _encoder_layer_call(
            *args, single_buffer_weights=_SINGLE_BUFFER_WEIGHTS_OK)
    return out.reshape(B, S, D)


def _prepack_layer_params(p, nhead):
    """Wrapper-side layout plumbing: pre-transpose weights (bf16), split/fuse
    in_proj, fold the 1/sqrt(dh) attention scale into the Q weights/bias."""
    D = p["out_w"].shape[0]
    dh = D // nhead
    scale = 1.0 / math.sqrt(dh)
    in_w, in_b = p["in_w"], p["in_b"]          # (3D, D) rows [Wq; Wk; Wv], (3D,)
    wq = in_w[:D].T * scale
    wk = in_w[D:2 * D].T
    wv = in_w[2 * D:].T
    bq = in_b[:D] * scale
    bk = in_b[D:2 * D]
    bv = in_b[2 * D:]
    row = lambda v: v.reshape(1, -1)
    bf16 = lambda a: a.astype(jnp.bfloat16)
    return {
        "w_qk": bf16(jnp.concatenate([wq, wk], axis=1)),                 # (D, 2D)
        "b_qk": row(jnp.concatenate([bq, bk])),
        "w_v": bf16(wv),                                                 # (D, D)
        "b_v": row(bv),
        "w_o": bf16(p["out_w"].T),                                       # (D, D)
        "b_o": row(p["out_b"]),
        "ln1_w": row(p["ln1_w"]), "ln1_b": row(p["ln1_b"]),
        "w1": bf16(p["lin1_w"].T),                                       # (D, F)
        "b1": row(p["lin1_b"]),
        "w2": bf16(p["lin2_w"].T),                                       # (F, D)
        "b2": row(p["lin2_b"]),
        "ln2_w": row(p["ln2_w"]), "ln2_b": row(p["ln2_b"]),
    }


def transformer_forward(src, pos_embed, layer_params, nhead):
    """src: (bs, c, h, w) NCHW; pos_embed: (h*w, bs, c) (PyTorch seq-first)."""
    bs, c, h, w = src.shape
    x = src.reshape(bs, c, h * w).transpose(0, 2, 1)      # (B, S, D)
    pos = pos_embed.transpose(1, 0, 2)                    # (S, B, D) -> (B, S, D)
    tuning = _choose_tuning()
    packed = [_prepack_layer_params(p, nhead) for p in layer_params]
    for p in packed:
        x = encoder_layer(x, pos, p, nhead, tuning)
    # memory.permute(1, 2, 0).view(bs, c, h, w)  ==  (B, D, S).reshape(...)
    return x.transpose(0, 2, 1).reshape(bs, c, h, w)


def _xavier(key, shape):
    fan_out, fan_in = shape
    a = math.sqrt(6.0 / (fan_in + fan_out))
    return jax.random.uniform(key, shape, jnp.float32, -a, a)


def make_layer_params(key, d_model, nhead, dim_feedforward):
    ks = jax.random.split(key, 8)
    D, F = d_model, dim_feedforward
    return {
        "in_w": _xavier(ks[0], (3 * D, D)),
        "in_b": 0.02 * jax.random.normal(ks[1], (3 * D,), jnp.float32),
        "out_w": _xavier(ks[2], (D, D)),
        "out_b": 0.02 * jax.random.normal(ks[3], (D,), jnp.float32),
        "ln1_w": jnp.ones((D,), jnp.float32),
        "ln1_b": jnp.zeros((D,), jnp.float32),
        "lin1_w": _xavier(ks[4], (F, D)),
        "lin1_b": 0.02 * jax.random.normal(ks[5], (F,), jnp.float32),
        "lin2_w": _xavier(ks[6], (D, F)),
        "lin2_b": 0.02 * jax.random.normal(ks[7], (D,), jnp.float32),
        "ln2_w": jnp.ones((D,), jnp.float32),
        "ln2_b": jnp.zeros((D,), jnp.float32),
    }


if __name__ == "__main__":
    # Small-shape config consistent with Transformer(d_model=c, nhead, ...):
    bs, c, h, w = 2, 32, 4, 4          # d_model = c = 32
    nhead = 4
    dim_feedforward = 64
    num_encoder_layers = 2             # structurally identical per layer

    key = jax.random.PRNGKey(0)
    k_src, k_pos, k_par = jax.random.split(key, 3)

    src = jax.random.normal(k_src, (bs, c, h, w), jnp.float32)
    pos_embed = jax.random.normal(k_pos, (h * w, bs, c), jnp.float32)

    layer_keys = jax.random.split(k_par, num_encoder_layers)
    layer_params = [make_layer_params(lk, c, nhead, dim_feedforward)
                    for lk in layer_keys]

    out = transformer_forward(src, pos_embed, layer_params, nhead)
    out = jax.block_until_ready(out)
    assert out.shape == (bs, c, h, w) and out.dtype == jnp.float32
    print("KERNEL_OK")
</pallas_src>

<mosaic_0001>
module attributes {stable_mosaic.version = 11 : i64} {
  func.func @encoder_layer_kernel(%arg0: i32, %arg1: memref<32x32xf32, #tpu.memory_space<vmem>>, %arg2: memref<32x32xf32, #tpu.memory_space<vmem>>, %arg3: memref<32x64xbf16, #tpu.memory_space<vmem>>, %arg4: memref<1x64xf32, #tpu.memory_space<vmem>>, %arg5: memref<32x32xbf16, #tpu.memory_space<vmem>>, %arg6: memref<1x32xf32, #tpu.memory_space<vmem>>, %arg7: memref<32x32xbf16, #tpu.memory_space<vmem>>, %arg8: memref<1x32xf32, #tpu.memory_space<vmem>>, %arg9: memref<1x32xf32, #tpu.memory_space<vmem>>, %arg10: memref<1x32xf32, #tpu.memory_space<vmem>>, %arg11: memref<32x64xbf16, #tpu.memory_space<vmem>>, %arg12: memref<1x64xf32, #tpu.memory_space<vmem>>, %arg13: memref<64x32xbf16, #tpu.memory_space<vmem>>, %arg14: memref<1x32xf32, #tpu.memory_space<vmem>>, %arg15: memref<1x32xf32, #tpu.memory_space<vmem>>, %arg16: memref<1x32xf32, #tpu.memory_space<vmem>>, %arg17: memref<32x32xf32, #tpu.memory_space<vmem>>, %arg18: memref<32x32xf32, #tpu.memory_space<vmem>>) attributes {dimension_semantics = [#tpu.dimension_semantics<parallel>], iteration_bounds = array<i64: 1>, scalar_prefetch = 0 : i64, scratch_operands = 1 : i64, tpu.core_type = #tpu.core_type<tc>, window_params = [{transform_indices = @transform_0, window_bounds = array<i64: 32, 32>}, {transform_indices = @transform_1, window_bounds = array<i64: 32, 32>}, {pipeline_mode = #tpu.pipeline_mode<synchronous>, transform_indices = @transform_2, window_bounds = array<i64: 32, 64>}, {pipeline_mode = #tpu.pipeline_mode<synchronous>, transform_indices = @transform_3, window_bounds = array<i64: 1, 64>}, {pipeline_mode = #tpu.pipeline_mode<synchronous>, transform_indices = @transform_4, window_bounds = array<i64: 32, 32>}, {pipeline_mode = #tpu.pipeline_mode<synchronous>, transform_indices = @transform_5, window_bounds = array<i64: 1, 32>}, {pipeline_mode = #tpu.pipeline_mode<synchronous>, transform_indices = @transform_6, window_bounds = array<i64: 32, 32>}, {pipeline_mode = #tpu.pipeline_mode<synchronous>, transform_indices = @transform_7, window_bounds = array<i64: 1, 32>}, {pipeline_mode = #tpu.pipeline_mode<synchronous>, transform_indices = @transform_8, window_bounds = array<i64: 1, 32>}, {pipeline_mode = #tpu.pipeline_mode<synchronous>, transform_indices = @transform_9, window_bounds = array<i64: 1, 32>}, {pipeline_mode = #tpu.pipeline_mode<synchronous>, transform_indices = @transform_10, window_bounds = array<i64: 32, 64>}, {pipeline_mode = #tpu.pipeline_mode<synchronous>, transform_indices = @transform_11, window_bounds = array<i64: 1, 64>}, {pipeline_mode = #tpu.pipeline_mode<synchronous>, transform_indices = @transform_12, window_bounds = array<i64: 64, 32>}, {pipeline_mode = #tpu.pipeline_mode<synchronous>, transform_indices = @transform_13, window_bounds = array<i64: 1, 32>}, {pipeline_mode = #tpu.pipeline_mode<synchronous>, transform_indices = @transform_14, window_bounds = array<i64: 1, 32>}, {pipeline_mode = #tpu.pipeline_mode<synchronous>, transform_indices = @transform_15, window_bounds = array<i64: 1, 32>}, {transform_indices = @transform_16, window_bounds = array<i64: 32, 32>}]} {
    %c0 = arith.constant 0 : index
    %c0_0 = arith.constant 0 : index
    %0 = vector.load %arg1[%c0, %c0_0] : memref<32x32xf32, #tpu.memory_space<vmem>>, vector<32x32xf32>
    %c0_1 = arith.constant 0 : index
    %c0_2 = arith.constant 0 : index
    %1 = vector.load %arg2[%c0_1, %c0_2] : memref<32x32xf32, #tpu.memory_space<vmem>>, vector<32x32xf32>
    %2 = arith.addf %0, %1 : vector<32x32xf32>
    %3 = arith.truncf %2 : vector<32x32xf32> to vector<32x32xbf16>
    %4 = arith.truncf %0 : vector<32x32xf32> to vector<32x32xbf16>
    %c0_3 = arith.constant 0 : index
    %c0_4 = arith.constant 0 : index
    %5 = vector.load %arg3[%c0_3, %c0_4] : memref<32x64xbf16, #tpu.memory_space<vmem>>, vector<32x64xbf16>
    %cst = arith.constant dense<0.000000e+00> : vector<32x64xf32>
    %6 = tpu.matmul %3, %5, %cst {dimension_numbers = #tpu.dot_dimension_numbers<[1], [0], [0], [1], [0, 0, 1, 1], [], []>} : vector<32x32xbf16>, vector<32x64xbf16>, vector<32x64xf32> -> vector<32x64xf32>
    %c0_5 = arith.constant 0 : index
    %c0_6 = arith.constant 0 : index
    %7 = vector.load %arg4[%c0_5, %c0_6] : memref<1x64xf32, #tpu.memory_space<vmem>>, vector<1x64xf32>
    %8 = vector.shape_cast %7 : vector<1x64xf32> to vector<64xf32>
    %9 = vector.shape_cast %8 : vector<64xf32> to vector<1x64xf32>
    %10 = vector.broadcast %9 : vector<1x64xf32> to vector<32x64xf32>
    %11 = arith.addf %6, %10 : vector<32x64xf32>
    %c0_7 = arith.constant 0 : index
    %c0_8 = arith.constant 0 : index
    %12 = vector.load %arg5[%c0_7, %c0_8] : memref<32x32xbf16, #tpu.memory_space<vmem>>, vector<32x32xbf16>
    %cst_9 = arith.constant dense<0.000000e+00> : vector<32x32xf32>
    %13 = tpu.matmul %4, %12, %cst_9 {dimension_numbers = #tpu.dot_dimension_numbers<[1], [0], [0], [1], [0, 0, 1, 1], [], []>} : vector<32x32xbf16>, vector<32x32xbf16>, vector<32x32xf32> -> vector<32x32xf32>
    %c0_10 = arith.constant 0 : index
    %c0_11 = arith.constant 0 : index
    %14 = vector.load %arg6[%c0_10, %c0_11] : memref<1x32xf32, #tpu.memory_space<vmem>>, vector<1x32xf32>
    %15 = vector.shape_cast %14 : vector<1x32xf32> to vector<32xf32>
    %16 = vector.shape_cast %15 : vector<32xf32> to vector<1x32xf32>
    %17 = vector.broadcast %16 : vector<1x32xf32> to vector<32x32xf32>
    %18 = arith.addf %13, %17 : vector<32x32xf32>
    %19 = arith.truncf %11 : vector<32x64xf32> to vector<32x64xbf16>
    %20 = arith.truncf %18 : vector<32x32xf32> to vector<32x32xbf16>
    %21 = vector.extract_strided_slice %19 {offsets = [0, 0], sizes = [32, 8], strides = [1, 1]} : vector<32x64xbf16> to vector<32x8xbf16>
    %22 = vector.shape_cast %21 : vector<32x8xbf16> to vector<2x16x8xbf16>
    %23 = vector.extract_strided_slice %19 {offsets = [0, 32], sizes = [32, 8], strides = [1, 1]} : vector<32x64xbf16> to vector<32x8xbf16>
    %24 = vector.shape_cast %23 : vector<32x8xbf16> to vector<2x16x8xbf16>
    %25 = vector.extract_strided_slice %20 {offsets = [0, 0], sizes = [32, 8], strides = [1, 1]} : vector<32x32xbf16> to vector<32x8xbf16>
    %26 = vector.shape_cast %25 : vector<32x8xbf16> to vector<2x16x8xbf16>
    "tpu.trace_start"() <{level = 10 : i32, message = "bqd,bkd->bqk"}> : () -> ()
    %cst_12 = arith.constant dense<0.000000e+00> : vector<2x16x16xf32>
    %27 = tpu.matmul %22, %24, %cst_12 {dimension_numbers = #tpu.dot_dimension_numbers<[2], [2], [1], [1], [0, 0, 0, 1, 1, 1], [0], [0]>} : vector<2x16x8xbf16>, vector<2x16x8xbf16>, vector<2x16x16xf32> -> vector<2x16x16xf32>
    "tpu.trace_stop"() : () -> ()
    %cst_13 = arith.constant dense<0xFF800000> : vector<2x16xf32>
    %28 = vector.multi_reduction <maximumf>, %27, %cst_13 [2] : vector<2x16x16xf32> to vector<2x16xf32>
    %29 = vector.shape_cast %28 : vector<2x16xf32> to vector<2x16x1xf32>
    %30 = vector.broadcast %29 : vector<2x16x1xf32> to vector<2x16x16xf32>
    %31 = arith.subf %27, %30 : vector<2x16x16xf32>
    %32 = math.exp %31 : vector<2x16x16xf32>
    %cst_14 = arith.constant dense<0.000000e+00> : vector<2x16xf32>
    %33 = vector.multi_reduction <add>, %32, %cst_14 [2] : vector<2x16x16xf32> to vector<2x16xf32>
    %34 = vector.shape_cast %33 : vector<2x16xf32> to vector<2x16x1xf32>
    %35 = tpu.reciprocal %34 {approx = true} : vector<2x16x1xf32> -> vector<2x16x1xf32>
    %36 = vector.broadcast %35 : vector<2x16x1xf32> to vector<2x16x16xf32>
    %37 = arith.mulf %32, %36 : vector<2x16x16xf32>
    %38 = arith.truncf %37 : vector<2x16x16xf32> to vector<2x16x16xbf16>
    "tpu.trace_start"() <{level = 10 : i32, message = "bqk,bkd->bqd"}> : () -> ()
    %cst_15 = arith.constant dense<0.000000e+00> : vector<2x16x8xf32>
    %39 = tpu.matmul %38, %26, %cst_15 {dimension_numbers = #tpu.dot_dimension_numbers<[2], [1], [1], [2], [0, 0, 0, 1, 1, 2], [0], [0]>} : vector<2x16x16xbf16>, vector<2x16x8xbf16>, vector<2x16x8xf32> -> vector<2x16x8xf32>
    "tpu.trace_stop"() : () -> ()
    %40 = vector.shape_cast %39 : vector<2x16x8xf32> to vector<32x8xf32>
    %c0_16 = arith.constant 0 : index
    %c0_17 = arith.constant 0 : index
    %41 = vector.load %arg18[%c0_16, %c0_17] : memref<32x32xf32, #tpu.memory_space<vmem>>, vector<32x8xf32>
    tpu.vector_store %arg18[%c0_16, %c0_17], %40 {strides = array<i32>} : memref<32x32xf32, #tpu.memory_space<vmem>>, vector<32x8xf32>,
    %42 = vector.extract_strided_slice %19 {offsets = [0, 8], sizes = [32, 8], strides = [1, 1]} : vector<32x64xbf16> to vector<32x8xbf16>
    %43 = vector.shape_cast %42 : vector<32x8xbf16> to vector<2x16x8xbf16>
    %44 = vector.extract_strided_slice %19 {offsets = [0, 40], sizes = [32, 8], strides = [1, 1]} : vector<32x64xbf16> to vector<32x8xbf16>
    %45 = vector.shape_cast %44 : vector<32x8xbf16> to vector<2x16x8xbf16>
    %46 = vector.extract_strided_slice %20 {offsets = [0, 8], sizes = [32, 8], strides = [1, 1]} : vector<32x32xbf16> to vector<32x8xbf16>
    %47 = vector.shape_cast %46 : vector<32x8xbf16> to vector<2x16x8xbf16>
    "tpu.trace_start"() <{level = 10 : i32, message = "bqd,bkd->bqk"}> : () -> ()
    %cst_18 = arith.constant dense<0.000000e+00> : vector<2x16x16xf32>
    %48 = tpu.matmul %43, %45, %cst_18 {dimension_numbers = #tpu.dot_dimension_numbers<[2], [2], [1], [1], [0, 0, 0, 1, 1, 1], [0], [0]>} : vector<2x16x8xbf16>, vector<2x16x8xbf16>, vector<2x16x16xf32> -> vector<2x16x16xf32>
    "tpu.trace_stop"() : () -> ()
    %cst_19 = arith.constant dense<0xFF800000> : vector<2x16xf32>
    %49 = vector.multi_reduction <maximumf>, %48, %cst_19 [2] : vector<2x16x16xf32> to vector<2x16xf32>
    %50 = vector.shape_cast %49 : vector<2x16xf32> to vector<2x16x1xf32>
    %51 = vector.broadcast %50 : vector<2x16x1xf32> to vector<2x16x16xf32>
    %52 = arith.subf %48, %51 : vector<2x16x16xf32>
    %53 = math.exp %52 : vector<2x16x16xf32>
    %cst_20 = arith.constant dense<0.000000e+00> : vector<2x16xf32>
    %54 = vector.multi_reduction <add>, %53, %cst_20 [2] : vector<2x16x16xf32> to vector<2x16xf32>
    %55 = vector.shape_cast %54 : vector<2x16xf32> to vector<2x16x1xf32>
    %56 = tpu.reciprocal %55 {approx = true} : vector<2x16x1xf32> -> vector<2x16x1xf32>
    %57 = vector.broadcast %56 : vector<2x16x1xf32> to vector<2x16x16xf32>
    %58 = arith.mulf %53, %57 : vector<2x16x16xf32>
    %59 = arith.truncf %58 : vector<2x16x16xf32> to vector<2x16x16xbf16>
    "tpu.trace_start"() <{level = 10 : i32, message = "bqk,bkd->bqd"}> : () -> ()
    %cst_21 = arith.constant dense<0.000000e+00> : vector<2x16x8xf32>
    %60 = tpu.matmul %59, %47, %cst_21 {dimension_numbers = #tpu.dot_dimension_numbers<[2], [1], [1], [2], [0, 0, 0, 1, 1, 2], [0], [0]>} : vector<2x16x16xbf16>, vector<2x16x8xbf16>, vector<2x16x8xf32> -> vector<2x16x8xf32>
    "tpu.trace_stop"() : () -> ()
    %61 = vector.shape_cast %60 : vector<2x16x8xf32> to vector<32x8xf32>
    %c0_22 = arith.constant 0 : index
    %c8 = arith.constant 8 : index
    %62 = vector.load %arg18[%c0_22, %c8] : memref<32x32xf32, #tpu.memory_space<vmem>>, vector<32x8xf32>
    tpu.vector_store %arg18[%c0_22, %c8], %61 {strides = array<i32>} : memref<32x32xf32, #tpu.memory_space<vmem>>, vector<32x8xf32>,
    %63 = vector.extract_strided_slice %19 {offsets = [0, 16], sizes = [32, 8], strides = [1, 1]} : vector<32x64xbf16> to vector<32x8xbf16>
    %64 = vector.shape_cast %63 : vector<32x8xbf16> to vector<2x16x8xbf16>
    %65 = vector.extract_strided_slice %19 {offsets = [0, 48], sizes = [32, 8], strides = [1, 1]} : vector<32x64xbf16> to vector<32x8xbf16>
    %66 = vector.shape_cast %65 : vector<32x8xbf16> to vector<2x16x8xbf16>
    %67 = vector.extract_strided_slice %20 {offsets = [0, 16], sizes = [32, 8], strides = [1, 1]} : vector<32x32xbf16> to vector<32x8xbf16>
    %68 = vector.shape_cast %67 : vector<32x8xbf16> to vector<2x16x8xbf16>
    "tpu.trace_start"() <{level = 10 : i32, message = "bqd,bkd->bqk"}> : () -> ()
    %cst_23 = arith.constant dense<0.000000e+00> : vector<2x16x16xf32>
    %69 = tpu.matmul %64, %66, %cst_23 {dimension_numbers = #tpu.dot_dimension_numbers<[2], [2], [1], [1], [0, 0, 0, 1, 1, 1], [0], [0]>} : vector<2x16x8xbf16>, vector<2x16x8xbf16>, vector<2x16x16xf32> -> vector<2x16x16xf32>
    "tpu.trace_stop"() : () -> ()
    %cst_24 = arith.constant dense<0xFF800000> : vector<2x16xf32>
    %70 = vector.multi_reduction <maximumf>, %69, %cst_24 [2] : vector<2x16x16xf32> to vector<2x16xf32>
    %71 = vector.shape_cast %70 : vector<2x16xf32> to vector<2x16x1xf32>
    %72 = vector.broadcast %71 : vector<2x16x1xf32> to vector<2x16x16xf32>
    %73 = arith.subf %69, %72 : vector<2x16x16xf32>
    %74 = math.exp %73 : vector<2x16x16xf32>
    %cst_25 = arith.constant dense<0.000000e+00> : vector<2x16xf32>
    %75 = vector.multi_reduction <add>, %74, %cst_25 [2] : vector<2x16x16xf32> to vector<2x16xf32>
    %76 = vector.shape_cast %75 : vector<2x16xf32> to vector<2x16x1xf32>
    %77 = tpu.reciprocal %76 {approx = true} : vector<2x16x1xf32> -> vector<2x16x1xf32>
    %78 = vector.broadcast %77 : vector<2x16x1xf32> to vector<2x16x16xf32>
    %79 = arith.mulf %74, %78 : vector<2x16x16xf32>
    %80 = arith.truncf %79 : vector<2x16x16xf32> to vector<2x16x16xbf16>
    "tpu.trace_start"() <{level = 10 : i32, message = "bqk,bkd->bqd"}> : () -> ()
    %cst_26 = arith.constant dense<0.000000e+00> : vector<2x16x8xf32>
    %81 = tpu.matmul %80, %68, %cst_26 {dimension_numbers = #tpu.dot_dimension_numbers<[2], [1], [1], [2], [0, 0, 0, 1, 1, 2], [0], [0]>} : vector<2x16x16xbf16>, vector<2x16x8xbf16>, vector<2x16x8xf32> -> vector<2x16x8xf32>
    "tpu.trace_stop"() : () -> ()
    %82 = vector.shape_cast %81 : vector<2x16x8xf32> to vector<32x8xf32>
    %c0_27 = arith.constant 0 : index
    %c16 = arith.constant 16 : index
    %83 = vector.load %arg18[%c0_27, %c16] : memref<32x32xf32, #tpu.memory_space<vmem>>, vector<32x8xf32>
    tpu.vector_store %arg18[%c0_27, %c16], %82 {strides = array<i32>} : memref<32x32xf32, #tpu.memory_space<vmem>>, vector<32x8xf32>,
    %84 = vector.extract_strided_slice %19 {offsets = [0, 24], sizes = [32, 8], strides = [1, 1]} : vector<32x64xbf16> to vector<32x8xbf16>
    %85 = vector.shape_cast %84 : vector<32x8xbf16> to vector<2x16x8xbf16>
    %86 = vector.extract_strided_slice %19 {offsets = [0, 56], sizes = [32, 8], strides = [1, 1]} : vector<32x64xbf16> to vector<32x8xbf16>
    %87 = vector.shape_cast %86 : vector<32x8xbf16> to vector<2x16x8xbf16>
    %88 = vector.extract_strided_slice %20 {offsets = [0, 24], sizes = [32, 8], strides = [1, 1]} : vector<32x32xbf16> to vector<32x8xbf16>
    %89 = vector.shape_cast %88 : vector<32x8xbf16> to vector<2x16x8xbf16>
    "tpu.trace_start"() <{level = 10 : i32, message = "bqd,bkd->bqk"}> : () -> ()
    %cst_28 = arith.constant dense<0.000000e+00> : vector<2x16x16xf32>
    %90 = tpu.matmul %85, %87, %cst_28 {dimension_numbers = #tpu.dot_dimension_numbers<[2], [2], [1], [1], [0, 0, 0, 1, 1, 1], [0], [0]>} : vector<2x16x8xbf16>, vector<2x16x8xbf16>, vector<2x16x16xf32> -> vector<2x16x16xf32>
    "tpu.trace_stop"() : () -> ()
    %cst_29 = arith.constant dense<0xFF800000> : vector<2x16xf32>
    %91 = vector.multi_reduction <maximumf>, %90, %cst_29 [2] : vector<2x16x16xf32> to vector<2x16xf32>
    %92 = vector.shape_cast %91 : vector<2x16xf32> to vector<2x16x1xf32>
    %93 = vector.broadcast %92 : vector<2x16x1xf32> to vector<2x16x16xf32>
    %94 = arith.subf %90, %93 : vector<2x16x16xf32>
    %95 = math.exp %94 : vector<2x16x16xf32>
    %cst_30 = arith.constant dense<0.000000e+00> : vector<2x16xf32>
    %96 = vector.multi_reduction <add>, %95, %cst_30 [2] : vector<2x16x16xf32> to vector<2x16xf32>
    %97 = vector.shape_cast %96 : vector<2x16xf32> to vector<2x16x1xf32>
    %98 = tpu.reciprocal %97 {approx = true} : vector<2x16x1xf32> -> vector<2x16x1xf32>
    %99 = vector.broadcast %98 : vector<2x16x1xf32> to vector<2x16x16xf32>
    %100 = arith.mulf %95, %99 : vector<2x16x16xf32>
    %101 = arith.truncf %100 : vector<2x16x16xf32> to vector<2x16x16xbf16>
    "tpu.trace_start"() <{level = 10 : i32, message = "bqk,bkd->bqd"}> : () -> ()
    %cst_31 = arith.constant dense<0.000000e+00> : vector<2x16x8xf32>
    %102 = tpu.matmul %101, %89, %cst_31 {dimension_numbers = #tpu.dot_dimension_numbers<[2], [1], [1], [2], [0, 0, 0, 1, 1, 2], [0], [0]>} : vector<2x16x16xbf16>, vector<2x16x8xbf16>, vector<2x16x8xf32> -> vector<2x16x8xf32>
    "tpu.trace_stop"() : () -> ()
    %103 = vector.shape_cast %102 : vector<2x16x8xf32> to vector<32x8xf32>
    %c0_32 = arith.constant 0 : index
    %c24 = arith.constant 24 : index
    %104 = vector.load %arg18[%c0_32, %c24] : memref<32x32xf32, #tpu.memory_space<vmem>>, vector<32x8xf32>
    tpu.vector_store %arg18[%c0_32, %c24], %103 {strides = array<i32>} : memref<32x32xf32, #tpu.memory_space<vmem>>, vector<32x8xf32>,
    %c0_33 = arith.constant 0 : index
    %c0_34 = arith.constant 0 : index
    %105 = vector.load %arg18[%c0_33, %c0_34] : memref<32x32xf32, #tpu.memory_space<vmem>>, vector<32x32xf32>
    %106 = arith.truncf %105 : vector<32x32xf32> to vector<32x32xbf16>
    %c0_35 = arith.constant 0 : index
    %c0_36 = arith.constant 0 : index
    %107 = vector.load %arg7[%c0_35, %c0_36] : memref<32x32xbf16, #tpu.memory_space<vmem>>, vector<32x32xbf16>
    %cst_37 = arith.constant dense<0.000000e+00> : vector<32x32xf32>
    %108 = tpu.matmul %106, %107, %cst_37 {dimension_numbers = #tpu.dot_dimension_numbers<[1], [0], [0], [1], [0, 0, 1, 1], [], []>} : vector<32x32xbf16>, vector<32x32xbf16>, vector<32x32xf32> -> vector<32x32xf32>
    %c0_38 = arith.constant 0 : index
    %c0_39 = arith.constant 0 : index
    %109 = vector.load %arg8[%c0_38, %c0_39] : memref<1x32xf32, #tpu.memory_space<vmem>>, vector<1x32xf32>
    %110 = vector.shape_cast %109 : vector<1x32xf32> to vector<32xf32>
    %111 = vector.shape_cast %110 : vector<32xf32> to vector<1x32xf32>
    %112 = vector.broadcast %111 : vector<1x32xf32> to vector<32x32xf32>
    %113 = arith.addf %108, %112 : vector<32x32xf32>
    %114 = arith.addf %0, %113 : vector<32x32xf32>
    %c0_40 = arith.constant 0 : index
    %c0_41 = arith.constant 0 : index
    %115 = vector.load %arg9[%c0_40, %c0_41] : memref<1x32xf32, #tpu.memory_space<vmem>>, vector<1x32xf32>
    %116 = vector.shape_cast %115 : vector<1x32xf32> to vector<32xf32>
    %c0_42 = arith.constant 0 : index
    %c0_43 = arith.constant 0 : index
    %117 = vector.load %arg10[%c0_42, %c0_43] : memref<1x32xf32, #tpu.memory_space<vmem>>, vector<1x32xf32>
    %118 = vector.shape_cast %117 : vector<1x32xf32> to vector<32xf32>
    %cst_44 = arith.constant dense<0.000000e+00> : vector<32xf32>
    %119 = vector.multi_reduction <add>, %114, %cst_44 [1] : vector<32x32xf32> to vector<32xf32>
    %120 = vector.shape_cast %119 : vector<32xf32> to vector<32x1xf32>
    %cst_45 = arith.constant 3.200000e+01 : f32
    %121 = vector.broadcast %cst_45 : f32 to vector<32x1xf32>
    %122 = arith.divf %120, %121 : vector<32x1xf32>
    %123 = vector.broadcast %122 : vector<32x1xf32> to vector<32x32xf32>
    %124 = arith.subf %114, %123 : vector<32x32xf32>
    %125 = arith.mulf %124, %124 : vector<32x32xf32>
    %cst_46 = arith.constant dense<0.000000e+00> : vector<32xf32>
    %126 = vector.multi_reduction <add>, %125, %cst_46 [1] : vector<32x32xf32> to vector<32xf32>
    %127 = vector.shape_cast %126 : vector<32xf32> to vector<32x1xf32>
    %cst_47 = arith.constant 3.200000e+01 : f32
    %128 = vector.broadcast %cst_47 : f32 to vector<32x1xf32>
    %129 = arith.divf %127, %128 : vector<32x1xf32>
    %130 = vector.broadcast %122 : vector<32x1xf32> to vector<32x32xf32>
    %131 = arith.subf %114, %130 : vector<32x32xf32>
    %cst_48 = arith.constant 9.99999974E-6 : f32
    %132 = vector.broadcast %cst_48 : f32 to vector<32x1xf32>
    %133 = arith.addf %129, %132 : vector<32x1xf32>
    %134 = math.rsqrt %133 : vector<32x1xf32>
    %135 = vector.broadcast %134 : vector<32x1xf32> to vector<32x32xf32>
    %136 = arith.mulf %131, %135 : vector<32x32xf32>
    %137 = vector.shape_cast %116 : vector<32xf32> to vector<1x32xf32>
    %138 = vector.broadcast %137 : vector<1x32xf32> to vector<32x32xf32>
    %139 = arith.mulf %136, %138 : vector<32x32xf32>
    %140 = vector.shape_cast %118 : vector<32xf32> to vector<1x32xf32>
    %141 = vector.broadcast %140 : vector<1x32xf32> to vector<32x32xf32>
    %142 = arith.addf %139, %141 : vector<32x32xf32>
    %143 = arith.truncf %142 : vector<32x32xf32> to vector<32x32xbf16>
    %c0_49 = arith.constant 0 : index
    %c0_50 = arith.constant 0 : index
    %144 = vector.load %arg12[%c0_49, %c0_50] : memref<1x64xf32, #tpu.memory_space<vmem>>, vector<1x64xf32>
    %145 = vector.shape_cast %144 : vector<1x64xf32> to vector<64xf32>
    %cst_51 = arith.constant 0.000000e+00 : f32
    %146 = vector.broadcast %cst_51 : f32 to vector<32x32xf32>
    %c0_52 = arith.constant 0 : index
    %c0_53 = arith.constant 0 : index
    %147 = vector.load %arg11[%c0_52, %c0_53] : memref<32x64xbf16, #tpu.memory_space<vmem>>, vector<32x64xbf16>
    %cst_54 = arith.constant dense<0.000000e+00> : vector<32x64xf32>
    %148 = tpu.matmul %143, %147, %cst_54 {dimension_numbers = #tpu.dot_dimension_numbers<[1], [0], [0], [1], [0, 0, 1, 1], [], []>} : vector<32x32xbf16>, vector<32x64xbf16>, vector<32x64xf32> -> vector<32x64xf32>
    %149 = vector.shape_cast %145 : vector<64xf32> to vector<1x64xf32>
    %150 = vector.broadcast %149 : vector<1x64xf32> to vector<32x64xf32>
    %151 = arith.addf %148, %150 : vector<32x64xf32>
    %cst_55 = arith.constant 0.000000e+00 : f32
    %152 = vector.broadcast %cst_55 : f32 to vector<32x64xf32>
    %153 = arith.maximumf %151, %152 : vector<32x64xf32>
    %154 = arith.truncf %153 : vector<32x64xf32> to vector<32x64xbf16>
    %c0_56 = arith.constant 0 : index
    %c0_57 = arith.constant 0 : index
    %155 = vector.load %arg13[%c0_56, %c0_57] : memref<64x32xbf16, #tpu.memory_space<vmem>>, vector<64x32xbf16>
    %cst_58 = arith.constant dense<0.000000e+00> : vector<32x32xf32>
    %156 = tpu.matmul %154, %155, %cst_58 {dimension_numbers = #tpu.dot_dimension_numbers<[1], [0], [0], [1], [0, 0, 1, 1], [], []>} : vector<32x64xbf16>, vector<64x32xbf16>, vector<32x32xf32> -> vector<32x32xf32>
    %157 = arith.addf %146, %156 : vector<32x32xf32>
    %c0_59 = arith.constant 0 : index
    %c0_60 = arith.constant 0 : index
    %158 = vector.load %arg14[%c0_59, %c0_60] : memref<1x32xf32, #tpu.memory_space<vmem>>, vector<1x32xf32>
    %159 = vector.shape_cast %158 : vector<1x32xf32> to vector<32xf32>
    %160 = vector.shape_cast %159 : vector<32xf32> to vector<1x32xf32>
    %161 = vector.broadcast %160 : vector<1x32xf32> to vector<32x32xf32>
    %162 = arith.addf %157, %161 : vector<32x32xf32>
    %163 = arith.addf %142, %162 : vector<32x32xf32>
    %c0_61 = arith.constant 0 : index
    %c0_62 = arith.constant 0 : index
    %164 = vector.load %arg15[%c0_61, %c0_62] : memref<1x32xf32, #tpu.memory_space<vmem>>, vector<1x32xf32>
    %165 = vector.shape_cast %164 : vector<1x32xf32> to vector<32xf32>
    %c0_63 = arith.constant 0 : index
    %c0_64 = arith.constant 0 : index
    %166 = vector.load %arg16[%c0_63, %c0_64] : memref<1x32xf32, #tpu.memory_space<vmem>>, vector<1x32xf32>
    %167 = vector.shape_cast %166 : vector<1x32xf32> to vector<32xf32>
    %cst_65 = arith.constant dense<0.000000e+00> : vector<32xf32>
    %168 = vector.multi_reduction <add>, %163, %cst_65 [1] : vector<32x32xf32> to vector<32xf32>
    %169 = vector.shape_cast %168 : vector<32xf32> to vector<32x1xf32>
    %cst_66 = arith.constant 3.200000e+01 : f32
    %170 = vector.broadcast %cst_66 : f32 to vector<32x1xf32>
    %171 = arith.divf %169, %170 : vector<32x1xf32>
    %172 = vector.broadcast %171 : vector<32x1xf32> to vector<32x32xf32>
    %173 = arith.subf %163, %172 : vector<32x32xf32>
    %174 = arith.mulf %173, %173 : vector<32x32xf32>
    %cst_67 = arith.constant dense<0.000000e+00> : vector<32xf32>
    %175 = vector.multi_reduction <add>, %174, %cst_67 [1] : vector<32x32xf32> to vector<32xf32>
    %176 = vector.shape_cast %175 : vector<32xf32> to vector<32x1xf32>
    %cst_68 = arith.constant 3.200000e+01 : f32
    %177 = vector.broadcast %cst_68 : f32 to vector<32x1xf32>
    %178 = arith.divf %176, %177 : vector<32x1xf32>
    %179 = vector.broadcast %171 : vector<32x1xf32> to vector<32x32xf32>
    %180 = arith.subf %163, %179 : vector<32x32xf32>
    %cst_69 = arith.constant 9.99999974E-6 : f32
    %181 = vector.broadcast %cst_69 : f32 to vector<32x1xf32>
    %182 = arith.addf %178, %181 : vector<32x1xf32>
    %183 = math.rsqrt %182 : vector<32x1xf32>
    %184 = vector.broadcast %183 : vector<32x1xf32> to vector<32x32xf32>
    %185 = arith.mulf %180, %184 : vector<32x32xf32>
    %186 = vector.shape_cast %165 : vector<32xf32> to vector<1x32xf32>
    %187 = vector.broadcast %186 : vector<1x32xf32> to vector<32x32xf32>
    %188 = arith.mulf %185, %187 : vector<32x32xf32>
    %189 = vector.shape_cast %167 : vector<32xf32> to vector<1x32xf32>
    %190 = vector.broadcast %189 : vector<1x32xf32> to vector<32x32xf32>
    %191 = arith.addf %188, %190 : vector<32x32xf32>
    %c0_70 = arith.constant 0 : index
    %c0_71 = arith.constant 0 : index
    %192 = vector.load %arg17[%c0_70, %c0_71] : memref<32x32xf32, #tpu.memory_space<vmem>>, vector<32x32xf32>
    tpu.vector_store %arg17[%c0_70, %c0_71], %191 {strides = array<i32>} : memref<32x32xf32, #tpu.memory_space<vmem>>, vector<32x32xf32>,
    return
  }
  func.func @transform_0(%arg0: i32) -> (i32, i32) {
    %c0_i32 = arith.constant 0 : i32
    %c0_i32_0 = arith.constant 0 : i32
    return %arg0, %c0_i32 : i32, i32
  }
  func.func @transform_1(%arg0: i32) -> (i32, i32) {
    %c0_i32 = arith.constant 0 : i32
    %c0_i32_0 = arith.constant 0 : i32
    return %arg0, %c0_i32 : i32, i32
  }
  func.func @transform_2(%arg0: i32) -> (i32, i32) {
    %c0_i32 = arith.constant 0 : i32
    %c0_i32_0 = arith.constant 0 : i32
    %c0_i32_1 = arith.constant 0 : i32
    return %c0_i32, %c0_i32_0 : i32, i32
  }
  func.func @transform_3(%arg0: i32) -> (i32, i32) {
    %c0_i32 = arith.constant 0 : i32
    %c0_i32_0 = arith.constant 0 : i32
    %c0_i32_1 = arith.constant 0 : i32
    return %c0_i32, %c0_i32_0 : i32, i32
  }
  func.func @transform_4(%arg0: i32) -> (i32, i32) {
    %c0_i32 = arith.constant 0 : i32
    %c0_i32_0 = arith.constant 0 : i32
    %c0_i32_1 = arith.constant 0 : i32
    return %c0_i32, %c0_i32_0 : i32, i32
  }
  func.func @transform_5(%arg0: i32) -> (i32, i32) {
    %c0_i32 = arith.constant 0 : i32
    %c0_i32_0 = arith.constant 0 : i32
    %c0_i32_1 = arith.constant 0 : i32
    return %c0_i32, %c0_i32_0 : i32, i32
  }
  func.func @transform_6(%arg0: i32) -> (i32, i32) {
    %c0_i32 = arith.constant 0 : i32
    %c0_i32_0 = arith.constant 0 : i32
    %c0_i32_1 = arith.constant 0 : i32
    return %c0_i32, %c0_i32_0 : i32, i32
  }
  func.func @transform_7(%arg0: i32) -> (i32, i32) {
    %c0_i32 = arith.constant 0 : i32
    %c0_i32_0 = arith.constant 0 : i32
    %c0_i32_1 = arith.constant 0 : i32
    return %c0_i32, %c0_i32_0 : i32, i32
  }
  func.func @transform_8(%arg0: i32) -> (i32, i32) {
    %c0_i32 = arith.constant 0 : i32
    %c0_i32_0 = arith.constant 0 : i32
    %c0_i32_1 = arith.constant 0 : i32
    return %c0_i32, %c0_i32_0 : i32, i32
  }
  func.func @transform_9(%arg0: i32) -> (i32, i32) {
    %c0_i32 = arith.constant 0 : i32
    %c0_i32_0 = arith.constant 0 : i32
    %c0_i32_1 = arith.constant 0 : i32
    return %c0_i32, %c0_i32_0 : i32, i32
  }
  func.func @transform_10(%arg0: i32) -> (i32, i32) {
    %c0_i32 = arith.constant 0 : i32
    %c0_i32_0 = arith.constant 0 : i32
    %c0_i32_1 = arith.constant 0 : i32
    return %c0_i32, %c0_i32_0 : i32, i32
  }
  func.func @transform_11(%arg0: i32) -> (i32, i32) {
    %c0_i32 = arith.constant 0 : i32
    %c0_i32_0 = arith.constant 0 : i32
    %c0_i32_1 = arith.constant 0 : i32
    return %c0_i32, %c0_i32_0 : i32, i32
  }
  func.func @transform_12(%arg0: i32) -> (i32, i32) {
    %c0_i32 = arith.constant 0 : i32
    %c0_i32_0 = arith.constant 0 : i32
    %c0_i32_1 = arith.constant 0 : i32
    return %c0_i32, %c0_i32_0 : i32, i32
  }
  func.func @transform_13(%arg0: i32) -> (i32, i32) {
    %c0_i32 = arith.constant 0 : i32
    %c0_i32_0 = arith.constant 0 : i32
    %c0_i32_1 = arith.constant 0 : i32
    return %c0_i32, %c0_i32_0 : i32, i32
  }
  func.func @transform_14(%arg0: i32) -> (i32, i32) {
    %c0_i32 = arith.constant 0 : i32
    %c0_i32_0 = arith.constant 0 : i32
    %c0_i32_1 = arith.constant 0 : i32
    return %c0_i32, %c0_i32_0 : i32, i32
  }
  func.func @transform_15(%arg0: i32) -> (i32, i32) {
    %c0_i32 = arith.constant 0 : i32
    %c0_i32_0 = arith.constant 0 : i32
    %c0_i32_1 = arith.constant 0 : i32
    return %c0_i32, %c0_i32_0 : i32, i32
  }
  func.func @transform_16(%arg0: i32) -> (i32, i32) {
    %c0_i32 = arith.constant 0 : i32
    %c0_i32_0 = arith.constant 0 : i32
    return %arg0, %c0_i32 : i32, i32
  }
}

module attributes {stable_mosaic.version = 11 : i64} {
  func.func @encoder_layer_kernel(%arg0: i32, %arg1: memref<32x32xf32, #tpu.memory_space<vmem>>, %arg2: memref<32x32xf32, #tpu.memory_space<vmem>>, %arg3: memref<32x64xbf16, #tpu.memory_space<vmem>>, %arg4: memref<1x64xf32, #tpu.memory_space<vmem>>, %arg5: memref<32x32xbf16, #tpu.memory_space<vmem>>, %arg6: memref<1x32xf32, #tpu.memory_space<vmem>>, %arg7: memref<32x32xbf16, #tpu.memory_space<vmem>>, %arg8: memref<1x32xf32, #tpu.memory_space<vmem>>, %arg9: memref<1x32xf32, #tpu.memory_space<vmem>>, %arg10: memref<1x32xf32, #tpu.memory_space<vmem>>, %arg11: memref<32x64xbf16, #tpu.memory_space<vmem>>, %arg12: memref<1x64xf32, #tpu.memory_space<vmem>>, %arg13: memref<64x32xbf16, #tpu.memory_space<vmem>>, %arg14: memref<1x32xf32, #tpu.memory_space<vmem>>, %arg15: memref<1x32xf32, #tpu.memory_space<vmem>>, %arg16: memref<1x32xf32, #tpu.memory_space<vmem>>, %arg17: memref<32x32xf32, #tpu.memory_space<vmem>>, %arg18: memref<32x32xf32, #tpu.memory_space<vmem>>) attributes {dimension_semantics = [#tpu.dimension_semantics<parallel>], iteration_bounds = array<i64: 1>, scalar_prefetch = 0 : i64, scratch_operands = 1 : i64, tpu.core_type = #tpu.core_type<tc>, window_params = [{transform_indices = @transform_0, window_bounds = array<i64: 32, 32>}, {transform_indices = @transform_1, window_bounds = array<i64: 32, 32>}, {pipeline_mode = #tpu.pipeline_mode<synchronous>, transform_indices = @transform_2, window_bounds = array<i64: 32, 64>}, {pipeline_mode = #tpu.pipeline_mode<synchronous>, transform_indices = @transform_3, window_bounds = array<i64: 1, 64>}, {pipeline_mode = #tpu.pipeline_mode<synchronous>, transform_indices = @transform_4, window_bounds = array<i64: 32, 32>}, {pipeline_mode = #tpu.pipeline_mode<synchronous>, transform_indices = @transform_5, window_bounds = array<i64: 1, 32>}, {pipeline_mode = #tpu.pipeline_mode<synchronous>, transform_indices = @transform_6, window_bounds = array<i64: 32, 32>}, {pipeline_mode = #tpu.pipeline_mode<synchronous>, transform_indices = @transform_7, window_bounds = array<i64: 1, 32>}, {pipeline_mode = #tpu.pipeline_mode<synchronous>, transform_indices = @transform_8, window_bounds = array<i64: 1, 32>}, {pipeline_mode = #tpu.pipeline_mode<synchronous>, transform_indices = @transform_9, window_bounds = array<i64: 1, 32>}, {pipeline_mode = #tpu.pipeline_mode<synchronous>, transform_indices = @transform_10, window_bounds = array<i64: 32, 64>}, {pipeline_mode = #tpu.pipeline_mode<synchronous>, transform_indices = @transform_11, window_bounds = array<i64: 1, 64>}, {pipeline_mode = #tpu.pipeline_mode<synchronous>, transform_indices = @transform_12, window_bounds = array<i64: 64, 32>}, {pipeline_mode = #tpu.pipeline_mode<synchronous>, transform_indices = @transform_13, window_bounds = array<i64: 1, 32>}, {pipeline_mode = #tpu.pipeline_mode<synchronous>, transform_indices = @transform_14, window_bounds = array<i64: 1, 32>}, {pipeline_mode = #tpu.pipeline_mode<synchronous>, transform_indices = @transform_15, window_bounds = array<i64: 1, 32>}, {transform_indices = @transform_16, window_bounds = array<i64: 32, 32>}]} {
    %c0 = arith.constant 0 : index
    %c0_0 = arith.constant 0 : index
    %0 = vector.load %arg1[%c0, %c0_0] : memref<32x32xf32, #tpu.memory_space<vmem>>, vector<32x32xf32>
    %c0_1 = arith.constant 0 : index
    %c0_2 = arith.constant 0 : index
    %1 = vector.load %arg2[%c0_1, %c0_2] : memref<32x32xf32, #tpu.memory_space<vmem>>, vector<32x32xf32>
    %2 = arith.addf %0, %1 : vector<32x32xf32>
    %3 = arith.truncf %2 : vector<32x32xf32> to vector<32x32xbf16>
    %4 = arith.truncf %0 : vector<32x32xf32> to vector<32x32xbf16>
    %c0_3 = arith.constant 0 : index
    %c0_4 = arith.constant 0 : index
    %5 = vector.load %arg3[%c0_3, %c0_4] : memref<32x64xbf16, #tpu.memory_space<vmem>>, vector<32x64xbf16>
    %cst = arith.constant dense<0.000000e+00> : vector<32x64xf32>
    %6 = tpu.matmul %3, %5, %cst {dimension_numbers = #tpu.dot_dimension_numbers<[1], [0], [0], [1], [0, 0, 1, 1], [], []>} : vector<32x32xbf16>, vector<32x64xbf16>, vector<32x64xf32> -> vector<32x64xf32>
    %c0_5 = arith.constant 0 : index
    %c0_6 = arith.constant 0 : index
    %7 = vector.load %arg4[%c0_5, %c0_6] : memref<1x64xf32, #tpu.memory_space<vmem>>, vector<1x64xf32>
    %8 = vector.shape_cast %7 : vector<1x64xf32> to vector<64xf32>
    %9 = vector.shape_cast %8 : vector<64xf32> to vector<1x64xf32>
    %10 = vector.broadcast %9 : vector<1x64xf32> to vector<32x64xf32>
    %11 = arith.addf %6, %10 : vector<32x64xf32>
    %c0_7 = arith.constant 0 : index
    %c0_8 = arith.constant 0 : index
    %12 = vector.load %arg5[%c0_7, %c0_8] : memref<32x32xbf16, #tpu.memory_space<vmem>>, vector<32x32xbf16>
    %cst_9 = arith.constant dense<0.000000e+00> : vector<32x32xf32>
    %13 = tpu.matmul %4, %12, %cst_9 {dimension_numbers = #tpu.dot_dimension_numbers<[1], [0], [0], [1], [0, 0, 1, 1], [], []>} : vector<32x32xbf16>, vector<32x32xbf16>, vector<32x32xf32> -> vector<32x32xf32>
    %c0_10 = arith.constant 0 : index
    %c0_11 = arith.constant 0 : index
    %14 = vector.load %arg6[%c0_10, %c0_11] : memref<1x32xf32, #tpu.memory_space<vmem>>, vector<1x32xf32>
    %15 = vector.shape_cast %14 : vector<1x32xf32> to vector<32xf32>
    %16 = vector.shape_cast %15 : vector<32xf32> to vector<1x32xf32>
    %17 = vector.broadcast %16 : vector<1x32xf32> to vector<32x32xf32>
    %18 = arith.addf %13, %17 : vector<32x32xf32>
    %19 = arith.truncf %11 : vector<32x64xf32> to vector<32x64xbf16>
    %20 = arith.truncf %18 : vector<32x32xf32> to vector<32x32xbf16>
    %21 = vector.extract_strided_slice %19 {offsets = [0, 0], sizes = [32, 8], strides = [1, 1]} : vector<32x64xbf16> to vector<32x8xbf16>
    %22 = vector.shape_cast %21 : vector<32x8xbf16> to vector<2x16x8xbf16>
    %23 = vector.extract_strided_slice %19 {offsets = [0, 32], sizes = [32, 8], strides = [1, 1]} : vector<32x64xbf16> to vector<32x8xbf16>
    %24 = vector.shape_cast %23 : vector<32x8xbf16> to vector<2x16x8xbf16>
    %25 = vector.extract_strided_slice %20 {offsets = [0, 0], sizes = [32, 8], strides = [1, 1]} : vector<32x32xbf16> to vector<32x8xbf16>
    %26 = vector.shape_cast %25 : vector<32x8xbf16> to vector<2x16x8xbf16>
    "tpu.trace_start"() <{level = 10 : i32, message = "bqd,bkd->bqk"}> : () -> ()
    %cst_12 = arith.constant dense<0.000000e+00> : vector<2x16x16xf32>
    %27 = tpu.matmul %22, %24, %cst_12 {dimension_numbers = #tpu.dot_dimension_numbers<[2], [2], [1], [1], [0, 0, 0, 1, 1, 1], [0], [0]>} : vector<2x16x8xbf16>, vector<2x16x8xbf16>, vector<2x16x16xf32> -> vector<2x16x16xf32>
    "tpu.trace_stop"() : () -> ()
    %cst_13 = arith.constant dense<0xFF800000> : vector<2x16xf32>
    %28 = vector.multi_reduction <maximumf>, %27, %cst_13 [2] : vector<2x16x16xf32> to vector<2x16xf32>
    %29 = vector.shape_cast %28 : vector<2x16xf32> to vector<2x16x1xf32>
    %30 = vector.broadcast %29 : vector<2x16x1xf32> to vector<2x16x16xf32>
    %31 = arith.subf %27, %30 : vector<2x16x16xf32>
    %32 = math.exp %31 : vector<2x16x16xf32>
    %cst_14 = arith.constant dense<0.000000e+00> : vector<2x16xf32>
    %33 = vector.multi_reduction <add>, %32, %cst_14 [2] : vector<2x16x16xf32> to vector<2x16xf32>
    %34 = vector.shape_cast %33 : vector<2x16xf32> to vector<2x16x1xf32>
    %35 = tpu.reciprocal %34 {approx = true} : vector<2x16x1xf32> -> vector<2x16x1xf32>
    %36 = vector.broadcast %35 : vector<2x16x1xf32> to vector<2x16x16xf32>
    %37 = arith.mulf %32, %36 : vector<2x16x16xf32>
    %38 = arith.truncf %37 : vector<2x16x16xf32> to vector<2x16x16xbf16>
    "tpu.trace_start"() <{level = 10 : i32, message = "bqk,bkd->bqd"}> : () -> ()
    %cst_15 = arith.constant dense<0.000000e+00> : vector<2x16x8xf32>
    %39 = tpu.matmul %38, %26, %cst_15 {dimension_numbers = #tpu.dot_dimension_numbers<[2], [1], [1], [2], [0, 0, 0, 1, 1, 2], [0], [0]>} : vector<2x16x16xbf16>, vector<2x16x8xbf16>, vector<2x16x8xf32> -> vector<2x16x8xf32>
    "tpu.trace_stop"() : () -> ()
    %40 = vector.shape_cast %39 : vector<2x16x8xf32> to vector<32x8xf32>
    %c0_16 = arith.constant 0 : index
    %c0_17 = arith.constant 0 : index
    %41 = vector.load %arg18[%c0_16, %c0_17] : memref<32x32xf32, #tpu.memory_space<vmem>>, vector<32x8xf32>
    tpu.vector_store %arg18[%c0_16, %c0_17], %40 {strides = array<i32>} : memref<32x32xf32, #tpu.memory_space<vmem>>, vector<32x8xf32>,
    %42 = vector.extract_strided_slice %19 {offsets = [0, 8], sizes = [32, 8], strides = [1, 1]} : vector<32x64xbf16> to vector<32x8xbf16>
    %43 = vector.shape_cast %42 : vector<32x8xbf16> to vector<2x16x8xbf16>
    %44 = vector.extract_strided_slice %19 {offsets = [0, 40], sizes = [32, 8], strides = [1, 1]} : vector<32x64xbf16> to vector<32x8xbf16>
    %45 = vector.shape_cast %44 : vector<32x8xbf16> to vector<2x16x8xbf16>
    %46 = vector.extract_strided_slice %20 {offsets = [0, 8], sizes = [32, 8], strides = [1, 1]} : vector<32x32xbf16> to vector<32x8xbf16>
    %47 = vector.shape_cast %46 : vector<32x8xbf16> to vector<2x16x8xbf16>
    "tpu.trace_start"() <{level = 10 : i32, message = "bqd,bkd->bqk"}> : () -> ()
    %cst_18 = arith.constant dense<0.000000e+00> : vector<2x16x16xf32>
    %48 = tpu.matmul %43, %45, %cst_18 {dimension_numbers = #tpu.dot_dimension_numbers<[2], [2], [1], [1], [0, 0, 0, 1, 1, 1], [0], [0]>} : vector<2x16x8xbf16>, vector<2x16x8xbf16>, vector<2x16x16xf32> -> vector<2x16x16xf32>
    "tpu.trace_stop"() : () -> ()
    %cst_19 = arith.constant dense<0xFF800000> : vector<2x16xf32>
    %49 = vector.multi_reduction <maximumf>, %48, %cst_19 [2] : vector<2x16x16xf32> to vector<2x16xf32>
    %50 = vector.shape_cast %49 : vector<2x16xf32> to vector<2x16x1xf32>
    %51 = vector.broadcast %50 : vector<2x16x1xf32> to vector<2x16x16xf32>
    %52 = arith.subf %48, %51 : vector<2x16x16xf32>
    %53 = math.exp %52 : vector<2x16x16xf32>
    %cst_20 = arith.constant dense<0.000000e+00> : vector<2x16xf32>
    %54 = vector.multi_reduction <add>, %53, %cst_20 [2] : vector<2x16x16xf32> to vector<2x16xf32>
    %55 = vector.shape_cast %54 : vector<2x16xf32> to vector<2x16x1xf32>
    %56 = tpu.reciprocal %55 {approx = true} : vector<2x16x1xf32> -> vector<2x16x1xf32>
    %57 = vector.broadcast %56 : vector<2x16x1xf32> to vector<2x16x16xf32>
    %58 = arith.mulf %53, %57 : vector<2x16x16xf32>
    %59 = arith.truncf %58 : vector<2x16x16xf32> to vector<2x16x16xbf16>
    "tpu.trace_start"() <{level = 10 : i32, message = "bqk,bkd->bqd"}> : () -> ()
    %cst_21 = arith.constant dense<0.000000e+00> : vector<2x16x8xf32>
    %60 = tpu.matmul %59, %47, %cst_21 {dimension_numbers = #tpu.dot_dimension_numbers<[2], [1], [1], [2], [0, 0, 0, 1, 1, 2], [0], [0]>} : vector<2x16x16xbf16>, vector<2x16x8xbf16>, vector<2x16x8xf32> -> vector<2x16x8xf32>
    "tpu.trace_stop"() : () -> ()
    %61 = vector.shape_cast %60 : vector<2x16x8xf32> to vector<32x8xf32>
    %c0_22 = arith.constant 0 : index
    %c8 = arith.constant 8 : index
    %62 = vector.load %arg18[%c0_22, %c8] : memref<32x32xf32, #tpu.memory_space<vmem>>, vector<32x8xf32>
    tpu.vector_store %arg18[%c0_22, %c8], %61 {strides = array<i32>} : memref<32x32xf32, #tpu.memory_space<vmem>>, vector<32x8xf32>,
    %63 = vector.extract_strided_slice %19 {offsets = [0, 16], sizes = [32, 8], strides = [1, 1]} : vector<32x64xbf16> to vector<32x8xbf16>
    %64 = vector.shape_cast %63 : vector<32x8xbf16> to vector<2x16x8xbf16>
    %65 = vector.extract_strided_slice %19 {offsets = [0, 48], sizes = [32, 8], strides = [1, 1]} : vector<32x64xbf16> to vector<32x8xbf16>
    %66 = vector.shape_cast %65 : vector<32x8xbf16> to vector<2x16x8xbf16>
    %67 = vector.extract_strided_slice %20 {offsets = [0, 16], sizes = [32, 8], strides = [1, 1]} : vector<32x32xbf16> to vector<32x8xbf16>
    %68 = vector.shape_cast %67 : vector<32x8xbf16> to vector<2x16x8xbf16>
    "tpu.trace_start"() <{level = 10 : i32, message = "bqd,bkd->bqk"}> : () -> ()
    %cst_23 = arith.constant dense<0.000000e+00> : vector<2x16x16xf32>
    %69 = tpu.matmul %64, %66, %cst_23 {dimension_numbers = #tpu.dot_dimension_numbers<[2], [2], [1], [1], [0, 0, 0, 1, 1, 1], [0], [0]>} : vector<2x16x8xbf16>, vector<2x16x8xbf16>, vector<2x16x16xf32> -> vector<2x16x16xf32>
    "tpu.trace_stop"() : () -> ()
    %cst_24 = arith.constant dense<0xFF800000> : vector<2x16xf32>
    %70 = vector.multi_reduction <maximumf>, %69, %cst_24 [2] : vector<2x16x16xf32> to vector<2x16xf32>
    %71 = vector.shape_cast %70 : vector<2x16xf32> to vector<2x16x1xf32>
    %72 = vector.broadcast %71 : vector<2x16x1xf32> to vector<2x16x16xf32>
    %73 = arith.subf %69, %72 : vector<2x16x16xf32>
    %74 = math.exp %73 : vector<2x16x16xf32>
    %cst_25 = arith.constant dense<0.000000e+00> : vector<2x16xf32>
    %75 = vector.multi_reduction <add>, %74, %cst_25 [2] : vector<2x16x16xf32> to vector<2x16xf32>
    %76 = vector.shape_cast %75 : vector<2x16xf32> to vector<2x16x1xf32>
    %77 = tpu.reciprocal %76 {approx = true} : vector<2x16x1xf32> -> vector<2x16x1xf32>
    %78 = vector.broadcast %77 : vector<2x16x1xf32> to vector<2x16x16xf32>
    %79 = arith.mulf %74, %78 : vector<2x16x16xf32>
    %80 = arith.truncf %79 : vector<2x16x16xf32> to vector<2x16x16xbf16>
    "tpu.trace_start"() <{level = 10 : i32, message = "bqk,bkd->bqd"}> : () -> ()
    %cst_26 = arith.constant dense<0.000000e+00> : vector<2x16x8xf32>
    %81 = tpu.matmul %80, %68, %cst_26 {dimension_numbers = #tpu.dot_dimension_numbers<[2], [1], [1], [2], [0, 0, 0, 1, 1, 2], [0], [0]>} : vector<2x16x16xbf16>, vector<2x16x8xbf16>, vector<2x16x8xf32> -> vector<2x16x8xf32>
    "tpu.trace_stop"() : () -> ()
    %82 = vector.shape_cast %81 : vector<2x16x8xf32> to vector<32x8xf32>
    %c0_27 = arith.constant 0 : index
    %c16 = arith.constant 16 : index
    %83 = vector.load %arg18[%c0_27, %c16] : memref<32x32xf32, #tpu.memory_space<vmem>>, vector<32x8xf32>
    tpu.vector_store %arg18[%c0_27, %c16], %82 {strides = array<i32>} : memref<32x32xf32, #tpu.memory_space<vmem>>, vector<32x8xf32>,
    %84 = vector.extract_strided_slice %19 {offsets = [0, 24], sizes = [32, 8], strides = [1, 1]} : vector<32x64xbf16> to vector<32x8xbf16>
    %85 = vector.shape_cast %84 : vector<32x8xbf16> to vector<2x16x8xbf16>
    %86 = vector.extract_strided_slice %19 {offsets = [0, 56], sizes = [32, 8], strides = [1, 1]} : vector<32x64xbf16> to vector<32x8xbf16>
    %87 = vector.shape_cast %86 : vector<32x8xbf16> to vector<2x16x8xbf16>
    %88 = vector.extract_strided_slice %20 {offsets = [0, 24], sizes = [32, 8], strides = [1, 1]} : vector<32x32xbf16> to vector<32x8xbf16>
    %89 = vector.shape_cast %88 : vector<32x8xbf16> to vector<2x16x8xbf16>
    "tpu.trace_start"() <{level = 10 : i32, message = "bqd,bkd->bqk"}> : () -> ()
    %cst_28 = arith.constant dense<0.000000e+00> : vector<2x16x16xf32>
    %90 = tpu.matmul %85, %87, %cst_28 {dimension_numbers = #tpu.dot_dimension_numbers<[2], [2], [1], [1], [0, 0, 0, 1, 1, 1], [0], [0]>} : vector<2x16x8xbf16>, vector<2x16x8xbf16>, vector<2x16x16xf32> -> vector<2x16x16xf32>
    "tpu.trace_stop"() : () -> ()
    %cst_29 = arith.constant dense<0xFF800000> : vector<2x16xf32>
    %91 = vector.multi_reduction <maximumf>, %90, %cst_29 [2] : vector<2x16x16xf32> to vector<2x16xf32>
    %92 = vector.shape_cast %91 : vector<2x16xf32> to vector<2x16x1xf32>
    %93 = vector.broadcast %92 : vector<2x16x1xf32> to vector<2x16x16xf32>
    %94 = arith.subf %90, %93 : vector<2x16x16xf32>
    %95 = math.exp %94 : vector<2x16x16xf32>
    %cst_30 = arith.constant dense<0.000000e+00> : vector<2x16xf32>
    %96 = vector.multi_reduction <add>, %95, %cst_30 [2] : vector<2x16x16xf32> to vector<2x16xf32>
    %97 = vector.shape_cast %96 : vector<2x16xf32> to vector<2x16x1xf32>
    %98 = tpu.reciprocal %97 {approx = true} : vector<2x16x1xf32> -> vector<2x16x1xf32>
    %99 = vector.broadcast %98 : vector<2x16x1xf32> to vector<2x16x16xf32>
    %100 = arith.mulf %95, %99 : vector<2x16x16xf32>
    %101 = arith.truncf %100 : vector<2x16x16xf32> to vector<2x16x16xbf16>
    "tpu.trace_start"() <{level = 10 : i32, message = "bqk,bkd->bqd"}> : () -> ()
    %cst_31 = arith.constant dense<0.000000e+00> : vector<2x16x8xf32>
    %102 = tpu.matmul %101, %89, %cst_31 {dimension_numbers = #tpu.dot_dimension_numbers<[2], [1], [1], [2], [0, 0, 0, 1, 1, 2], [0], [0]>} : vector<2x16x16xbf16>, vector<2x16x8xbf16>, vector<2x16x8xf32> -> vector<2x16x8xf32>
    "tpu.trace_stop"() : () -> ()
    %103 = vector.shape_cast %102 : vector<2x16x8xf32> to vector<32x8xf32>
    %c0_32 = arith.constant 0 : index
    %c24 = arith.constant 24 : index
    %104 = vector.load %arg18[%c0_32, %c24] : memref<32x32xf32, #tpu.memory_space<vmem>>, vector<32x8xf32>
    tpu.vector_store %arg18[%c0_32, %c24], %103 {strides = array<i32>} : memref<32x32xf32, #tpu.memory_space<vmem>>, vector<32x8xf32>,
    %c0_33 = arith.constant 0 : index
    %c0_34 = arith.constant 0 : index
    %105 = vector.load %arg18[%c0_33, %c0_34] : memref<32x32xf32, #tpu.memory_space<vmem>>, vector<32x32xf32>
    %106 = arith.truncf %105 : vector<32x32xf32> to vector<32x32xbf16>
    %c0_35 = arith.constant 0 : index
    %c0_36 = arith.constant 0 : index
    %107 = vector.load %arg7[%c0_35, %c0_36] : memref<32x32xbf16, #tpu.memory_space<vmem>>, vector<32x32xbf16>
    %cst_37 = arith.constant dense<0.000000e+00> : vector<32x32xf32>
    %108 = tpu.matmul %106, %107, %cst_37 {dimension_numbers = #tpu.dot_dimension_numbers<[1], [0], [0], [1], [0, 0, 1, 1], [], []>} : vector<32x32xbf16>, vector<32x32xbf16>, vector<32x32xf32> -> vector<32x32xf32>
    %c0_38 = arith.constant 0 : index
    %c0_39 = arith.constant 0 : index
    %109 = vector.load %arg8[%c0_38, %c0_39] : memref<1x32xf32, #tpu.memory_space<vmem>>, vector<1x32xf32>
    %110 = vector.shape_cast %109 : vector<1x32xf32> to vector<32xf32>
    %111 = vector.shape_cast %110 : vector<32xf32> to vector<1x32xf32>
    %112 = vector.broadcast %111 : vector<1x32xf32> to vector<32x32xf32>
    %113 = arith.addf %108, %112 : vector<32x32xf32>
    %114 = arith.addf %0, %113 : vector<32x32xf32>
    %c0_40 = arith.constant 0 : index
    %c0_41 = arith.constant 0 : index
    %115 = vector.load %arg9[%c0_40, %c0_41] : memref<1x32xf32, #tpu.memory_space<vmem>>, vector<1x32xf32>
    %116 = vector.shape_cast %115 : vector<1x32xf32> to vector<32xf32>
    %c0_42 = arith.constant 0 : index
    %c0_43 = arith.constant 0 : index
    %117 = vector.load %arg10[%c0_42, %c0_43] : memref<1x32xf32, #tpu.memory_space<vmem>>, vector<1x32xf32>
    %118 = vector.shape_cast %117 : vector<1x32xf32> to vector<32xf32>
    %cst_44 = arith.constant dense<0.000000e+00> : vector<32xf32>
    %119 = vector.multi_reduction <add>, %114, %cst_44 [1] : vector<32x32xf32> to vector<32xf32>
    %120 = vector.shape_cast %119 : vector<32xf32> to vector<32x1xf32>
    %cst_45 = arith.constant 3.200000e+01 : f32
    %121 = vector.broadcast %cst_45 : f32 to vector<32x1xf32>
    %122 = arith.divf %120, %121 : vector<32x1xf32>
    %123 = vector.broadcast %122 : vector<32x1xf32> to vector<32x32xf32>
    %124 = arith.subf %114, %123 : vector<32x32xf32>
    %125 = arith.mulf %124, %124 : vector<32x32xf32>
    %cst_46 = arith.constant dense<0.000000e+00> : vector<32xf32>
    %126 = vector.multi_reduction <add>, %125, %cst_46 [1] : vector<32x32xf32> to vector<32xf32>
    %127 = vector.shape_cast %126 : vector<32xf32> to vector<32x1xf32>
    %cst_47 = arith.constant 3.200000e+01 : f32
    %128 = vector.broadcast %cst_47 : f32 to vector<32x1xf32>
    %129 = arith.divf %127, %128 : vector<32x1xf32>
    %130 = vector.broadcast %122 : vector<32x1xf32> to vector<32x32xf32>
    %131 = arith.subf %114, %130 : vector<32x32xf32>
    %cst_48 = arith.constant 9.99999974E-6 : f32
    %132 = vector.broadcast %cst_48 : f32 to vector<32x1xf32>
    %133 = arith.addf %129, %132 : vector<32x1xf32>
    %134 = math.rsqrt %133 : vector<32x1xf32>
    %135 = vector.broadcast %134 : vector<32x1xf32> to vector<32x32xf32>
    %136 = arith.mulf %131, %135 : vector<32x32xf32>
    %137 = vector.shape_cast %116 : vector<32xf32> to vector<1x32xf32>
    %138 = vector.broadcast %137 : vector<1x32xf32> to vector<32x32xf32>
    %139 = arith.mulf %136, %138 : vector<32x32xf32>
    %140 = vector.shape_cast %118 : vector<32xf32> to vector<1x32xf32>
    %141 = vector.broadcast %140 : vector<1x32xf32> to vector<32x32xf32>
    %142 = arith.addf %139, %141 : vector<32x32xf32>
    %143 = arith.truncf %142 : vector<32x32xf32> to vector<32x32xbf16>
    %c0_49 = arith.constant 0 : index
    %c0_50 = arith.constant 0 : index
    %144 = vector.load %arg12[%c0_49, %c0_50] : memref<1x64xf32, #tpu.memory_space<vmem>>, vector<1x64xf32>
    %145 = vector.shape_cast %144 : vector<1x64xf32> to vector<64xf32>
    %cst_51 = arith.constant 0.000000e+00 : f32
    %146 = vector.broadcast %cst_51 : f32 to vector<32x32xf32>
    %c0_52 = arith.constant 0 : index
    %c0_53 = arith.constant 0 : index
    %147 = vector.load %arg11[%c0_52, %c0_53] : memref<32x64xbf16, #tpu.memory_space<vmem>>, vector<32x64xbf16>
    %cst_54 = arith.constant dense<0.000000e+00> : vector<32x64xf32>
    %148 = tpu.matmul %143, %147, %cst_54 {dimension_numbers = #tpu.dot_dimension_numbers<[1], [0], [0], [1], [0, 0, 1, 1], [], []>} : vector<32x32xbf16>, vector<32x64xbf16>, vector<32x64xf32> -> vector<32x64xf32>
    %149 = vector.shape_cast %145 : vector<64xf32> to vector<1x64xf32>
    %150 = vector.broadcast %149 : vector<1x64xf32> to vector<32x64xf32>
    %151 = arith.addf %148, %150 : vector<32x64xf32>
    %cst_55 = arith.constant 0.000000e+00 : f32
    %152 = vector.broadcast %cst_55 : f32 to vector<32x64xf32>
    %153 = arith.maximumf %151, %152 : vector<32x64xf32>
    %154 = arith.truncf %153 : vector<32x64xf32> to vector<32x64xbf16>
    %c0_56 = arith.constant 0 : index
    %c0_57 = arith.constant 0 : index
    %155 = vector.load %arg13[%c0_56, %c0_57] : memref<64x32xbf16, #tpu.memory_space<vmem>>, vector<64x32xbf16>
    %cst_58 = arith.constant dense<0.000000e+00> : vector<32x32xf32>
    %156 = tpu.matmul %154, %155, %cst_58 {dimension_numbers = #tpu.dot_dimension_numbers<[1], [0], [0], [1], [0, 0, 1, 1], [], []>} : vector<32x64xbf16>, vector<64x32xbf16>, vector<32x32xf32> -> vector<32x32xf32>
    %157 = arith.addf %146, %156 : vector<32x32xf32>
    %c0_59 = arith.constant 0 : index
    %c0_60 = arith.constant 0 : index
    %158 = vector.load %arg14[%c0_59, %c0_60] : memref<1x32xf32, #tpu.memory_space<vmem>>, vector<1x32xf32>
    %159 = vector.shape_cast %158 : vector<1x32xf32> to vector<32xf32>
    %160 = vector.shape_cast %159 : vector<32xf32> to vector<1x32xf32>
    %161 = vector.broadcast %160 : vector<1x32xf32> to vector<32x32xf32>
    %162 = arith.addf %157, %161 : vector<32x32xf32>
    %163 = arith.addf %142, %162 : vector<32x32xf32>
    %c0_61 = arith.constant 0 : index
    %c0_62 = arith.constant 0 : index
    %164 = vector.load %arg15[%c0_61, %c0_62] : memref<1x32xf32, #tpu.memory_space<vmem>>, vector<1x32xf32>
    %165 = vector.shape_cast %164 : vector<1x32xf32> to vector<32xf32>
    %c0_63 = arith.constant 0 : index
    %c0_64 = arith.constant 0 : index
    %166 = vector.load %arg16[%c0_63, %c0_64] : memref<1x32xf32, #tpu.memory_space<vmem>>, vector<1x32xf32>
    %167 = vector.shape_cast %166 : vector<1x32xf32> to vector<32xf32>
    %cst_65 = arith.constant dense<0.000000e+00> : vector<32xf32>
    %168 = vector.multi_reduction <add>, %163, %cst_65 [1] : vector<32x32xf32> to vector<32xf32>
    %169 = vector.shape_cast %168 : vector<32xf32> to vector<32x1xf32>
    %cst_66 = arith.constant 3.200000e+01 : f32
    %170 = vector.broadcast %cst_66 : f32 to vector<32x1xf32>
    %171 = arith.divf %169, %170 : vector<32x1xf32>
    %172 = vector.broadcast %171 : vector<32x1xf32> to vector<32x32xf32>
    %173 = arith.subf %163, %172 : vector<32x32xf32>
    %174 = arith.mulf %173, %173 : vector<32x32xf32>
    %cst_67 = arith.constant dense<0.000000e+00> : vector<32xf32>
    %175 = vector.multi_reduction <add>, %174, %cst_67 [1] : vector<32x32xf32> to vector<32xf32>
    %176 = vector.shape_cast %175 : vector<32xf32> to vector<32x1xf32>
    %cst_68 = arith.constant 3.200000e+01 : f32
    %177 = vector.broadcast %cst_68 : f32 to vector<32x1xf32>
    %178 = arith.divf %176, %177 : vector<32x1xf32>
    %179 = vector.broadcast %171 : vector<32x1xf32> to vector<32x32xf32>
    %180 = arith.subf %163, %179 : vector<32x32xf32>
    %cst_69 = arith.constant 9.99999974E-6 : f32
    %181 = vector.broadcast %cst_69 : f32 to vector<32x1xf32>
    %182 = arith.addf %178, %181 : vector<32x1xf32>
    %183 = math.rsqrt %182 : vector<32x1xf32>
    %184 = vector.broadcast %183 : vector<32x1xf32> to vector<32x32xf32>
    %185 = arith.mulf %180, %184 : vector<32x32xf32>
    %186 = vector.shape_cast %165 : vector<32xf32> to vector<1x32xf32>
    %187 = vector.broadcast %186 : vector<1x32xf32> to vector<32x32xf32>
    %188 = arith.mulf %185, %187 : vector<32x32xf32>
    %189 = vector.shape_cast %167 : vector<32xf32> to vector<1x32xf32>
    %190 = vector.broadcast %189 : vector<1x32xf32> to vector<32x32xf32>
    %191 = arith.addf %188, %190 : vector<32x32xf32>
    %c0_70 = arith.constant 0 : index
    %c0_71 = arith.constant 0 : index
    %192 = vector.load %arg17[%c0_70, %c0_71] : memref<32x32xf32, #tpu.memory_space<vmem>>, vector<32x32xf32>
    tpu.vector_store %arg17[%c0_70, %c0_71], %191 {strides = array<i32>} : memref<32x32xf32, #tpu.memory_space<vmem>>, vector<32x32xf32>,
    return
  }
  func.func @transform_0(%arg0: i32) -> (i32, i32) {
    %c0_i32 = arith.constant 0 : i32
    %c0_i32_0 = arith.constant 0 : i32
    return %arg0, %c0_i32 : i32, i32
  }
  func.func @transform_1(%arg0: i32) -> (i32, i32) {
    %c0_i32 = arith.constant 0 : i32
    %c0_i32_0 = arith.constant 0 : i32
    return %arg0, %c0_i32 : i32, i32
  }
  func.func @transform_2(%arg0: i32) -> (i32, i32) {
    %c0_i32 = arith.constant 0 : i32
    %c0_i32_0 = arith.constant 0 : i32
    %c0_i32_1 = arith.constant 0 : i32
    return %c0_i32, %c0_i32_0 : i32, i32
  }
  func.func @transform_3(%arg0: i32) -> (i32, i32) {
    %c0_i32 = arith.constant 0 : i32
    %c0_i32_0 = arith.constant 0 : i32
    %c0_i32_1 = arith.constant 0 : i32
    return %c0_i32, %c0_i32_0 : i32, i32
  }
  func.func @transform_4(%arg0: i32) -> (i32, i32) {
    %c0_i32 = arith.constant 0 : i32
    %c0_i32_0 = arith.constant 0 : i32
    %c0_i32_1 = arith.constant 0 : i32
    return %c0_i32, %c0_i32_0 : i32, i32
  }
  func.func @transform_5(%arg0: i32) -> (i32, i32) {
    %c0_i32 = arith.constant 0 : i32
    %c0_i32_0 = arith.constant 0 : i32
    %c0_i32_1 = arith.constant 0 : i32
    return %c0_i32, %c0_i32_0 : i32, i32
  }
  func.func @transform_6(%arg0: i32) -> (i32, i32) {
    %c0_i32 = arith.constant 0 : i32
    %c0_i32_0 = arith.constant 0 : i32
    %c0_i32_1 = arith.constant 0 : i32
    return %c0_i32, %c0_i32_0 : i32, i32
  }
  func.func @transform_7(%arg0: i32) -> (i32, i32) {
    %c0_i32 = arith.constant 0 : i32
    %c0_i32_0 = arith.constant 0 : i32
    %c0_i32_1 = arith.constant 0 : i32
    return %c0_i32, %c0_i32_0 : i32, i32
  }
  func.func @transform_8(%arg0: i32) -> (i32, i32) {
    %c0_i32 = arith.constant 0 : i32
    %c0_i32_0 = arith.constant 0 : i32
    %c0_i32_1 = arith.constant 0 : i32
    return %c0_i32, %c0_i32_0 : i32, i32
  }
  func.func @transform_9(%arg0: i32) -> (i32, i32) {
    %c0_i32 = arith.constant 0 : i32
    %c0_i32_0 = arith.constant 0 : i32
    %c0_i32_1 = arith.constant 0 : i32
    return %c0_i32, %c0_i32_0 : i32, i32
  }
  func.func @transform_10(%arg0: i32) -> (i32, i32) {
    %c0_i32 = arith.constant 0 : i32
    %c0_i32_0 = arith.constant 0 : i32
    %c0_i32_1 = arith.constant 0 : i32
    return %c0_i32, %c0_i32_0 : i32, i32
  }
  func.func @transform_11(%arg0: i32) -> (i32, i32) {
    %c0_i32 = arith.constant 0 : i32
    %c0_i32_0 = arith.constant 0 : i32
    %c0_i32_1 = arith.constant 0 : i32
    return %c0_i32, %c0_i32_0 : i32, i32
  }
  func.func @transform_12(%arg0: i32) -> (i32, i32) {
    %c0_i32 = arith.constant 0 : i32
    %c0_i32_0 = arith.constant 0 : i32
    %c0_i32_1 = arith.constant 0 : i32
    return %c0_i32, %c0_i32_0 : i32, i32
  }
  func.func @transform_13(%arg0: i32) -> (i32, i32) {
    %c0_i32 = arith.constant 0 : i32
    %c0_i32_0 = arith.constant 0 : i32
    %c0_i32_1 = arith.constant 0 : i32
    return %c0_i32, %c0_i32_0 : i32, i32
  }
  func.func @transform_14(%arg0: i32) -> (i32, i32) {
    %c0_i32 = arith.constant 0 : i32
    %c0_i32_0 = arith.constant 0 : i32
    %c0_i32_1 = arith.constant 0 : i32
    return %c0_i32, %c0_i32_0 : i32, i32
  }
  func.func @transform_15(%arg0: i32) -> (i32, i32) {
    %c0_i32 = arith.constant 0 : i32
    %c0_i32_0 = arith.constant 0 : i32
    %c0_i32_1 = arith.constant 0 : i32
    return %c0_i32, %c0_i32_0 : i32, i32
  }
  func.func @transform_16(%arg0: i32) -> (i32, i32) {
    %c0_i32 = arith.constant 0 : i32
    %c0_i32_0 = arith.constant 0 : i32
    return %arg0, %c0_i32 : i32, i32
  }
}

</mosaic_0001>

<llo_original>
// kernel: tpu_custom_call.1
$region0: #{tpu_custom_call.1}
  #allocation0 [shape = 'u32[]', space=smem, size = 0x4, offset = 0x4, fixed_abs, tag = 'smem constant byte address 0x4 - core index']
  #allocation1 [shape = 'u32[144,128]{1,0:T(1,128)}', space=vmem, size = 0x12000, scoped, tag = 'internal scratch']
  #allocation2 [shape = 'f32[32,32]{1,0:T(8,128)}', space=vmem, size = 0x4000, scoped, tag = 'scratch operand']
  %s0 = inlined_call_operand.vmem [shape: f32[32,32], index: 0, kind: input, shape index: {}]
  %s1 = inlined_call_operand.hbm [shape: f32[32,32], index: 1, kind: input, shape index: {}]
  %s2 = inlined_call_operand.vmem [shape: bf16[32,64], index: 2, kind: input, shape index: {}]
  %s3 = inlined_call_operand.vmem [shape: f32[1,64], index: 3, kind: input, shape index: {}]
  %s4 = inlined_call_operand.hbm [shape: bf16[32,32], index: 4, kind: input, shape index: {}]
  %s5 = inlined_call_operand.vmem [shape: f32[1,32], index: 5, kind: input, shape index: {}]
  %s6 = inlined_call_operand.hbm [shape: bf16[32,32], index: 6, kind: input, shape index: {}]
  %s7 = inlined_call_operand.hbm [shape: f32[1,32], index: 7, kind: input, shape index: {}]
  %s8 = inlined_call_operand.hbm [shape: f32[1,32], index: 8, kind: input, shape index: {}]
  %s9 = inlined_call_operand.hbm [shape: f32[1,32], index: 9, kind: input, shape index: {}]
  %s10 = inlined_call_operand.vmem [shape: bf16[32,64], index: 10, kind: input, shape index: {}]
  %s11 = inlined_call_operand.vmem [shape: f32[1,64], index: 11, kind: input, shape index: {}]
  %s12 = inlined_call_operand.vmem [shape: bf16[64,32], index: 12, kind: input, shape index: {}]
  %s13 = inlined_call_operand.vmem [shape: f32[1,32], index: 13, kind: input, shape index: {}]
  %s14 = inlined_call_operand.vmem [shape: f32[1,32], index: 14, kind: input, shape index: {}]
  %s15 = inlined_call_operand.vmem [shape: f32[1,32], index: 15, kind: input, shape index: {}]
  %s16 = inlined_call_operand.hbm [shape: f32[32,32], index: 16, kind: output, shape index: {}]
  %s17 = sld [smem:[#allocation0]]
  $region98: #{tpu_custom_call.1} parent=0
    _
  %s19 = ssub.s32 1, %s17
  %s20 = scalar_select 0, %s19, %s17
  $region1: #{tpu_custom_call.1} parent=0
    #allocation3 [shape = 'u8[16384]{0}', space=vmem, size = 0x4000, scoped, tag = 'input window, operand 1, single buffered']
    #allocation4 [shape = 's32[1]{0}', space=sflag, size = 0x4, scoped, tag = 'scoped memory for tpu_custom_call.1']
    #allocation5 [shape = 's32[1]{0}', space=sflag, size = 0x4, scoped, tag = 'scoped memory for tpu_custom_call.1']
    #allocation6 [shape = 'u8[8192]{0}', space=vmem, size = 0x2000, scoped, tag = 'input window, operand 4, single buffered']
    #allocation7 [shape = 's32[1]{0}', space=sflag, size = 0x4, scoped, tag = 'scoped memory for tpu_custom_call.1']
    #allocation8 [shape = 'u8[8192]{0}', space=vmem, size = 0x2000, scoped, tag = 'input window, operand 6, single buffered']
    #allocation9 [shape = 'u8[512]{0}', space=vmem, size = 0x400, scoped, tag = 'input window, operand 7, single buffered']
    #allocation10 [shape = 's32[1]{0}', space=sflag, size = 0x4, scoped, tag = 'scoped memory for tpu_custom_call.1']
    #allocation11 [shape = 'u8[512]{0}', space=vmem, size = 0x400, scoped, tag = 'input window, operand 8, single buffered']
    #allocation12 [shape = 'u8[512]{0}', space=vmem, size = 0x400, scoped, tag = 'input window, operand 9, single buffered']
    #allocation13 [shape = 's32[1]{0}', space=sflag, size = 0x4, scoped, tag = 'scoped memory for tpu_custom_call.1']
    #allocation14 [shape = 'u8[16384]{0}', space=vmem, size = 0x4000, scoped, tag = 'output window, operand 0, single buffered']
    %21 = vsyncpa [#allocation4], 0
    %22 = vsyncpa [#allocation7], 0
    %23 = vsyncpa [#allocation10], 0
    %24 = vsyncpa [#allocation13], 0
    %25 = vsyncpa [#allocation5], 0
    // Predicated region
    $region2: #{tpu_custom_call.1} parent=1 // pred_check
      _
    $region3: #{tpu_custom_call.1} parent=1 // pred_check_branch
      %27 = sbr.rel (0) target = $region5
    $region4: #{tpu_custom_call.1} parent=1 // pred_region
      _
    $region5: #{tpu_custom_call.1} parent=1 // pred_fallthru
      _
    // Predicated region
    $region6: #{tpu_custom_call.1} parent=1 // pred_check
      _
    $region7: #{tpu_custom_call.1} parent=1 // pred_check_branch
      %29 = sbr.rel (0) target = $region9
    $region8: #{tpu_custom_call.1} parent=1 // pred_region
      %s31 = ssub.s32 512, 512
      %32 = vsyncadd [#allocation4], %s31
      %s33 = sshll.u32 [#allocation3], 4
      %s34 = int_to_ptr.vmem [resolvable:$true] %s33
      %39 = dma.hbm_to_vmem [thread:$0]  %s1, 512, %s34, [#allocation4], 128, 128, 8
    $region9: #{tpu_custom_call.1} parent=1 // pred_fallthru
      _
    // Predicated region
    $region10: #{tpu_custom_call.1} parent=1 // pred_check
      _
    $region11: #{tpu_custom_call.1} parent=1 // pred_check_branch
      %41 = sbr.rel (0) target = $region13
    $region12: #{tpu_custom_call.1} parent=1 // pred_region
      _
    $region13: #{tpu_custom_call.1} parent=1 // pred_fallthru
      _
    // Predicated region
    $region14: #{tpu_custom_call.1} parent=1 // pred_check
      _
    $region15: #{tpu_custom_call.1} parent=1 // pred_check_branch
      %43 = sbr.rel (0) target = $region17
    $region16: #{tpu_custom_call.1} parent=1 // pred_region
      _
    $region17: #{tpu_custom_call.1} parent=1 // pred_fallthru
      _
    // Predicated region
    $region18: #{tpu_custom_call.1} parent=1 // pred_check
      _
    $region19: #{tpu_custom_call.1} parent=1 // pred_check_branch
      %45 = sbr.rel (0) target = $region21
    $region20: #{tpu_custom_call.1} parent=1 // pred_region
      %s47 = ssub.s32 256, 256
      %48 = vsyncadd [#allocation7], %s47
      %s49 = sshll.u32 [#allocation6], 4
      %s50 = int_to_ptr.vmem [resolvable:$true] %s49
      %55 = dma.hbm_to_vmem [thread:$0]  %s4, 256, %s50, [#allocation7], 64, 64, 4
    $region21: #{tpu_custom_call.1} parent=1 // pred_fallthru
      _
    // Predicated region
    $region22: #{tpu_custom_call.1} parent=1 // pred_check
      _
    $region23: #{tpu_custom_call.1} parent=1 // pred_check_branch
      %57 = sbr.rel (0) target = $region25
    $region24: #{tpu_custom_call.1} parent=1 // pred_region
      _
    $region25: #{tpu_custom_call.1} parent=1 // pred_fallthru
      _
    // Predicated region
    $region26: #{tpu_custom_call.1} parent=1 // pred_check
      _
    $region27: #{tpu_custom_call.1} parent=1 // pred_check_branch
      %59 = sbr.rel (0) target = $region29
    $region28: #{tpu_custom_call.1} parent=1 // pred_region
      %s61 = ssub.s32 256, 256
      %62 = vsyncadd [#allocation7], %s61
      %s63 = sshll.u32 [#allocation8], 4
      %s64 = int_to_ptr.vmem [resolvable:$true] %s63
      %69 = dma.hbm_to_vmem [thread:$0]  %s6, 256, %s64, [#allocation7], 64, 64, 4
    $region29: #{tpu_custom_call.1} parent=1 // pred_fallthru
      _
    // Predicated region
    $region30: #{tpu_custom_call.1} parent=1 // pred_check
      _
    $region31: #{tpu_custom_call.1} parent=1 // pred_check_branch
      %71 = sbr.rel (0) target = $region33
    $region32: #{tpu_custom_call.1} parent=1 // pred_region
      %s73 = ssub.s32 16, 16
      %74 = vsyncadd [#allocation10], %s73
      %s76 = sshll.u32 [#allocation9], 4
      %s77 = int_to_ptr.vmem [resolvable:$true] %s76
      %79 = dma.hbm_to_vmem [thread:$0]  %s7, 16, %s77, [#allocation10]
    $region33: #{tpu_custom_call.1} parent=1 // pred_fallthru
      _
    // Predicated region
    $region34: #{tpu_custom_call.1} parent=1 // pred_check
      _
    $region35: #{tpu_custom_call.1} parent=1 // pred_check_branch
      %81 = sbr.rel (0) target = $region37
    $region36: #{tpu_custom_call.1} parent=1 // pred_region
      %s83 = ssub.s32 16, 16
      %84 = vsyncadd [#allocation10], %s83
      %s86 = sshll.u32 [#allocation11], 4
      %s87 = int_to_ptr.vmem [resolvable:$true] %s86
      %89 = dma.hbm_to_vmem [thread:$0]  %s8, 16, %s87, [#allocation10]
    $region37: #{tpu_custom_call.1} parent=1 // pred_fallthru
      _
    // Predicated region
    $region38: #{tpu_custom_call.1} parent=1 // pred_check
      _
    $region39: #{tpu_custom_call.1} parent=1 // pred_check_branch
      %91 = sbr.rel (0) target = $region41
    $region40: #{tpu_custom_call.1} parent=1 // pred_region
      %s93 = ssub.s32 16, 16
      %94 = vsyncadd [#allocation13], %s93
      %s96 = sshll.u32 [#allocation12], 4
      %s97 = int_to_ptr.vmem [resolvable:$true] %s96
      %99 = dma.hbm_to_vmem [thread:$0]  %s9, 16, %s97, [#allocation13]
    $region41: #{tpu_custom_call.1} parent=1 // pred_fallthru
      _
    // Predicated region
    $region42: #{tpu_custom_call.1} parent=1 // pred_check
      _
    $region43: #{tpu_custom_call.1} parent=1 // pred_check_branch
      %101 = sbr.rel (0) target = $region45
    $region44: #{tpu_custom_call.1} parent=1 // pred_region
      _
    $region45: #{tpu_custom_call.1} parent=1 // pred_fallthru
      _
    // Predicated region
    $region46: #{tpu_custom_call.1} parent=1 // pred_check
      _
    $region47: #{tpu_custom_call.1} parent=1 // pred_check_branch
      %103 = sbr.rel (0) target = $region49
    $region48: #{tpu_custom_call.1} parent=1 // pred_region
      _
    $region49: #{tpu_custom_call.1} parent=1 // pred_fallthru
      _
    // Predicated region
    $region50: #{tpu_custom_call.1} parent=1 // pred_check
      _
    $region51: #{tpu_custom_call.1} parent=1 // pred_check_branch
      %105 = sbr.rel (0) target = $region53
    $region52: #{tpu_custom_call.1} parent=1 // pred_region
      _
    $region53: #{tpu_custom_call.1} parent=1 // pred_fallthru
      _
    // Predicated region
    $region54: #{tpu_custom_call.1} parent=1 // pred_check
      _
    $region55: #{tpu_custom_call.1} parent=1 // pred_check_branch
      %107 = sbr.rel (0) target = $region57
    $region56: #{tpu_custom_call.1} parent=1 // pred_region
      _
    $region57: #{tpu_custom_call.1} parent=1 // pred_fallthru
      _
    // Predicated region
    $region58: #{tpu_custom_call.1} parent=1 // pred_check
      _
    $region59: #{tpu_custom_call.1} parent=1 // pred_check_branch
      %109 = sbr.rel (0) target = $region61
    $region60: #{tpu_custom_call.1} parent=1 // pred_region
      _
    $region61: #{tpu_custom_call.1} parent=1 // pred_fallthru
      _
    // Predicated region
    $region62: #{tpu_custom_call.1} parent=1 // pred_check
      _
    $region63: #{tpu_custom_call.1} parent=1 // pred_check_branch
      %111 = sbr.rel (0) target = $region65
    $region64: #{tpu_custom_call.1} parent=1 // pred_region
      _
    $region65: #{tpu_custom_call.1} parent=1 // pred_fallthru
      _
    // Predicated region
    $region66: #{tpu_custom_call.1} parent=1 // pred_check
      _
    $region67: #{tpu_custom_call.1} parent=1 // pred_check_branch
      %113 = sbr.rel (0) target = $region69
    $region68: #{tpu_custom_call.1} parent=1 // pred_region
      %114 = dma.done [#allocation4], 512
    $region69: #{tpu_custom_call.1} parent=1 // pred_fallthru
      _
    // Predicated region
    $region70: #{tpu_custom_call.1} parent=1 // pred_check
      _
    $region71: #{tpu_custom_call.1} parent=1 // pred_check_branch
      %116 = sbr.rel (0) target = $region73
    $region72: #{tpu_custom_call.1} parent=1 // pred_region
      %117 = dma.done [#allocation7], 256
    $region73: #{tpu_custom_call.1} parent=1 // pred_fallthru
      _
    // Predicated region
    $region74: #{tpu_custom_call.1} parent=1 // pred_check
      _
    $region75: #{tpu_custom_call.1} parent=1 // pred_check_branch
      %119 = sbr.rel (0) target = $region77
    $region76: #{tpu_custom_call.1} parent=1 // pred_region
      %120 = dma.done [#allocation7], 256
    $region77: #{tpu_custom_call.1} parent=1 // pred_fallthru
      _
    // Predicated region
    $region78: #{tpu_custom_call.1} parent=1 // pred_check
      _
    $region79: #{tpu_custom_call.1} parent=1 // pred_check_branch
      %122 = sbr.rel (0) target = $region81
    $region80: #{tpu_custom_call.1} parent=1 // pred_region
      %123 = dma.done [#allocation10], 16
    $region81: #{tpu_custom_call.1} parent=1 // pred_fallthru
      _
    // Predicated region
    $region82: #{tpu_custom_call.1} parent=1 // pred_check
      _
    $region83: #{tpu_custom_call.1} parent=1 // pred_check_branch
      %125 = sbr.rel (0) target = $region85
    $region84: #{tpu_custom_call.1} parent=1 // pred_region
      %126 = dma.done [#allocation10], 16
    $region85: #{tpu_custom_call.1} parent=1 // pred_fallthru
      _
    // Predicated region
    $region86: #{tpu_custom_call.1} parent=1 // pred_check
      _
    $region87: #{tpu_custom_call.1} parent=1 // pred_check_branch
      %128 = sbr.rel (0) target = $region89
    $region88: #{tpu_custom_call.1} parent=1 // pred_region
      %129 = dma.done [#allocation13], 16
    $region89: #{tpu_custom_call.1} parent=1 // pred_fallthru
      _
    %v131 = vld [vmem:[%s0] sm:$0xff]
    %v132 = vld [vmem:[%s0 + $0x8] sm:$0xff]
    %v133 = vld [vmem:[%s0 + $0x10] sm:$0xff]
    %v134 = vld [vmem:[%s0 + $0x18] sm:$0xff]
    %v135 = vld [vmem:[#allocation3] sm:$0xff]
    %v136 = vld [vmem:[#allocation3 + $0x8] sm:$0xff]
    %v137 = vld [vmem:[#allocation3 + $0x10] sm:$0xff]
    %v138 = vld [vmem:[#allocation3 + $0x18] sm:$0xff]
    %v139 = vadd.f32 %v131, %v135
    %v140 = vadd.f32 %v132, %v136
    %v141 = vadd.f32 %v133, %v137
    %v142 = vadd.f32 %v134, %v138
    %v143 = vpack.c.bf16 %v140, %v139
    %v144 = vpack.c.bf16 %v142, %v141
    %v145 = vpack.c.bf16 %v132, %v131
    %v146 = vpack.c.bf16 %v134, %v133
    %v147 = vld [vmem:[%s2] sm:$0xf]
    %v148 = vld [vmem:[%s2 + $0x4] sm:$0xf]
    %v149 = vld [vmem:[%s2 + $0x8] sm:$0xf]
    %v150 = vld [vmem:[%s2 + $0xc] sm:$0xf]
    %v151 = vld [vmem:[%s3] sm:$0x1]
    %v153 = vlaneseq
    %v154 = vshrl.u32 %v153, 7
    %v155 = vsub.s32 0, %v154
    %v156 = vrot.slane %v151, %v155
    %v162 = vunpack.c.l.b16 %v147
    %v163 = vunpack.c.l.b16 %v148
    %v164 = vunpack.c.l.b16 %v149
    %v165 = vunpack.c.l.b16 %v150
    %v166 = vpack.c.b16 %v163, %v162
    %v167 = vpack.c.b16 %v165, %v164
    %vm170 = vcmask 261120
    %v172 = vsel %vm170, %v143, 0
    %v175 = vsel %vm170, %v144, 0
    %177 = vmatprep.subr.bf16.mxu0 0
    %178 = vmatpush1.bf16.msra.mxu0 %v166
    %179 = vmatprep.subr.bf16.mxu0 0
    %180 = vmatpush1.bf16.msra.mxu0 %v167
    %181 = vmatprep.subr.bf16.mxu0 0
    %182 = vmatpush1.bf16.msra.mxu0 0
    %183 = vmatprep.subr.bf16.mxu0 0
    %184 = vmatpush1.bf16.msra.mxu0 0
    %185 = vmatprep.subr.bf16.mxu0 0
    %186 = vmatpush1.bf16.msra.mxu0 0
    %187 = vmatprep.subr.bf16.mxu0 0
    %188 = vmatpush1.bf16.msra.mxu0 0
    %189 = vmatprep.subr.bf16.mxu0 0
    %190 = vmatpush1.bf16.msra.mxu0 0
    %191 = vmatprep.subr.bf16.mxu0 0
    %192 = vmatpush1.bf16.msra.mxu0 0
    %193 = vmatprep.subr.bf16.mxu0 0
    %194 = vmatpush1.bf16.msra.mxu0 0
    %195 = vmatprep.subr.bf16.mxu0 0
    %196 = vmatpush1.bf16.msra.mxu0 0
    %197 = vmatprep.subr.bf16.mxu0 0
    %198 = vmatpush1.bf16.msra.mxu0 0
    %199 = vmatprep.subr.bf16.mxu0 0
    %200 = vmatpush1.bf16.msra.mxu0 0
    %201 = vmatprep.subr.bf16.mxu0 0
    %202 = vmatpush1.bf16.msra.mxu0 0
    %203 = vmatprep.subr.bf16.mxu0 0
    %204 = vmatpush1.bf16.msra.mxu0 0
    %205 = vmatprep.subr.bf16.mxu0 0
    %206 = vmatpush1.bf16.msra.mxu0 0
    %207 = vmatprep.subr.bf16.mxu0 0
    %208 = vmatpush1.bf16.msra.mxu0 0
    %209 = vmatprep.mubr.bf16.mxu0 0
    %210 = vmatmul.mubr.bf16.gmra.mrb[0].mxu0 %v172
    %v211 = vpop.f32.mrb[0].mxu0
    %v212 = vadd.f32 %v156, %v211
    %v213 = vpop.f32.mrb[0].mxu0
    %v214 = vpop.f32.mrb[0].mxu0
    %v215 = vadd.f32 %v156, %v214
    %v216 = vpop.f32.mrb[0].mxu0
    %217 = vmatprep.mubr.bf16.mxu0 0
    %218 = vmatmul.mubr.bf16.gmra.mrb[0].mxu0 %v175
    %v219 = vpop.f32.mrb[0].mxu0
    %v220 = vadd.f32 %v156, %v219
    %v221 = vpop.f32.mrb[0].mxu0
    %v222 = vpop.f32.mrb[0].mxu0
    %v223 = vadd.f32 %v156, %v222
    %v224 = vpop.f32.mrb[0].mxu0
    %225 = vdwg.mxu0
    %v226 = vld [vmem:[#allocation6] sm:$0xf]
    %v227 = vld [vmem:[#allocation6 + $0x4] sm:$0xf]
    %v228 = vld [vmem:[#allocation6 + $0x8] sm:$0xf]
    %v229 = vld [vmem:[#allocation6 + $0xc] sm:$0xf]
    %v230 = vld [vmem:[%s5] sm:$0x1]
    %v232 = vlaneseq
    %v233 = vshrl.u32 %v232, 7
    %v234 = vsub.s32 0, %v233
    %v235 = vrot.slane %v230, %v234
    %v241 = vunpack.c.l.b16 %v226
    %v242 = vunpack.c.l.b16 %v227
    %v243 = vunpack.c.l.b16 %v228
    %v244 = vunpack.c.l.b16 %v229
    %v245 = vpack.c.b16 %v242, %v241
    %v246 = vpack.c.b16 %v244, %v243
    %v250 = vsel %vm170, %v145, 0
    %v253 = vsel %vm170, %v146, 0
    %255 = vmatprep.subr.bf16.mxu0 0
    %256 = vmatpush1.bf16.msra.mxu0 %v245
    %257 = vmatprep.subr.bf16.mxu0 0
    %258 = vmatpush1.bf16.msra.mxu0 %v246
    %259 = vmatprep.subr.bf16.mxu0 0
    %260 = vmatpush1.bf16.msra.mxu0 0
    %261 = vmatprep.subr.bf16.mxu0 0
    %262 = vmatpush1.bf16.msra.mxu0 0
    %263 = vmatprep.subr.bf16.mxu0 0
    %264 = vmatpush1.bf16.msra.mxu0 0
    %265 = vmatprep.subr.bf16.mxu0 0
    %266 = vmatpush1.bf16.msra.mxu0 0
    %267 = vmatprep.subr.bf16.mxu0 0
    %268 = vmatpush1.bf16.msra.mxu0 0
    %269 = vmatprep.subr.bf16.mxu0 0
    %270 = vmatpush1.bf16.msra.mxu0 0
    %271 = vmatprep.subr.bf16.mxu0 0
    %272 = vmatpush1.bf16.msra.mxu0 0
    %273 = vmatprep.subr.bf16.mxu0 0
    %274 = vmatpush1.bf16.msra.mxu0 0
    %275 = vmatprep.subr.bf16.mxu0 0
    %276 = vmatpush1.bf16.msra.mxu0 0
    %277 = vmatprep.subr.bf16.mxu0 0
    %278 = vmatpush1.bf16.msra.mxu0 0
    %279 = vmatprep.subr.bf16.mxu0 0
    %280 = vmatpush1.bf16.msra.mxu0 0
    %281 = vmatprep.subr.bf16.mxu0 0
    %282 = vmatpush1.bf16.msra.mxu0 0
    %283 = vmatprep.subr.bf16.mxu0 0
    %284 = vmatpush1.bf16.msra.mxu0 0
    %285 = vmatprep.subr.bf16.mxu0 0
    %286 = vmatpush1.bf16.msra.mxu0 0
    %287 = vmatprep.mubr.bf16.mxu0 0
    %288 = vmatmul.mubr.bf16.gmra.mrb[0].mxu0 %v250
    %v289 = vpop.f32.mrb[0].mxu0
    %v290 = vadd.f32 %v235, %v289
    %v291 = vpop.f32.mrb[0].mxu0
    %v292 = vpop.f32.mrb[0].mxu0
    %v293 = vadd.f32 %v235, %v292
    %v294 = vpop.f32.mrb[0].mxu0
    %295 = vmatprep.mubr.bf16.mxu0 0
    %296 = vmatmul.mubr.bf16.gmra.mrb[0].mxu0 %v253
    %v297 = vpop.f32.mrb[0].mxu0
    %v298 = vadd.f32 %v235, %v297
    %v299 = vpop.f32.mrb[0].mxu0
    %v300 = vpop.f32.mrb[0].mxu0
    %v301 = vadd.f32 %v235, %v300
    %v302 = vpop.f32.mrb[0].mxu0
    %303 = vdwg.mxu0
    %v304 = vpack.c.bf16 %v215, %v212
    %v305 = vpack.c.bf16 %v223, %v220
    %v306 = vpack.c.bf16 %v293, %v290
    %v307 = vpack.c.bf16 %v301, %v298
    %309 = vrot.lane.b32.xlu0 %v304, 96
    %v310 = vpop.permute.xlu0 %309
    %vm311 = vcmask 64512
    %v313 = vsel %vm311, %v304, 0
    %v316 = vsel %vm311, %v310, 0
    %318 = vmatprep.subr.bf16.mxu0 0
    %319 = vmatpush1.bf16.xpose.msra.mxu0 %v316
    %320 = vmatprep.subr.bf16.mxu0 0
    %321 = vmatpush1.bf16.xpose.msra.mxu0 0
    %322 = vmatprep.subr.bf16.mxu0 0
    %323 = vmatpush1.bf16.xpose.msra.mxu0 0
    %324 = vmatprep.subr.bf16.mxu0 0
    %325 = vmatpush1.bf16.xpose.msra.mxu0 0
    %326 = vmatprep.subr.bf16.mxu0 0
    %327 = vmatpush1.bf16.xpose.msra.mxu0 0
    %328 = vmatprep.subr.bf16.mxu0 0
    %329 = vmatpush1.bf16.xpose.msra.mxu0 0
    %330 = vmatprep.subr.bf16.mxu0 0
    %331 = vmatpush1.bf16.xpose.msra.mxu0 0
    %332 = vmatprep.subr.bf16.mxu0 0
    %333 = vmatpush1.bf16.xpose.msra.mxu0 0
    %334 = vmatprep.subr.bf16.mxu0 0
    %335 = vmatpush1.bf16.xpose.msra.mxu0 0
    %336 = vmatprep.subr.bf16.mxu0 0
    %337 = vmatpush1.bf16.xpose.msra.mxu0 0
    %338 = vmatprep.subr.bf16.mxu0 0
    %339 = vmatpush1.bf16.xpose.msra.mxu0 0
    %340 = vmatprep.subr.bf16.mxu0 0
    %341 = vmatpush1.bf16.xpose.msra.mxu0 0
    %342 = vmatprep.subr.bf16.mxu0 0
    %343 = vmatpush1.bf16.xpose.msra.mxu0 0
    %344 = vmatprep.subr.bf16.mxu0 0
    %345 = vmatpush1.bf16.xpose.msra.mxu0 0
    %346 = vmatprep.subr.bf16.mxu0 0
    %347 = vmatpush1.bf16.xpose.msra.mxu0 0
    %348 = vmatprep.subr.bf16.mxu0 0
    %349 = vmatpush1.bf16.xpose.msra.mxu0 0
    %350 = vmatprep.mubr.bf16.mxu0 0
    %351 = vmatmul.mubr.bf16.gmra.mrb[0].mxu0 %v313
    %v352 = vpop.f32.mrb[0].mxu0
    %v353 = vadd.f32 0.0, %v352
    %v354 = vpop.f32.mrb[0].mxu0
    %v355 = vpop.f32.mrb[0].mxu0
    %v356 = vadd.f32 0.0, %v355
    %v357 = vpop.f32.mrb[0].mxu0
    %358 = vdwg.mxu0
    %360 = vrot.lane.b32.xlu0 %v305, 96
    %v361 = vpop.permute.xlu0 %360
    %v363 = vsel %vm311, %v305, 0
    %v366 = vsel %vm311, %v361, 0
    %368 = vmatprep.subr.bf16.mxu0 0
    %369 = vmatpush1.bf16.xpose.msra.mxu0 %v366
    %370 = vmatprep.subr.bf16.mxu0 0
    %371 = vmatpush1.bf16.xpose.msra.mxu0 0
    %372 = vmatprep.subr.bf16.mxu0 0
    %373 = vmatpush1.bf16.xpose.msra.mxu0 0
    %374 = vmatprep.subr.bf16.mxu0 0
    %375 = vmatpush1.bf16.xpose.msra.mxu0 0
    %376 = vmatprep.subr.bf16.mxu0 0
    %377 = vmatpush1.bf16.xpose.msra.mxu0 0
    %378 = vmatprep.subr.bf16.mxu0 0
    %379 = vmatpush1.bf16.xpose.msra.mxu0 0
    %380 = vmatprep.subr.bf16.mxu0 0
    %381 = vmatpush1.bf16.xpose.msra.mxu0 0
    %382 = vmatprep.subr.bf16.mxu0 0
    %383 = vmatpush1.bf16.xpose.msra.mxu0 0
    %384 = vmatprep.subr.bf16.mxu0 0
    %385 = vmatpush1.bf16.xpose.msra.mxu0 0
    %386 = vmatprep.subr.bf16.mxu0 0
    %387 = vmatpush1.bf16.xpose.msra.mxu0 0
    %388 = vmatprep.subr.bf16.mxu0 0
    %389 = vmatpush1.bf16.xpose.msra.mxu0 0
    %390 = vmatprep.subr.bf16.mxu0 0
    %391 = vmatpush1.bf16.xpose.msra.mxu0 0
    %392 = vmatprep.subr.bf16.mxu0 0
    %393 = vmatpush1.bf16.xpose.msra.mxu0 0
    %394 = vmatprep.subr.bf16.mxu0 0
    %395 = vmatpush1.bf16.xpose.msra.mxu0 0
    %396 = vmatprep.subr.bf16.mxu0 0
    %397 = vmatpush1.bf16.xpose.msra.mxu0 0
    %398 = vmatprep.subr.bf16.mxu0 0
    %399 = vmatpush1.bf16.xpose.msra.mxu0 0
    %400 = vmatprep.mubr.bf16.mxu0 0
    %401 = vmatmul.mubr.bf16.gmra.mrb[0].mxu0 %v363
    %v402 = vpop.f32.mrb[0].mxu0
    %v403 = vadd.f32 0.0, %v402
    %v404 = vpop.f32.mrb[0].mxu0
    %v405 = vpop.f32.mrb[0].mxu0
    %v406 = vadd.f32 0.0, %v405
    %v407 = vpop.f32.mrb[0].mxu0
    %408 = vdwg.mxu0
    %vm409 = vcmask 130048
    %v410 = vsel %vm409, %v353, -inf
    %411 = vmax.xlane.f32.xlu0 %v410
    %v412 = vpop.xlane.xlu0 %411
    %v413 = vsel %vm409, %v356, -inf
    %414 = vmax.xlane.f32.xlu0 %v413
    %v415 = vpop.xlane.xlu0 %414
    %v416 = vsel %vm409, %v403, -inf
    %417 = vmax.xlane.f32.xlu0 %v416
    %v418 = vpop.xlane.xlu0 %417
    %v419 = vsel %vm409, %v406, -inf
    %420 = vmax.xlane.f32.xlu0 %v419
    %v421 = vpop.xlane.xlu0 %420
    %v422 = vsub.f32 %v353, %v412
    %v423 = vsub.f32 %v356, %v415
    %v424 = vsub.f32 %v403, %v418
    %v425 = vsub.f32 %v406, %v421
    %v426 = vmul.f32 %v422, 1.442695
    %v427 = vpow.pop %v426
    %v428 = vmul.f32 %v423, 1.442695
    %v429 = vpow.pop %v428
    %v430 = vmul.f32 %v424, 1.442695
    %v431 = vpow.pop %v430
    %v432 = vmul.f32 %v425, 1.442695
    %v433 = vpow.pop %v432
    %v434 = vsel %vm409, %v427, 0.0
    %435 = vadd.xlane.f32.xlu0 %v434
    %v436 = vpop.xlane.xlu0 %435
    %v437 = vsel %vm409, %v429, 0.0
    %438 = vadd.xlane.f32.xlu0 %v437
    %v439 = vpop.xlane.xlu0 %438
    %v440 = vsel %vm409, %v431, 0.0
    %441 = vadd.xlane.f32.xlu0 %v440
    %v442 = vpop.xlane.xlu0 %441
    %v443 = vsel %vm409, %v433, 0.0
    %444 = vadd.xlane.f32.xlu0 %v443
    %v445 = vpop.xlane.xlu0 %444
    %v446 = vrcp.pop %v436
    %v447 = vrcp.pop %v439
    %v448 = vrcp.pop %v442
    %v449 = vrcp.pop %v445
    %v450 = vmul.f32 %v427, %v446
    %v451 = vmul.f32 %v429, %v447
    %v452 = vmul.f32 %v431, %v448
    %v453 = vmul.f32 %v433, %v449
    %v454 = vpack.c.bf16 %v451, %v450
    %v455 = vpack.c.bf16 %v453, %v452
    %v457 = vsel %vm409, %v454, 0
    %459 = vmatprep.subr.bf16.mxu0 0
    %460 = vmatpush1.bf16.msra.mxu0 %v306
    %461 = vmatprep.subr.bf16.mxu0 0
    %462 = vmatpush1.bf16.msra.mxu0 0
    %463 = vmatprep.subr.bf16.mxu0 0
    %464 = vmatpush1.bf16.msra.mxu0 0
    %465 = vmatprep.subr.bf16.mxu0 0
    %466 = vmatpush1.bf16.msra.mxu0 0
    %467 = vmatprep.subr.bf16.mxu0 0
    %468 = vmatpush1.bf16.msra.mxu0 0
    %469 = vmatprep.subr.bf16.mxu0 0
    %470 = vmatpush1.bf16.msra.mxu0 0
    %471 = vmatprep.subr.bf16.mxu0 0
    %472 = vmatpush1.bf16.msra.mxu0 0
    %473 = vmatprep.subr.bf16.mxu0 0
    %474 = vmatpush1.bf16.msra.mxu0 0
    %475 = vmatprep.subr.bf16.mxu0 0
    %476 = vmatpush1.bf16.msra.mxu0 0
    %477 = vmatprep.subr.bf16.mxu0 0
    %478 = vmatpush1.bf16.msra.mxu0 0
    %479 = vmatprep.subr.bf16.mxu0 0
    %480 = vmatpush1.bf16.msra.mxu0 0
    %481 = vmatprep.subr.bf16.mxu0 0
    %482 = vmatpush1.bf16.msra.mxu0 0
    %483 = vmatprep.subr.bf16.mxu0 0
    %484 = vmatpush1.bf16.msra.mxu0 0
    %485 = vmatprep.subr.bf16.mxu0 0
    %486 = vmatpush1.bf16.msra.mxu0 0
    %487 = vmatprep.subr.bf16.mxu0 0
    %488 = vmatpush1.bf16.msra.mxu0 0
    %489 = vmatprep.subr.bf16.mxu0 0
    %490 = vmatpush1.bf16.msra.mxu0 0
    %491 = vmatprep.mubr.bf16.mxu0 0
    %492 = vmatmul.mubr.bf16.gmra.mrb[0].mxu0 %v457
    %v493 = vpop.f32.mrb[0].mxu0
    %v494 = vadd.f32 0.0, %v493
    %v495 = vpop.f32.mrb[0].mxu0
    %v496 = vpop.f32.mrb[0].mxu0
    %v497 = vadd.f32 0.0, %v496
    %v498 = vpop.f32.mrb[0].mxu0
    %499 = vdwg.mxu0
    %v501 = vsel %vm409, %v455, 0
    %503 = vmatprep.subr.bf16.mxu0 0
    %504 = vmatpush1.bf16.msra.mxu0 %v307
    %505 = vmatprep.subr.bf16.mxu0 0
    %506 = vmatpush1.bf16.msra.mxu0 0
    %507 = vmatprep.subr.bf16.mxu0 0
    %508 = vmatpush1.bf16.msra.mxu0 0
    %509 = vmatprep.subr.bf16.mxu0 0
    %510 = vmatpush1.bf16.msra.mxu0 0
    %511 = vmatprep.subr.bf16.mxu0 0
    %512 = vmatpush1.bf16.msra.mxu0 0
    %513 = vmatprep.subr.bf16.mxu0 0
    %514 = vmatpush1.bf16.msra.mxu0 0
    %515 = vmatprep.subr.bf16.mxu0 0
    %516 = vmatpush1.bf16.msra.mxu0 0
    %517 = vmatprep.subr.bf16.mxu0 0
    %518 = vmatpush1.bf16.msra.mxu0 0
    %519 = vmatprep.subr.bf16.mxu0 0
    %520 = vmatpush1.bf16.msra.mxu0 0
    %521 = vmatprep.subr.bf16.mxu0 0
    %522 = vmatpush1.bf16.msra.mxu0 0
    %523 = vmatprep.subr.bf16.mxu0 0
    %524 = vmatpush1.bf16.msra.mxu0 0
    %525 = vmatprep.subr.bf16.mxu0 0
    %526 = vmatpush1.bf16.msra.mxu0 0
    %527 = vmatprep.subr.bf16.mxu0 0
    %528 = vmatpush1.bf16.msra.mxu0 0
    %529 = vmatprep.subr.bf16.mxu0 0
    %530 = vmatpush1.bf16.msra.mxu0 0
    %531 = vmatprep.subr.bf16.mxu0 0
    %532 = vmatpush1.bf16.msra.mxu0 0
    %533 = vmatprep.subr.bf16.mxu0 0
    %534 = vmatpush1.bf16.msra.mxu0 0
    %535 = vmatprep.mubr.bf16.mxu0 0
    %536 = vmatmul.mubr.bf16.gmra.mrb[0].mxu0 %v501
    %v537 = vpop.f32.mrb[0].mxu0
    %v538 = vadd.f32 0.0, %v537
    %v539 = vpop.f32.mrb[0].mxu0
    %v540 = vpop.f32.mrb[0].mxu0
    %v541 = vadd.f32 0.0, %v540
    %v542 = vpop.f32.mrb[0].mxu0
    %543 = vdwg.mxu0
    %544 = vst.msk [vmem:[#allocation2] sm:$0xff] %vm311, %v494
    %545 = vst.msk [vmem:[#allocation2 + $0x8] sm:$0xff] %vm311, %v497
    %546 = vst.msk [vmem:[#allocation2 + $0x10] sm:$0xff] %vm311, %v538
    %547 = vst.msk [vmem:[#allocation2 + $0x18] sm:$0xff] %vm311, %v541
    %548 = vrot.lane.b32.xlu0 %v304, 120
    %v549 = vpop.permute.xlu0 %548
    %550 = vrot.lane.b32.xlu0 %v304, 88
    %v551 = vpop.permute.xlu0 %550
    %v553 = vsel %vm311, %v549, 0
    %v556 = vsel %vm311, %v551, 0
    %558 = vmatprep.subr.bf16.mxu0 0
    %559 = vmatpush1.bf16.xpose.msra.mxu0 %v556
    %560 = vmatprep.subr.bf16.mxu0 0
    %561 = vmatpush1.bf16.xpose.msra.mxu0 0
    %562 = vmatprep.subr.bf16.mxu0 0
    %563 = vmatpush1.bf16.xpose.msra.mxu0 0
    %564 = vmatprep.subr.bf16.mxu0 0
    %565 = vmatpush1.bf16.xpose.msra.mxu0 0
    %566 = vmatprep.subr.bf16.mxu0 0
    %567 = vmatpush1.bf16.xpose.msra.mxu0 0
    %568 = vmatprep.subr.bf16.mxu0 0
    %569 = vmatpush1.bf16.xpose.msra.mxu0 0
    %570 = vmatprep.subr.bf16.mxu0 0
    %571 = vmatpush1.bf16.xpose.msra.mxu0 0
    %572 = vmatprep.subr.bf16.mxu0 0
    %573 = vmatpush1.bf16.xpose.msra.mxu0 0
    %574 = vmatprep.subr.bf16.mxu0 0
    %575 = vmatpush1.bf16.xpose.msra.mxu0 0
    %576 = vmatprep.subr.bf16.mxu0 0
    %577 = vmatpush1.bf16.xpose.msra.mxu0 0
    %578 = vmatprep.subr.bf16.mxu0 0
    %579 = vmatpush1.bf16.xpose.msra.mxu0 0
    %580 = vmatprep.subr.bf16.mxu0 0
    %581 = vmatpush1.bf16.xpose.msra.mxu0 0
    %582 = vmatprep.subr.bf16.mxu0 0
    %583 = vmatpush1.bf16.xpose.msra.mxu0 0
    %584 = vmatprep.subr.bf16.mxu0 0
    %585 = vmatpush1.bf16.xpose.msra.mxu0 0
    %586 = vmatprep.subr.bf16.mxu0 0
    %587 = vmatpush1.bf16.xpose.msra.mxu0 0
    %588 = vmatprep.subr.bf16.mxu0 0
    %589 = vmatpush1.bf16.xpose.msra.mxu0 0
    %590 = vmatprep.mubr.bf16.mxu0 0
    %591 = vmatmul.mubr.bf16.gmra.mrb[0].mxu0 %v553
    %v592 = vpop.f32.mrb[0].mxu0
    %v593 = vadd.f32 0.0, %v592
    %v594 = vpop.f32.mrb[0].mxu0
    %v595 = vpop.f32.mrb[0].mxu0
    %v596 = vadd.f32 0.0, %v595
    %v597 = vpop.f32.mrb[0].mxu0
    %598 = vdwg.mxu0
    %599 = vrot.lane.b32.xlu0 %v305, 120
    %v600 = vpop.permute.xlu0 %599
    %601 = vrot.lane.b32.xlu0 %v305, 88
    %v602 = vpop.permute.xlu0 %601
    %v604 = vsel %vm311, %v600, 0
    %v607 = vsel %vm311, %v602, 0
    %609 = vmatprep.subr.bf16.mxu0 0
    %610 = vmatpush1.bf16.xpose.msra.mxu0 %v607
    %611 = vmatprep.subr.bf16.mxu0 0
    %612 = vmatpush1.bf16.xpose.msra.mxu0 0
    %613 = vmatprep.subr.bf16.mxu0 0
    %614 = vmatpush1.bf16.xpose.msra.mxu0 0
    %615 = vmatprep.subr.bf16.mxu0 0
    %616 = vmatpush1.bf16.xpose.msra.mxu0 0
    %617 = vmatprep.subr.bf16.mxu0 0
    %618 = vmatpush1.bf16.xpose.msra.mxu0 0
    %619 = vmatprep.subr.bf16.mxu0 0
    %620 = vmatpush1.bf16.xpose.msra.mxu0 0
    %621 = vmatprep.subr.bf16.mxu0 0
    %622 = vmatpush1.bf16.xpose.msra.mxu0 0
    %623 = vmatprep.subr.bf16.mxu0 0
    %624 = vmatpush1.bf16.xpose.msra.mxu0 0
    %625 = vmatprep.subr.bf16.mxu0 0
    %626 = vmatpush1.bf16.xpose.msra.mxu0 0
    %627 = vmatprep.subr.bf16.mxu0 0
    %628 = vmatpush1.bf16.xpose.msra.mxu0 0
    %629 = vmatprep.subr.bf16.mxu0 0
    %630 = vmatpush1.bf16.xpose.msra.mxu0 0
    %631 = vmatprep.subr.bf16.mxu0 0
    %632 = vmatpush1.bf16.xpose.msra.mxu0 0
    %633 = vmatprep.subr.bf16.mxu0 0
    %634 = vmatpush1.bf16.xpose.msra.mxu0 0
    %635 = vmatprep.subr.bf16.mxu0 0
    %636 = vmatpush1.bf16.xpose.msra.mxu0 0
    %637 = vmatprep.subr.bf16.mxu0 0
    %638 = vmatpush1.bf16.xpose.msra.mxu0 0
    %639 = vmatprep.subr.bf16.mxu0 0
    %640 = vmatpush1.bf16.xpose.msra.mxu0 0
    %641 = vmatprep.mubr.bf16.mxu0 0
    %642 = vmatmul.mubr.bf16.gmra.mrb[0].mxu0 %v604
    %v643 = vpop.f32.mrb[0].mxu0
    %v644 = vadd.f32 0.0, %v643
    %v645 = vpop.f32.mrb[0].mxu0
    %v646 = vpop.f32.mrb[0].mxu0
    %v647 = vadd.f32 0.0, %v646
    %v648 = vpop.f32.mrb[0].mxu0
    %649 = vdwg.mxu0
    %v650 = vsel %vm409, %v593, -inf
    %651 = vmax.xlane.f32.xlu0 %v650
    %v652 = vpop.xlane.xlu0 %651
    %v653 = vsel %vm409, %v596, -inf
    %654 = vmax.xlane.f32.xlu0 %v653
    %v655 = vpop.xlane.xlu0 %654
    %v656 = vsel %vm409, %v644, -inf
    %657 = vmax.xlane.f32.xlu0 %v656
    %v658 = vpop.xlane.xlu0 %657
    %v659 = vsel %vm409, %v647, -inf
    %660 = vmax.xlane.f32.xlu0 %v659
    %v661 = vpop.xlane.xlu0 %660
    %v662 = vsub.f32 %v593, %v652
    %v663 = vsub.f32 %v596, %v655
    %v664 = vsub.f32 %v644, %v658
    %v665 = vsub.f32 %v647, %v661
    %v666 = vmul.f32 %v662, 1.442695
    %v667 = vpow.pop %v666
    %v668 = vmul.f32 %v663, 1.442695
    %v669 = vpow.pop %v668
    %v670 = vmul.f32 %v664, 1.442695
    %v671 = vpow.pop %v670
    %v672 = vmul.f32 %v665, 1.442695
    %v673 = vpow.pop %v672
    %v674 = vsel %vm409, %v667, 0.0
    %675 = vadd.xlane.f32.xlu0 %v674
    %v676 = vpop.xlane.xlu0 %675
    %v677 = vsel %vm409, %v669, 0.0
    %678 = vadd.xlane.f32.xlu0 %v677
    %v679 = vpop.xlane.xlu0 %678
    %v680 = vsel %vm409, %v671, 0.0
    %681 = vadd.xlane.f32.xlu0 %v680
    %v682 = vpop.xlane.xlu0 %681
    %v683 = vsel %vm409, %v673, 0.0
    %684 = vadd.xlane.f32.xlu0 %v683
    %v685 = vpop.xlane.xlu0 %684
    %v686 = vrcp.pop %v676
    %v687 = vrcp.pop %v679
    %v688 = vrcp.pop %v682
    %v689 = vrcp.pop %v685
    %v690 = vmul.f32 %v667, %v686
    %v691 = vmul.f32 %v669, %v687
    %v692 = vmul.f32 %v671, %v688
    %v693 = vmul.f32 %v673, %v689
    %v694 = vpack.c.bf16 %v691, %v690
    %v695 = vpack.c.bf16 %v693, %v692
    %697 = vrot.lane.b32.xlu0 %v306, 120
    %v698 = vpop.permute.xlu0 %697
    %v701 = vsel %vm409, %v694, 0
    %703 = vmatprep.subr.bf16.mxu0 0
    %704 = vmatpush1.bf16.msra.mxu0 %v698
    %705 = vmatprep.subr.bf16.mxu0 0
    %706 = vmatpush1.bf16.msra.mxu0 0
    %707 = vmatprep.subr.bf16.mxu0 0
    %708 = vmatpush1.bf16.msra.mxu0 0
    %709 = vmatprep.subr.bf16.mxu0 0
    %710 = vmatpush1.bf16.msra.mxu0 0
    %711 = vmatprep.subr.bf16.mxu0 0
    %712 = vmatpush1.bf16.msra.mxu0 0
    %713 = vmatprep.subr.bf16.mxu0 0
    %714 = vmatpush1.bf16.msra.mxu0 0
    %715 = vmatprep.subr.bf16.mxu0 0
    %716 = vmatpush1.bf16.msra.mxu0 0
    %717 = vmatprep.subr.bf16.mxu0 0
    %718 = vmatpush1.bf16.msra.mxu0 0
    %719 = vmatprep.subr.bf16.mxu0 0
    %720 = vmatpush1.bf16.msra.mxu0 0
    %721 = vmatprep.subr.bf16.mxu0 0
    %722 = vmatpush1.bf16.msra.mxu0 0
    %723 = vmatprep.subr.bf16.mxu0 0
    %724 = vmatpush1.bf16.msra.mxu0 0
    %725 = vmatprep.subr.bf16.mxu0 0
    %726 = vmatpush1.bf16.msra.mxu0 0
    %727 = vmatprep.subr.bf16.mxu0 0
    %728 = vmatpush1.bf16.msra.mxu0 0
    %729 = vmatprep.subr.bf16.mxu0 0
    %730 = vmatpush1.bf16.msra.mxu0 0
    %731 = vmatprep.subr.bf16.mxu0 0
    %732 = vmatpush1.bf16.msra.mxu0 0
    %733 = vmatprep.subr.bf16.mxu0 0
    %734 = vmatpush1.bf16.msra.mxu0 0
    %735 = vmatprep.mubr.bf16.mxu0 0
    %736 = vmatmul.mubr.bf16.gmra.mrb[0].mxu0 %v701
    %v737 = vpop.f32.mrb[0].mxu0
    %v738 = vadd.f32 0.0, %v737
    %v739 = vpop.f32.mrb[0].mxu0
    %v740 = vpop.f32.mrb[0].mxu0
    %v741 = vadd.f32 0.0, %v740
    %v742 = vpop.f32.mrb[0].mxu0
    %743 = vdwg.mxu0
    %745 = vrot.lane.b32.xlu0 %v307, 120
    %v746 = vpop.permute.xlu0 %745
    %v749 = vsel %vm409, %v695, 0
    %751 = vmatprep.subr.bf16.mxu0 0
    %752 = vmatpush1.bf16.msra.mxu0 %v746
    %753 = vmatprep.subr.bf16.mxu0 0
    %754 = vmatpush1.bf16.msra.mxu0 0
    %755 = vmatprep.subr.bf16.mxu0 0
    %756 = vmatpush1.bf16.msra.mxu0 0
    %757 = vmatprep.subr.bf16.mxu0 0
    %758 = vmatpush1.bf16.msra.mxu0 0
    %759 = vmatprep.subr.bf16.mxu0 0
    %760 = vmatpush1.bf16.msra.mxu0 0
    %761 = vmatprep.subr.bf16.mxu0 0
    %762 = vmatpush1.bf16.msra.mxu0 0
    %763 = vmatprep.subr.bf16.mxu0 0
    %764 = vmatpush1.bf16.msra.mxu0 0
    %765 = vmatprep.subr.bf16.mxu0 0
    %766 = vmatpush1.bf16.msra.mxu0 0
    %767 = vmatprep.subr.bf16.mxu0 0
    %768 = vmatpush1.bf16.msra.mxu0 0
    %769 = vmatprep.subr.bf16.mxu0 0
    %770 = vmatpush1.bf16.msra.mxu0 0
    %771 = vmatprep.subr.bf16.mxu0 0
    %772 = vmatpush1.bf16.msra.mxu0 0
    %773 = vmatprep.subr.bf16.mxu0 0
    %774 = vmatpush1.bf16.msra.mxu0 0
    %775 = vmatprep.subr.bf16.mxu0 0
    %776 = vmatpush1.bf16.msra.mxu0 0
    %777 = vmatprep.subr.bf16.mxu0 0
    %778 = vmatpush1.bf16.msra.mxu0 0
    %779 = vmatprep.subr.bf16.mxu0 0
    %780 = vmatpush1.bf16.msra.mxu0 0
    %781 = vmatprep.subr.bf16.mxu0 0
    %782 = vmatpush1.bf16.msra.mxu0 0
    %783 = vmatprep.mubr.bf16.mxu0 0
    %784 = vmatmul.mubr.bf16.gmra.mrb[0].mxu0 %v749
    %v785 = vpop.f32.mrb[0].mxu0
    %v786 = vadd.f32 0.0, %v785
    %v787 = vpop.f32.mrb[0].mxu0
    %v788 = vpop.f32.mrb[0].mxu0
    %v789 = vadd.f32 0.0, %v788
    %v790 = vpop.f32.mrb[0].mxu0
    %791 = vdwg.mxu0
    %796 = vrot.lane.b32.xlu0 %v738, 8
    %v797 = vpop.permute.xlu0 %796
    %798 = vrot.lane.b32.xlu0 %v741, 8
    %v799 = vpop.permute.xlu0 %798
    %800 = vrot.lane.b32.xlu0 %v786, 8
    %v801 = vpop.permute.xlu0 %800
    %802 = vrot.lane.b32.xlu0 %v789, 8
    %v803 = vpop.permute.xlu0 %802
    %vm808 = vcmask 130112
    %809 = vst.msk [vmem:[#allocation2] sm:$0xff] %vm808, %v797
    %810 = vst.msk [vmem:[#allocation2 + $0x8] sm:$0xff] %vm808, %v799
    %811 = vst.msk [vmem:[#allocation2 + $0x10] sm:$0xff] %vm808, %v801
    %812 = vst.msk [vmem:[#allocation2 + $0x18] sm:$0xff] %vm808, %v803
    %813 = vrot.lane.b32.xlu0 %v304, 112
    %v814 = vpop.permute.xlu0 %813
    %815 = vrot.lane.b32.xlu0 %v304, 80
    %v816 = vpop.permute.xlu0 %815
    %v818 = vsel %vm311, %v814, 0
    %v821 = vsel %vm311, %v816, 0
    %823 = vmatprep.subr.bf16.mxu0 0
    %824 = vmatpush1.bf16.xpose.msra.mxu0 %v821
    %825 = vmatprep.subr.bf16.mxu0 0
    %826 = vmatpush1.bf16.xpose.msra.mxu0 0
    %827 = vmatprep.subr.bf16.mxu0 0
    %828 = vmatpush1.bf16.xpose.msra.mxu0 0
    %829 = vmatprep.subr.bf16.mxu0 0
    %830 = vmatpush1.bf16.xpose.msra.mxu0 0
    %831 = vmatprep.subr.bf16.mxu0 0
    %832 = vmatpush1.bf16.xpose.msra.mxu0 0
    %833 = vmatprep.subr.bf16.mxu0 0
    %834 = vmatpush1.bf16.xpose.msra.mxu0 0
    %835 = vmatprep.subr.bf16.mxu0 0
    %836 = vmatpush1.bf16.xpose.msra.mxu0 0
    %837 = vmatprep.subr.bf16.mxu0 0
    %838 = vmatpush1.bf16.xpose.msra.mxu0 0
    %839 = vmatprep.subr.bf16.mxu0 0
    %840 = vmatpush1.bf16.xpose.msra.mxu0 0
    %841 = vmatprep.subr.bf16.mxu0 0
    %842 = vmatpush1.bf16.xpose.msra.mxu0 0
    %843 = vmatprep.subr.bf16.mxu0 0
    %844 = vmatpush1.bf16.xpose.msra.mxu0 0
    %845 = vmatprep.subr.bf16.mxu0 0
    %846 = vmatpush1.bf16.xpose.msra.mxu0 0
    %847 = vmatprep.subr.bf16.mxu0 0
    %848 = vmatpush1.bf16.xpose.msra.mxu0 0
    %849 = vmatprep.subr.bf16.mxu0 0
    %850 = vmatpush1.bf16.xpose.msra.mxu0 0
    %851 = vmatprep.subr.bf16.mxu0 0
    %852 = vmatpush1.bf16.xpose.msra.mxu0 0
    %853 = vmatprep.subr.bf16.mxu0 0
    %854 = vmatpush1.bf16.xpose.msra.mxu0 0
    %855 = vmatprep.mubr.bf16.mxu0 0
    %856 = vmatmul.mubr.bf16.gmra.mrb[0].mxu0 %v818
    %v857 = vpop.f32.mrb[0].mxu0
    %v858 = vadd.f32 0.0, %v857
    %v859 = vpop.f32.mrb[0].mxu0
    %v860 = vpop.f32.mrb[0].mxu0
    %v861 = vadd.f32 0.0, %v860
    %v862 = vpop.f32.mrb[0].mxu0
    %863 = vdwg.mxu0
    %864 = vrot.lane.b32.xlu0 %v305, 112
    %v865 = vpop.permute.xlu0 %864
    %866 = vrot.lane.b32.xlu0 %v305, 80
    %v867 = vpop.permute.xlu0 %866
    %v869 = vsel %vm311, %v865, 0
    %v872 = vsel %vm311, %v867, 0
    %874 = vmatprep.subr.bf16.mxu0 0
    %875 = vmatpush1.bf16.xpose.msra.mxu0 %v872
    %876 = vmatprep.subr.bf16.mxu0 0
    %877 = vmatpush1.bf16.xpose.msra.mxu0 0
    %878 = vmatprep.subr.bf16.mxu0 0
    %879 = vmatpush1.bf16.xpose.msra.mxu0 0
    %880 = vmatprep.subr.bf16.mxu0 0
    %881 = vmatpush1.bf16.xpose.msra.mxu0 0
    %882 = vmatprep.subr.bf16.mxu0 0
    %883 = vmatpush1.bf16.xpose.msra.mxu0 0
    %884 = vmatprep.subr.bf16.mxu0 0
    %885 = vmatpush1.bf16.xpose.msra.mxu0 0
    %886 = vmatprep.subr.bf16.mxu0 0
    %887 = vmatpush1.bf16.xpose.msra.mxu0 0
    %888 = vmatprep.subr.bf16.mxu0 0
    %889 = vmatpush1.bf16.xpose.msra.mxu0 0
    %890 = vmatprep.subr.bf16.mxu0 0
    %891 = vmatpush1.bf16.xpose.msra.mxu0 0
    %892 = vmatprep.subr.bf16.mxu0 0
    %893 = vmatpush1.bf16.xpose.msra.mxu0 0
    %894 = vmatprep.subr.bf16.mxu0 0
    %895 = vmatpush1.bf16.xpose.msra.mxu0 0
    %896 = vmatprep.subr.bf16.mxu0 0
    %897 = vmatpush1.bf16.xpose.msra.mxu0 0
    %898 = vmatprep.subr.bf16.mxu0 0
    %899 = vmatpush1.bf16.xpose.msra.mxu0 0
    %900 = vmatprep.subr.bf16.mxu0 0
    %901 = vmatpush1.bf16.xpose.msra.mxu0 0
    %902 = vmatprep.subr.bf16.mxu0 0
    %903 = vmatpush1.bf16.xpose.msra.mxu0 0
    %904 = vmatprep.subr.bf16.mxu0 0
    %905 = vmatpush1.bf16.xpose.msra.mxu0 0
    %906 = vmatprep.mubr.bf16.mxu0 0
    %907 = vmatmul.mubr.bf16.gmra.mrb[0].mxu0 %v869
    %v908 = vpop.f32.mrb[0].mxu0
    %v909 = vadd.f32 0.0, %v908
    %v910 = vpop.f32.mrb[0].mxu0
    %v911 = vpop.f32.mrb[0].mxu0
    %v912 = vadd.f32 0.0, %v911
    %v913 = vpop.f32.mrb[0].mxu0
    %914 = vdwg.mxu0
    %v915 = vsel %vm409, %v858, -inf
    %916 = vmax.xlane.f32.xlu0 %v915
    %v917 = vpop.xlane.xlu0 %916
    %v918 = vsel %vm409, %v861, -inf
    %919 = vmax.xlane.f32.xlu0 %v918
    %v920 = vpop.xlane.xlu0 %919
    %v921 = vsel %vm409, %v909, -inf
    %922 = vmax.xlane.f32.xlu0 %v921
    %v923 = vpop.xlane.xlu0 %922
    %v924 = vsel %vm409, %v912, -inf
    %925 = vmax.xlane.f32.xlu0 %v924
    %v926 = vpop.xlane.xlu0 %925
    %v927 = vsub.f32 %v858, %v917
    %v928 = vsub.f32 %v861, %v920
    %v929 = vsub.f32 %v909, %v923
    %v930 = vsub.f32 %v912, %v926
    %v931 = vmul.f32 %v927, 1.442695
    %v932 = vpow.pop %v931
    %v933 = vmul.f32 %v928, 1.442695
    %v934 = vpow.pop %v933
    %v935 = vmul.f32 %v929, 1.442695
    %v936 = vpow.pop %v935
    %v937 = vmul.f32 %v930, 1.442695
    %v938 = vpow.pop %v937
    %v939 = vsel %vm409, %v932, 0.0
    %940 = vadd.xlane.f32.xlu0 %v939
    %v941 = vpop.xlane.xlu0 %940
    %v942 = vsel %vm409, %v934, 0.0
    %943 = vadd.xlane.f32.xlu0 %v942
    %v944 = vpop.xlane.xlu0 %943
    %v945 = vsel %vm409, %v936, 0.0
    %946 = vadd.xlane.f32.xlu0 %v945
    %v947 = vpop.xlane.xlu0 %946
    %v948 = vsel %vm409, %v938, 0.0
    %949 = vadd.xlane.f32.xlu0 %v948
    %v950 = vpop.xlane.xlu0 %949
    %v951 = vrcp.pop %v941
    %v952 = vrcp.pop %v944
    %v953 = vrcp.pop %v947
    %v954 = vrcp.pop %v950
    %v955 = vmul.f32 %v932, %v951
    %v956 = vmul.f32 %v934, %v952
    %v957 = vmul.f32 %v936, %v953
    %v958 = vmul.f32 %v938, %v954
    %v959 = vpack.c.bf16 %v956, %v955
    %v960 = vpack.c.bf16 %v958, %v957
    %961 = vrot.lane.b32.xlu0 %v306, 112
    %v962 = vpop.permute.xlu0 %961
    %v965 = vsel %vm409, %v959, 0
    %967 = vmatprep.subr.bf16.mxu0 0
    %968 = vmatpush1.bf16.msra.mxu0 %v962
    %969 = vmatprep.subr.bf16.mxu0 0
    %970 = vmatpush1.bf16.msra.mxu0 0
    %971 = vmatprep.subr.bf16.mxu0 0
    %972 = vmatpush1.bf16.msra.mxu0 0
    %973 = vmatprep.subr.bf16.mxu0 0
    %974 = vmatpush1.bf16.msra.mxu0 0
    %975 = vmatprep.subr.bf16.mxu0 0
    %976 = vmatpush1.bf16.msra.mxu0 0
    %977 = vmatprep.subr.bf16.mxu0 0
    %978 = vmatpush1.bf16.msra.mxu0 0
    %979 = vmatprep.subr.bf16.mxu0 0
    %980 = vmatpush1.bf16.msra.mxu0 0
    %981 = vmatprep.subr.bf16.mxu0 0
    %982 = vmatpush1.bf16.msra.mxu0 0
    %983 = vmatprep.subr.bf16.mxu0 0
    %984 = vmatpush1.bf16.msra.mxu0 0
    %985 = vmatprep.subr.bf16.mxu0 0
    %986 = vmatpush1.bf16.msra.mxu0 0
    %987 = vmatprep.subr.bf16.mxu0 0
    %988 = vmatpush1.bf16.msra.mxu0 0
    %989 = vmatprep.subr.bf16.mxu0 0
    %990 = vmatpush1.bf16.msra.mxu0 0
    %991 = vmatprep.subr.bf16.mxu0 0
    %992 = vmatpush1.bf16.msra.mxu0 0
    %993 = vmatprep.subr.bf16.mxu0 0
    %994 = vmatpush1.bf16.msra.mxu0 0
    %995 = vmatprep.subr.bf16.mxu0 0
    %996 = vmatpush1.bf16.msra.mxu0 0
    %997 = vmatprep.subr.bf16.mxu0 0
    %998 = vmatpush1.bf16.msra.mxu0 0
    %999 = vmatprep.mubr.bf16.mxu0 0
    %1000 = vmatmul.mubr.bf16.gmra.mrb[0].mxu0 %v965
    %v1001 = vpop.f32.mrb[0].mxu0
    %v1002 = vadd.f32 0.0, %v1001
    %v1003 = vpop.f32.mrb[0].mxu0
    %v1004 = vpop.f32.mrb[0].mxu0
    %v1005 = vadd.f32 0.0, %v1004
    %v1006 = vpop.f32.mrb[0].mxu0
    %1007 = vdwg.mxu0
    %1008 = vrot.lane.b32.xlu0 %v307, 112
    %v1009 = vpop.permute.xlu0 %1008
    %v1012 = vsel %vm409, %v960, 0
    %1014 = vmatprep.subr.bf16.mxu0 0
    %1015 = vmatpush1.bf16.msra.mxu0 %v1009
    %1016 = vmatprep.subr.bf16.mxu0 0
    %1017 = vmatpush1.bf16.msra.mxu0 0
    %1018 = vmatprep.subr.bf16.mxu0 0
    %1019 = vmatpush1.bf16.msra.mxu0 0
    %1020 = vmatprep.subr.bf16.mxu0 0
    %1021 = vmatpush1.bf16.msra.mxu0 0
    %1022 = vmatprep.subr.bf16.mxu0 0
    %1023 = vmatpush1.bf16.msra.mxu0 0
    %1024 = vmatprep.subr.bf16.mxu0 0
    %1025 = vmatpush1.bf16.msra.mxu0 0
    %1026 = vmatprep.subr.bf16.mxu0 0
    %1027 = vmatpush1.bf16.msra.mxu0 0
    %1028 = vmatprep.subr.bf16.mxu0 0
    %1029 = vmatpush1.bf16.msra.mxu0 0
    %1030 = vmatprep.subr.bf16.mxu0 0
    %1031 = vmatpush1.bf16.msra.mxu0 0
    %1032 = vmatprep.subr.bf16.mxu0 0
    %1033 = vmatpush1.bf16.msra.mxu0 0
    %1034 = vmatprep.subr.bf16.mxu0 0
    %1035 = vmatpush1.bf16.msra.mxu0 0
    %1036 = vmatprep.subr.bf16.mxu0 0
    %1037 = vmatpush1.bf16.msra.mxu0 0
    %1038 = vmatprep.subr.bf16.mxu0 0
    %1039 = vmatpush1.bf16.msra.mxu0 0
    %1040 = vmatprep.subr.bf16.mxu0 0
    %1041 = vmatpush1.bf16.msra.mxu0 0
    %1042 = vmatprep.subr.bf16.mxu0 0
    %1043 = vmatpush1.bf16.msra.mxu0 0
    %1044 = vmatprep.subr.bf16.mxu0 0
    %1045 = vmatpush1.bf16.msra.mxu0 0
    %1046 = vmatprep.mubr.bf16.mxu0 0
    %1047 = vmatmul.mubr.bf16.gmra.mrb[0].mxu0 %v1012
    %v1048 = vpop.f32.mrb[0].mxu0
    %v1049 = vadd.f32 0.0, %v1048
    %v1050 = vpop.f32.mrb[0].mxu0
    %v1051 = vpop.f32.mrb[0].mxu0
    %v1052 = vadd.f32 0.0, %v1051
    %v1053 = vpop.f32.mrb[0].mxu0
    %1054 = vdwg.mxu0
    %1059 = vrot.lane.b32.xlu0 %v1002, 16
    %v1060 = vpop.permute.xlu0 %1059
    %1061 = vrot.lane.b32.xlu0 %v1005, 16
    %v1062 = vpop.permute.xlu0 %1061
    %1063 = vrot.lane.b32.xlu0 %v1049, 16
    %v1064 = vpop.permute.xlu0 %1063
    %1065 = vrot.lane.b32.xlu0 %v1052, 16
    %v1066 = vpop.permute.xlu0 %1065
    %vm1071 = vcmask 195712
    %1072 = vst.msk [vmem:[#allocation2] sm:$0xff] %vm1071, %v1060
    %1073 = vst.msk [vmem:[#allocation2 + $0x8] sm:$0xff] %vm1071, %v1062
    %1074 = vst.msk [vmem:[#allocation2 + $0x10] sm:$0xff] %vm1071, %v1064
    %1075 = vst.msk [vmem:[#allocation2 + $0x18] sm:$0xff] %vm1071, %v1066
    %1076 = vrot.lane.b32.xlu0 %v304, 104
    %v1077 = vpop.permute.xlu0 %1076
    %1078 = vrot.lane.b32.xlu0 %v304, 72
    %v1079 = vpop.permute.xlu0 %1078
    %v1081 = vsel %vm311, %v1077, 0
    %v1084 = vsel %vm311, %v1079, 0
    %1086 = vmatprep.subr.bf16.mxu0 0
    %1087 = vmatpush1.bf16.xpose.msra.mxu0 %v1084
    %1088 = vmatprep.subr.bf16.mxu0 0
    %1089 = vmatpush1.bf16.xpose.msra.mxu0 0
    %1090 = vmatprep.subr.bf16.mxu0 0
    %1091 = vmatpush1.bf16.xpose.msra.mxu0 0
    %1092 = vmatprep.subr.bf16.mxu0 0
    %1093 = vmatpush1.bf16.xpose.msra.mxu0 0
    %1094 = vmatprep.subr.bf16.mxu0 0
    %1095 = vmatpush1.bf16.xpose.msra.mxu0 0
    %1096 = vmatprep.subr.bf16.mxu0 0
    %1097 = vmatpush1.bf16.xpose.msra.mxu0 0
    %1098 = vmatprep.subr.bf16.mxu0 0
    %1099 = vmatpush1.bf16.xpose.msra.mxu0 0
    %1100 = vmatprep.subr.bf16.mxu0 0
    %1101 = vmatpush1.bf16.xpose.msra.mxu0 0
    %1102 = vmatprep.subr.bf16.mxu0 0
    %1103 = vmatpush1.bf16.xpose.msra.mxu0 0
    %1104 = vmatprep.subr.bf16.mxu0 0
    %1105 = vmatpush1.bf16.xpose.msra.mxu0 0
    %1106 = vmatprep.subr.bf16.mxu0 0
    %1107 = vmatpush1.bf16.xpose.msra.mxu0 0
    %1108 = vmatprep.subr.bf16.mxu0 0
    %1109 = vmatpush1.bf16.xpose.msra.mxu0 0
    %1110 = vmatprep.subr.bf16.mxu0 0
    %1111 = vmatpush1.bf16.xpose.msra.mxu0 0
    %1112 = vmatprep.subr.bf16.mxu0 0
    %1113 = vmatpush1.bf16.xpose.msra.mxu0 0
    %1114 = vmatprep.subr.bf16.mxu0 0
    %1115 = vmatpush1.bf16.xpose.msra.mxu0 0
    %1116 = vmatprep.subr.bf16.mxu0 0
    %1117 = vmatpush1.bf16.xpose.msra.mxu0 0
    %1118 = vmatprep.mubr.bf16.mxu0 0
    %1119 = vmatmul.mubr.bf16.gmra.mrb[0].mxu0 %v1081
    %v1120 = vpop.f32.mrb[0].mxu0
    %v1121 = vadd.f32 0.0, %v1120
    %v1122 = vpop.f32.mrb[0].mxu0
    %v1123 = vpop.f32.mrb[0].mxu0
    %v1124 = vadd.f32 0.0, %v1123
    %v1125 = vpop.f32.mrb[0].mxu0
    %1126 = vdwg.mxu0
    %1127 = vrot.lane.b32.xlu0 %v305, 104
    %v1128 = vpop.permute.xlu0 %1127
    %1129 = vrot.lane.b32.xlu0 %v305, 72
    %v1130 = vpop.permute.xlu0 %1129
    %v1132 = vsel %vm311, %v1128, 0
    %v1135 = vsel %vm311, %v1130, 0
    %1137 = vmatprep.subr.bf16.mxu0 0
    %1138 = vmatpush1.bf16.xpose.msra.mxu0 %v1135
    %1139 = vmatprep.subr.bf16.mxu0 0
    %1140 = vmatpush1.bf16.xpose.msra.mxu0 0
    %1141 = vmatprep.subr.bf16.mxu0 0
    %1142 = vmatpush1.bf16.xpose.msra.mxu0 0
    %1143 = vmatprep.subr.bf16.mxu0 0
    %1144 = vmatpush1.bf16.xpose.msra.mxu0 0
    %1145 = vmatprep.subr.bf16.mxu0 0
    %1146 = vmatpush1.bf16.xpose.msra.mxu0 0
    %1147 = vmatprep.subr.bf16.mxu0 0
    %1148 = vmatpush1.bf16.xpose.msra.mxu0 0
    %1149 = vmatprep.subr.bf16.mxu0 0
    %1150 = vmatpush1.bf16.xpose.msra.mxu0 0
    %1151 = vmatprep.subr.bf16.mxu0 0
    %1152 = vmatpush1.bf16.xpose.msra.mxu0 0
    %1153 = vmatprep.subr.bf16.mxu0 0
    %1154 = vmatpush1.bf16.xpose.msra.mxu0 0
    %1155 = vmatprep.subr.bf16.mxu0 0
    %1156 = vmatpush1.bf16.xpose.msra.mxu0 0
    %1157 = vmatprep.subr.bf16.mxu0 0
    %1158 = vmatpush1.bf16.xpose.msra.mxu0 0
    %1159 = vmatprep.subr.bf16.mxu0 0
    %1160 = vmatpush1.bf16.xpose.msra.mxu0 0
    %1161 = vmatprep.subr.bf16.mxu0 0
    %1162 = vmatpush1.bf16.xpose.msra.mxu0 0
    %1163 = vmatprep.subr.bf16.mxu0 0
    %1164 = vmatpush1.bf16.xpose.msra.mxu0 0
    %1165 = vmatprep.subr.bf16.mxu0 0
    %1166 = vmatpush1.bf16.xpose.msra.mxu0 0
    %1167 = vmatprep.subr.bf16.mxu0 0
    %1168 = vmatpush1.bf16.xpose.msra.mxu0 0
    %1169 = vmatprep.mubr.bf16.mxu0 0
    %1170 = vmatmul.mubr.bf16.gmra.mrb[0].mxu0 %v1132
    %v1171 = vpop.f32.mrb[0].mxu0
    %v1172 = vadd.f32 0.0, %v1171
    %v1173 = vpop.f32.mrb[0].mxu0
    %v1174 = vpop.f32.mrb[0].mxu0
    %v1175 = vadd.f32 0.0, %v1174
    %v1176 = vpop.f32.mrb[0].mxu0
    %1177 = vdwg.mxu0
    %v1178 = vsel %vm409, %v1121, -inf
    %1179 = vmax.xlane.f32.xlu0 %v1178
    %v1180 = vpop.xlane.xlu0 %1179
    %v1181 = vsel %vm409, %v1124, -inf
    %1182 = vmax.xlane.f32.xlu0 %v1181
    %v1183 = vpop.xlane.xlu0 %1182
    %v1184 = vsel %vm409, %v1172, -inf
    %1185 = vmax.xlane.f32.xlu0 %v1184
    %v1186 = vpop.xlane.xlu0 %1185
    %v1187 = vsel %vm409, %v1175, -inf
    %1188 = vmax.xlane.f32.xlu0 %v1187
    %v1189 = vpop.xlane.xlu0 %1188
    %v1190 = vsub.f32 %v1121, %v1180
    %v1191 = vsub.f32 %v1124, %v1183
    %v1192 = vsub.f32 %v1172, %v1186
    %v1193 = vsub.f32 %v1175, %v1189
    %v1194 = vmul.f32 %v1190, 1.442695
    %v1195 = vpow.pop %v1194
    %v1196 = vmul.f32 %v1191, 1.442695
    %v1197 = vpow.pop %v1196
    %v1198 = vmul.f32 %v1192, 1.442695
    %v1199 = vpow.pop %v1198
    %v1200 = vmul.f32 %v1193, 1.442695
    %v1201 = vpow.pop %v1200
    %v1202 = vsel %vm409, %v1195, 0.0
    %1203 = vadd.xlane.f32.xlu0 %v1202
    %v1204 = vpop.xlane.xlu0 %1203
    %v1205 = vsel %vm409, %v1197, 0.0
    %1206 = vadd.xlane.f32.xlu0 %v1205
    %v1207 = vpop.xlane.xlu0 %1206
    %v1208 = vsel %vm409, %v1199, 0.0
    %1209 = vadd.xlane.f32.xlu0 %v1208
    %v1210 = vpop.xlane.xlu0 %1209
    %v1211 = vsel %vm409, %v1201, 0.0
    %1212 = vadd.xlane.f32.xlu0 %v1211
    %v1213 = vpop.xlane.xlu0 %1212
    %v1214 = vrcp.pop %v1204
    %v1215 = vrcp.pop %v1207
    %v1216 = vrcp.pop %v1210
    %v1217 = vrcp.pop %v1213
    %v1218 = vmul.f32 %v1195, %v1214
    %v1219 = vmul.f32 %v1197, %v1215
    %v1220 = vmul.f32 %v1199, %v1216
    %v1221 = vmul.f32 %v1201, %v1217
    %v1222 = vpack.c.bf16 %v1219, %v1218
    %v1223 = vpack.c.bf16 %v1221, %v1220
    %1224 = vrot.lane.b32.xlu0 %v306, 104
    %v1225 = vpop.permute.xlu0 %1224
    %v1228 = vsel %vm409, %v1222, 0
    %1230 = vmatprep.subr.bf16.mxu0 0
    %1231 = vmatpush1.bf16.msra.mxu0 %v1225
    %1232 = vmatprep.subr.bf16.mxu0 0
    %1233 = vmatpush1.bf16.msra.mxu0 0
    %1234 = vmatprep.subr.bf16.mxu0 0
    %1235 = vmatpush1.bf16.msra.mxu0 0
    %1236 = vmatprep.subr.bf16.mxu0 0
    %1237 = vmatpush1.bf16.msra.mxu0 0
    %1238 = vmatprep.subr.bf16.mxu0 0
    %1239 = vmatpush1.bf16.msra.mxu0 0
    %1240 = vmatprep.subr.bf16.mxu0 0
    %1241 = vmatpush1.bf16.msra.mxu0 0
    %1242 = vmatprep.subr.bf16.mxu0 0
    %1243 = vmatpush1.bf16.msra.mxu0 0
    %1244 = vmatprep.subr.bf16.mxu0 0
    %1245 = vmatpush1.bf16.msra.mxu0 0
    %1246 = vmatprep.subr.bf16.mxu0 0
    %1247 = vmatpush1.bf16.msra.mxu0 0
    %1248 = vmatprep.subr.bf16.mxu0 0
    %1249 = vmatpush1.bf16.msra.mxu0 0
    %1250 = vmatprep.subr.bf16.mxu0 0
    %1251 = vmatpush1.bf16.msra.mxu0 0
    %1252 = vmatprep.subr.bf16.mxu0 0
    %1253 = vmatpush1.bf16.msra.mxu0 0
    %1254 = vmatprep.subr.bf16.mxu0 0
    %1255 = vmatpush1.bf16.msra.mxu0 0
    %1256 = vmatprep.subr.bf16.mxu0 0
    %1257 = vmatpush1.bf16.msra.mxu0 0
    %1258 = vmatprep.subr.bf16.mxu0 0
    %1259 = vmatpush1.bf16.msra.mxu0 0
    %1260 = vmatprep.subr.bf16.mxu0 0
    %1261 = vmatpush1.bf16.msra.mxu0 0
    %1262 = vmatprep.mubr.bf16.mxu0 0
    %1263 = vmatmul.mubr.bf16.gmra.mrb[0].mxu0 %v1228
    %v1264 = vpop.f32.mrb[0].mxu0
    %v1265 = vadd.f32 0.0, %v1264
    %v1266 = vpop.f32.mrb[0].mxu0
    %v1267 = vpop.f32.mrb[0].mxu0
    %v1268 = vadd.f32 0.0, %v1267
    %v1269 = vpop.f32.mrb[0].mxu0
    %1270 = vdwg.mxu0
    %1271 = vrot.lane.b32.xlu0 %v307, 104
    %v1272 = vpop.permute.xlu0 %1271
    %v1275 = vsel %vm409, %v1223, 0
    %1277 = vmatprep.subr.bf16.mxu0 0
    %1278 = vmatpush1.bf16.msra.mxu0 %v1272
    %1279 = vmatprep.subr.bf16.mxu0 0
    %1280 = vmatpush1.bf16.msra.mxu0 0
    %1281 = vmatprep.subr.bf16.mxu0 0
    %1282 = vmatpush1.bf16.msra.mxu0 0
    %1283 = vmatprep.subr.bf16.mxu0 0
    %1284 = vmatpush1.bf16.msra.mxu0 0
    %1285 = vmatprep.subr.bf16.mxu0 0
    %1286 = vmatpush1.bf16.msra.mxu0 0
    %1287 = vmatprep.subr.bf16.mxu0 0
    %1288 = vmatpush1.bf16.msra.mxu0 0
    %1289 = vmatprep.subr.bf16.mxu0 0
    %1290 = vmatpush1.bf16.msra.mxu0 0
    %1291 = vmatprep.subr.bf16.mxu0 0
    %1292 = vmatpush1.bf16.msra.mxu0 0
    %1293 = vmatprep.subr.bf16.mxu0 0
    %1294 = vmatpush1.bf16.msra.mxu0 0
    %1295 = vmatprep.subr.bf16.mxu0 0
    %1296 = vmatpush1.bf16.msra.mxu0 0
    %1297 = vmatprep.subr.bf16.mxu0 0
    %1298 = vmatpush1.bf16.msra.mxu0 0
    %1299 = vmatprep.subr.bf16.mxu0 0
    %1300 = vmatpush1.bf16.msra.mxu0 0
    %1301 = vmatprep.subr.bf16.mxu0 0
    %1302 = vmatpush1.bf16.msra.mxu0 0
    %1303 = vmatprep.subr.bf16.mxu0 0
    %1304 = vmatpush1.bf16.msra.mxu0 0
    %1305 = vmatprep.subr.bf16.mxu0 0
    %1306 = vmatpush1.bf16.msra.mxu0 0
    %1307 = vmatprep.subr.bf16.mxu0 0
    %1308 = vmatpush1.bf16.msra.mxu0 0
    %1309 = vmatprep.mubr.bf16.mxu0 0
    %1310 = vmatmul.mubr.bf16.gmra.mrb[0].mxu0 %v1275
    %v1311 = vpop.f32.mrb[0].mxu0
    %v1312 = vadd.f32 0.0, %v1311
    %v1313 = vpop.f32.mrb[0].mxu0
    %v1314 = vpop.f32.mrb[0].mxu0
    %v1315 = vadd.f32 0.0, %v1314
    %v1316 = vpop.f32.mrb[0].mxu0
    %1317 = vdwg.mxu0
    %1322 = vrot.lane.b32.xlu0 %v1265, 24
    %v1323 = vpop.permute.xlu0 %1322
    %1324 = vrot.lane.b32.xlu0 %v1268, 24
    %v1325 = vpop.permute.xlu0 %1324
    %1326 = vrot.lane.b32.xlu0 %v1312, 24
    %v1327 = vpop.permute.xlu0 %1326
    %1328 = vrot.lane.b32.xlu0 %v1315, 24
    %v1329 = vpop.permute.xlu0 %1328
    %vm1334 = vcmask 261312
    %1335 = vst.msk [vmem:[#allocation2] sm:$0xff] %vm1334, %v1323
    %1336 = vst.msk [vmem:[#allocation2 + $0x8] sm:$0xff] %vm1334, %v1325
    %1337 = vst.msk [vmem:[#allocation2 + $0x10] sm:$0xff] %vm1334, %v1327
    %1338 = vst.msk [vmem:[#allocation2 + $0x18] sm:$0xff] %vm1334, %v1329
    %v1339 = vld [vmem:[#allocation2] sm:$0xff]
    %v1340 = vld [vmem:[#allocation2 + $0x8] sm:$0xff]
    %v1341 = vld [vmem:[#allocation2 + $0x10] sm:$0xff]
    %v1342 = vld [vmem:[#allocation2 + $0x18] sm:$0xff]
    %v1343 = vpack.c.bf16 %v1340, %v1339
    %v1344 = vpack.c.bf16 %v1342, %v1341
    %v1345 = vld [vmem:[#allocation8] sm:$0xf]
    %v1346 = vld [vmem:[#allocation8 + $0x4] sm:$0xf]
    %v1347 = vld [vmem:[#allocation8 + $0x8] sm:$0xf]
    %v1348 = vld [vmem:[#allocation8 + $0xc] sm:$0xf]
    %v1349 = vld [vmem:[#allocation9] sm:$0x1]
    %v1351 = vlaneseq
    %v1352 = vshrl.u32 %v1351, 7
    %v1353 = vsub.s32 0, %v1352
    %v1354 = vrot.slane %v1349, %v1353
    %v1360 = vunpack.c.l.b16 %v1345
    %v1361 = vunpack.c.l.b16 %v1346
    %v1362 = vunpack.c.l.b16 %v1347
    %v1363 = vunpack.c.l.b16 %v1348
    %v1364 = vpack.c.b16 %v1361, %v1360
    %v1365 = vpack.c.b16 %v1363, %v1362
    %v1369 = vsel %vm170, %v1343, 0
    %v1372 = vsel %vm170, %v1344, 0
    %1374 = vmatprep.subr.bf16.mxu0 0
    %1375 = vmatpush1.bf16.msra.mxu0 %v1364
    %1376 = vmatprep.subr.bf16.mxu0 0
    %1377 = vmatpush1.bf16.msra.mxu0 %v1365
    %1378 = vmatprep.subr.bf16.mxu0 0
    %1379 = vmatpush1.bf16.msra.mxu0 0
    %1380 = vmatprep.subr.bf16.mxu0 0
    %1381 = vmatpush1.bf16.msra.mxu0 0
    %1382 = vmatprep.subr.bf16.mxu0 0
    %1383 = vmatpush1.bf16.msra.mxu0 0
    %1384 = vmatprep.subr.bf16.mxu0 0
    %1385 = vmatpush1.bf16.msra.mxu0 0
    %1386 = vmatprep.subr.bf16.mxu0 0
    %1387 = vmatpush1.bf16.msra.mxu0 0
    %1388 = vmatprep.subr.bf16.mxu0 0
    %1389 = vmatpush1.bf16.msra.mxu0 0
    %1390 = vmatprep.subr.bf16.mxu0 0
    %1391 = vmatpush1.bf16.msra.mxu0 0
    %1392 = vmatprep.subr.bf16.mxu0 0
    %1393 = vmatpush1.bf16.msra.mxu0 0
    %1394 = vmatprep.subr.bf16.mxu0 0
    %1395 = vmatpush1.bf16.msra.mxu0 0
    %1396 = vmatprep.subr.bf16.mxu0 0
    %1397 = vmatpush1.bf16.msra.mxu0 0
    %1398 = vmatprep.subr.bf16.mxu0 0
    %1399 = vmatpush1.bf16.msra.mxu0 0
    %1400 = vmatprep.subr.bf16.mxu0 0
    %1401 = vmatpush1.bf16.msra.mxu0 0
    %1402 = vmatprep.subr.bf16.mxu0 0
    %1403 = vmatpush1.bf16.msra.mxu0 0
    %1404 = vmatprep.subr.bf16.mxu0 0
    %1405 = vmatpush1.bf16.msra.mxu0 0
    %1406 = vmatprep.mubr.bf16.mxu0 0
    %1407 = vmatmul.mubr.bf16.gmra.mrb[0].mxu0 %v1369
    %v1408 = vpop.f32.mrb[0].mxu0
    %v1409 = vadd.f32 %v1354, %v1408
    %v1410 = vpop.f32.mrb[0].mxu0
    %v1411 = vpop.f32.mrb[0].mxu0
    %v1412 = vadd.f32 %v1354, %v1411
    %v1413 = vpop.f32.mrb[0].mxu0
    %1414 = vmatprep.mubr.bf16.mxu0 0
    %1415 = vmatmul.mubr.bf16.gmra.mrb[0].mxu0 %v1372
    %v1416 = vpop.f32.mrb[0].mxu0
    %v1417 = vadd.f32 %v1354, %v1416
    %v1418 = vpop.f32.mrb[0].mxu0
    %v1419 = vpop.f32.mrb[0].mxu0
    %v1420 = vadd.f32 %v1354, %v1419
    %v1421 = vpop.f32.mrb[0].mxu0
    %1422 = vdwg.mxu0
    %v1423 = vadd.f32 %v131, %v1409
    %v1424 = vadd.f32 %v132, %v1412
    %v1425 = vadd.f32 %v133, %v1417
    %v1426 = vadd.f32 %v134, %v1420
    %v1427 = vld [vmem:[#allocation11] sm:$0x1]
    %v1428 = vld [vmem:[#allocation12] sm:$0x1]
    %v1429 = vsel %vm170, %v1423, 0.0
    %1430 = vadd.xlane.f32.xlu0 %v1429
    %v1431 = vpop.xlane.xlu0 %1430
    %v1432 = vsel %vm170, %v1424, 0.0
    %1433 = vadd.xlane.f32.xlu0 %v1432
    %v1434 = vpop.xlane.xlu0 %1433
    %v1435 = vsel %vm170, %v1425, 0.0
    %1436 = vadd.xlane.f32.xlu0 %v1435
    %v1437 = vpop.xlane.xlu0 %1436
    %v1438 = vsel %vm170, %v1426, 0.0
    %1439 = vadd.xlane.f32.xlu0 %v1438
    %v1440 = vpop.xlane.xlu0 %1439
    %v1441 = vrcp.pop 32.0
    %v1442 = vmul.f32 %v1431, %v1441
    %v1443 = vmul.f32 %v1434, %v1441
    %v1444 = vmul.f32 %v1437, %v1441
    %v1445 = vmul.f32 %v1440, %v1441
    %v1446 = vsub.f32 %v1423, %v1442
    %v1447 = vsub.f32 %v1424, %v1443
    %v1448 = vsub.f32 %v1425, %v1444
    %v1449 = vsub.f32 %v1426, %v1445
    %v1450 = vmul.f32 %v1446, %v1446
    %v1451 = vmul.f32 %v1447, %v1447
    %v1452 = vmul.f32 %v1448, %v1448
    %v1453 = vmul.f32 %v1449, %v1449
    %v1454 = vsel %vm170, %v1450, 0.0
    %1455 = vadd.xlane.f32.xlu0 %v1454
    %v1456 = vpop.xlane.xlu0 %1455
    %v1457 = vsel %vm170, %v1451, 0.0
    %1458 = vadd.xlane.f32.xlu0 %v1457
    %v1459 = vpop.xlane.xlu0 %1458
    %v1460 = vsel %vm170, %v1452, 0.0
    %1461 = vadd.xlane.f32.xlu0 %v1460
    %v1462 = vpop.xlane.xlu0 %1461
    %v1463 = vsel %vm170, %v1453, 0.0
    %1464 = vadd.xlane.f32.xlu0 %v1463
    %v1465 = vpop.xlane.xlu0 %1464
    %v1466 = vmul.f32 %v1456, %v1441
    %v1467 = vmul.f32 %v1459, %v1441
    %v1468 = vmul.f32 %v1462, %v1441
    %v1469 = vmul.f32 %v1465, %v1441
    %v1470 = vadd.f32 %v1466, 1e-05
    %v1471 = vadd.f32 %v1467, 1e-05
    %v1472 = vadd.f32 %v1468, 1e-05
    %v1473 = vadd.f32 %v1469, 1e-05
    %v1474 = vrsqrt.pop %v1470
    %v1475 = vrsqrt.pop %v1471
    %v1476 = vrsqrt.pop %v1472
    %v1477 = vrsqrt.pop %v1473
    %v1478 = vmul.f32 %v1446, %v1474
    %v1479 = vmul.f32 %v1447, %v1475
    %v1480 = vmul.f32 %v1448, %v1476
    %v1481 = vmul.f32 %v1449, %v1477
    %v1483 = vlaneseq
    %v1484 = vshrl.u32 %v1483, 7
    %v1485 = vsub.s32 0, %v1484
    %v1486 = vrot.slane %v1427, %v1485
    %v1488 = vmul.f32 %v1478, %v1486
    %v1489 = vmul.f32 %v1479, %v1486
    %v1490 = vmul.f32 %v1480, %v1486
    %v1491 = vmul.f32 %v1481, %v1486
    %v1493 = vlaneseq
    %v1494 = vshrl.u32 %v1493, 7
    %v1495 = vsub.s32 0, %v1494
    %v1496 = vrot.slane %v1428, %v1495
    %v1498 = vadd.f32 %v1488, %v1496
    %v1499 = vadd.f32 %v1489, %v1496
    %v1500 = vadd.f32 %v1490, %v1496
    %v1501 = vadd.f32 %v1491, %v1496
    %v1502 = vpack.c.bf16 %v1499, %v1498
    %v1503 = vpack.c.bf16 %v1501, %v1500
    %v1504 = vld [vmem:[%s11] sm:$0x1]
    %v1505 = vld [vmem:[%s10] sm:$0xf]
    %v1506 = vld [vmem:[%s10 + $0x4] sm:$0xf]
    %v1507 = vld [vmem:[%s10 + $0x8] sm:$0xf]
    %v1508 = vld [vmem:[%s10 + $0xc] sm:$0xf]
    %v1510 = vlaneseq
    %v1511 = vshrl.u32 %v1510, 7
    %v1512 = vsub.s32 0, %v1511
    %v1513 = vrot.slane %v1504, %v1512
    %v1519 = vunpack.c.l.b16 %v1505
    %v1520 = vunpack.c.l.b16 %v1506
    %v1521 = vunpack.c.l.b16 %v1507
    %v1522 = vunpack.c.l.b16 %v1508
    %v1523 = vpack.c.b16 %v1520, %v1519
    %v1524 = vpack.c.b16 %v1522, %v1521
    %v1528 = vsel %vm170, %v1502, 0
    %v1531 = vsel %vm170, %v1503, 0
    %1533 = vmatprep.subr.bf16.mxu0 0
    %1534 = vmatpush1.bf16.msra.mxu0 %v1523
    %1535 = vmatprep.subr.bf16.mxu0 0
    %1536 = vmatpush1.bf16.msra.mxu0 %v1524
    %1537 = vmatprep.subr.bf16.mxu0 0
    %1538 = vmatpush1.bf16.msra.mxu0 0
    %1539 = vmatprep.subr.bf16.mxu0 0
    %1540 = vmatpush1.bf16.msra.mxu0 0
    %1541 = vmatprep.subr.bf16.mxu0 0
    %1542 = vmatpush1.bf16.msra.mxu0 0
    %1543 = vmatprep.subr.bf16.mxu0 0
    %1544 = vmatpush1.bf16.msra.mxu0 0
    %1545 = vmatprep.subr.bf16.mxu0 0
    %1546 = vmatpush1.bf16.msra.mxu0 0
    %1547 = vmatprep.subr.bf16.mxu0 0
    %1548 = vmatpush1.bf16.msra.mxu0 0
    %1549 = vmatprep.subr.bf16.mxu0 0
    %1550 = vmatpush1.bf16.msra.mxu0 0
    %1551 = vmatprep.subr.bf16.mxu0 0
    %1552 = vmatpush1.bf16.msra.mxu0 0
    %1553 = vmatprep.subr.bf16.mxu0 0
    %1554 = vmatpush1.bf16.msra.mxu0 0
    %1555 = vmatprep.subr.bf16.mxu0 0
    %1556 = vmatpush1.bf16.msra.mxu0 0
    %1557 = vmatprep.subr.bf16.mxu0 0
    %1558 = vmatpush1.bf16.msra.mxu0 0
    %1559 = vmatprep.subr.bf16.mxu0 0
    %1560 = vmatpush1.bf16.msra.mxu0 0
    %1561 = vmatprep.subr.bf16.mxu0 0
    %1562 = vmatpush1.bf16.msra.mxu0 0
    %1563 = vmatprep.subr.bf16.mxu0 0
    %1564 = vmatpush1.bf16.msra.mxu0 0
    %1565 = vmatprep.mubr.bf16.mxu0 0
    %1566 = vmatmul.mubr.bf16.gmra.mrb[0].mxu0 %v1528
    %v1567 = vpop.f32.mrb[0].mxu0
    %v1568 = vadd.f32 %v1513, %v1567
    %v1569 = vpop.f32.mrb[0].mxu0
    %v1570 = vpop.f32.mrb[0].mxu0
    %v1571 = vadd.f32 %v1513, %v1570
    %v1572 = vpop.f32.mrb[0].mxu0
    %1573 = vmatprep.mubr.bf16.mxu0 0
    %1574 = vmatmul.mubr.bf16.gmra.mrb[0].mxu0 %v1531
    %v1575 = vpop.f32.mrb[0].mxu0
    %v1576 = vadd.f32 %v1513, %v1575
    %v1577 = vpop.f32.mrb[0].mxu0
    %v1578 = vpop.f32.mrb[0].mxu0
    %v1579 = vadd.f32 %v1513, %v1578
    %v1580 = vpop.f32.mrb[0].mxu0
    %1581 = vdwg.mxu0
    %v1582 = vmax.f32 %v1568, 0.0
    %v1583 = vmax.f32 %v1571, 0.0
    %v1584 = vmax.f32 %v1576, 0.0
    %v1585 = vmax.f32 %v1579, 0.0
    %v1586 = vpack.c.bf16 %v1583, %v1582
    %v1587 = vpack.c.bf16 %v1585, %v1584
    %v1588 = vld [vmem:[%s12] sm:$0xf]
    %v1589 = vld [vmem:[%s12 + $0x4] sm:$0xf]
    %v1590 = vld [vmem:[%s12 + $0x8] sm:$0xf]
    %v1591 = vld [vmem:[%s12 + $0xc] sm:$0xf]
    %v1592 = vld [vmem:[%s12 + $0x10] sm:$0xf]
    %v1593 = vld [vmem:[%s12 + $0x14] sm:$0xf]
    %v1594 = vld [vmem:[%s12 + $0x18] sm:$0xf]
    %v1595 = vld [vmem:[%s12 + $0x1c] sm:$0xf]
    %v1596 = vld [vmem:[%s13] sm:$0x1]
    %v1598 = vlaneseq
    %v1599 = vshrl.u32 %v1598, 7
    %v1600 = vsub.s32 0, %v1599
    %v1601 = vrot.slane %v1596, %v1600
    %v1611 = vunpack.c.l.b16 %v1588
    %v1612 = vunpack.c.l.b16 %v1589
    %v1613 = vunpack.c.l.b16 %v1590
    %v1614 = vunpack.c.l.b16 %v1591
    %v1615 = vunpack.c.l.b16 %v1592
    %v1616 = vunpack.c.l.b16 %v1593
    %v1617 = vunpack.c.l.b16 %v1594
    %v1618 = vunpack.c.l.b16 %v1595
    %v1619 = vpack.c.b16 %v1612, %v1611
    %v1620 = vpack.c.b16 %v1614, %v1613
    %v1621 = vpack.c.b16 %v1616, %v1615
    %v1622 = vpack.c.b16 %v1618, %v1617
    %vm1627 = vcmask 523264
    %v1629 = vsel %vm1627, %v1586, 0
    %v1632 = vsel %vm1627, %v1587, 0
    %1634 = vmatprep.subr.bf16.mxu0 0
    %1635 = vmatpush1.bf16.msra.mxu0 %v1619
    %1636 = vmatprep.subr.bf16.mxu0 0
    %1637 = vmatpush1.bf16.msra.mxu0 %v1620
    %1638 = vmatprep.subr.bf16.mxu0 0
    %1639 = vmatpush1.bf16.msra.mxu0 %v1621
    %1640 = vmatprep.subr.bf16.mxu0 0
    %1641 = vmatpush1.bf16.msra.mxu0 %v1622
    %1642 = vmatprep.subr.bf16.mxu0 0
    %1643 = vmatpush1.bf16.msra.mxu0 0
    %1644 = vmatprep.subr.bf16.mxu0 0
    %1645 = vmatpush1.bf16.msra.mxu0 0
    %1646 = vmatprep.subr.bf16.mxu0 0
    %1647 = vmatpush1.bf16.msra.mxu0 0
    %1648 = vmatprep.subr.bf16.mxu0 0
    %1649 = vmatpush1.bf16.msra.mxu0 0
    %1650 = vmatprep.subr.bf16.mxu0 0
    %1651 = vmatpush1.bf16.msra.mxu0 0
    %1652 = vmatprep.subr.bf16.mxu0 0
    %1653 = vmatpush1.bf16.msra.mxu0 0
    %1654 = vmatprep.subr.bf16.mxu0 0
    %1655 = vmatpush1.bf16.msra.mxu0 0
    %1656 = vmatprep.subr.bf16.mxu0 0
    %1657 = vmatpush1.bf16.msra.mxu0 0
    %1658 = vmatprep.subr.bf16.mxu0 0
    %1659 = vmatpush1.bf16.msra.mxu0 0
    %1660 = vmatprep.subr.bf16.mxu0 0
    %1661 = vmatpush1.bf16.msra.mxu0 0
    %1662 = vmatprep.subr.bf16.mxu0 0
    %1663 = vmatpush1.bf16.msra.mxu0 0
    %1664 = vmatprep.subr.bf16.mxu0 0
    %1665 = vmatpush1.bf16.msra.mxu0 0
    %1666 = vmatprep.mubr.bf16.mxu0 0
    %1667 = vmatmul.mubr.bf16.gmra.mrb[0].mxu0 %v1629
    %v1668 = vpop.f32.mrb[0].mxu0
    %v1669 = vadd.f32 %v1601, %v1668
    %v1670 = vpop.f32.mrb[0].mxu0
    %v1671 = vpop.f32.mrb[0].mxu0
    %v1672 = vadd.f32 %v1601, %v1671
    %v1673 = vpop.f32.mrb[0].mxu0
    %1674 = vmatprep.mubr.bf16.mxu0 0
    %1675 = vmatmul.mubr.bf16.gmra.mrb[0].mxu0 %v1632
    %v1676 = vpop.f32.mrb[0].mxu0
    %v1677 = vadd.f32 %v1601, %v1676
    %v1678 = vpop.f32.mrb[0].mxu0
    %v1679 = vpop.f32.mrb[0].mxu0
    %v1680 = vadd.f32 %v1601, %v1679
    %v1681 = vpop.f32.mrb[0].mxu0
    %1682 = vdwg.mxu0
    %v1683 = vadd.f32 %v1498, %v1669
    %v1684 = vadd.f32 %v1499, %v1672
    %v1685 = vadd.f32 %v1500, %v1677
    %v1686 = vadd.f32 %v1501, %v1680
    %v1687 = vld [vmem:[%s14] sm:$0x1]
    %v1688 = vld [vmem:[%s15] sm:$0x1]
    %v1689 = vsel %vm170, %v1683, 0.0
    %1690 = vadd.xlane.f32.xlu0 %v1689
    %v1691 = vpop.xlane.xlu0 %1690
    %v1692 = vsel %vm170, %v1684, 0.0
    %1693 = vadd.xlane.f32.xlu0 %v1692
    %v1694 = vpop.xlane.xlu0 %1693
    %v1695 = vsel %vm170, %v1685, 0.0
    %1696 = vadd.xlane.f32.xlu0 %v1695
    %v1697 = vpop.xlane.xlu0 %1696
    %v1698 = vsel %vm170, %v1686, 0.0
    %1699 = vadd.xlane.f32.xlu0 %v1698
    %v1700 = vpop.xlane.xlu0 %1699
    %v1701 = vmul.f32 %v1691, %v1441
    %v1702 = vmul.f32 %v1694, %v1441
    %v1703 = vmul.f32 %v1697, %v1441
    %v1704 = vmul.f32 %v1700, %v1441
    %v1705 = vsub.f32 %v1683, %v1701
    %v1706 = vsub.f32 %v1684, %v1702
    %v1707 = vsub.f32 %v1685, %v1703
    %v1708 = vsub.f32 %v1686, %v1704
    %v1709 = vmul.f32 %v1705, %v1705
    %v1710 = vmul.f32 %v1706, %v1706
    %v1711 = vmul.f32 %v1707, %v1707
    %v1712 = vmul.f32 %v1708, %v1708
    %v1713 = vsel %vm170, %v1709, 0.0
    %1714 = vadd.xlane.f32.xlu0 %v1713
    %v1715 = vpop.xlane.xlu0 %1714
    %v1716 = vsel %vm170, %v1710, 0.0
    %1717 = vadd.xlane.f32.xlu0 %v1716
    %v1718 = vpop.xlane.xlu0 %1717
    %v1719 = vsel %vm170, %v1711, 0.0
    %1720 = vadd.xlane.f32.xlu0 %v1719
    %v1721 = vpop.xlane.xlu0 %1720
    %v1722 = vsel %vm170, %v1712, 0.0
    %1723 = vadd.xlane.f32.xlu0 %v1722
    %v1724 = vpop.xlane.xlu0 %1723
    %v1725 = vmul.f32 %v1715, %v1441
    %v1726 = vmul.f32 %v1718, %v1441
    %v1727 = vmul.f32 %v1721, %v1441
    %v1728 = vmul.f32 %v1724, %v1441
    %v1729 = vadd.f32 %v1725, 1e-05
    %v1730 = vadd.f32 %v1726, 1e-05
    %v1731 = vadd.f32 %v1727, 1e-05
    %v1732 = vadd.f32 %v1728, 1e-05
    %v1733 = vrsqrt.pop %v1729
    %v1734 = vrsqrt.pop %v1730
    %v1735 = vrsqrt.pop %v1731
    %v1736 = vrsqrt.pop %v1732
    %v1737 = vmul.f32 %v1705, %v1733
    %v1738 = vmul.f32 %v1706, %v1734
    %v1739 = vmul.f32 %v1707, %v1735
    %v1740 = vmul.f32 %v1708, %v1736
    %v1742 = vlaneseq
    %v1743 = vshrl.u32 %v1742, 7
    %v1744 = vsub.s32 0, %v1743
    %v1745 = vrot.slane %v1687, %v1744
    %v1747 = vmul.f32 %v1737, %v1745
    %v1748 = vmul.f32 %v1738, %v1745
    %v1749 = vmul.f32 %v1739, %v1745
    %v1750 = vmul.f32 %v1740, %v1745
    %v1752 = vlaneseq
    %v1753 = vshrl.u32 %v1752, 7
    %v1754 = vsub.s32 0, %v1753
    %v1755 = vrot.slane %v1688, %v1754
    %v1757 = vadd.f32 %v1747, %v1755
    %v1758 = vadd.f32 %v1748, %v1755
    %v1759 = vadd.f32 %v1749, %v1755
    %v1760 = vadd.f32 %v1750, %v1755
    %1761 = vst.msk [vmem:[#allocation14] sm:$0xff] %vm170, %v1757
    %1762 = vst.msk [vmem:[#allocation14 + $0x8] sm:$0xff] %vm170, %v1758
    %1763 = vst.msk [vmem:[#allocation14 + $0x10] sm:$0xff] %vm170, %v1759
    %1764 = vst.msk [vmem:[#allocation14 + $0x18] sm:$0xff] %vm170, %v1760
    // Predicated region
    $region90: #{tpu_custom_call.1} parent=1 // pred_check
      _
    $region91: #{tpu_custom_call.1} parent=1 // pred_check_branch
      %1766 = sbr.rel (0) target = $region93
    $region92: #{tpu_custom_call.1} parent=1 // pred_region
      %s1768 = ssub.s32 512, 512
      %1769 = vsyncadd [#allocation5], %s1768
      %s1770 = sshll.u32 [#allocation14], 4
      %s1771 = int_to_ptr.vmem [resolvable:$true] %s1770
      %1776 = dma.vmem_to_hbm [thread:$0]  %s1771, 512, %s16, [#allocation5], 128, 128, 8
    $region93: #{tpu_custom_call.1} parent=1 // pred_fallthru
      _
    // Predicated region
    $region94: #{tpu_custom_call.1} parent=1 // pred_check
      _
    $region95: #{tpu_custom_call.1} parent=1 // pred_check_branch
      %1778 = sbr.rel (0) target = $region97
    $region96: #{tpu_custom_call.1} parent=1 // pred_region
      %1779 = dma.done [#allocation5], 512
    $region97: #{tpu_custom_call.1} parent=1 // pred_fallthru
      _
    %1780 = vsyncpa [#allocation4], 1
    %1781 = vsyncpa [#allocation7], 1
    %1782 = vsyncpa [#allocation10], 1
    %1783 = vsyncpa [#allocation13], 1
    %1784 = vsyncpa [#allocation5], 1

// kernel: tpu_custom_call.1
$region0: #{tpu_custom_call.1}
  #allocation0 [shape = 'u32[]', space=smem, size = 0x4, offset = 0x4, fixed_abs, tag = 'smem constant byte address 0x4 - core index']
  #allocation1 [shape = 'u32[144,128]{1,0:T(1,128)}', space=vmem, size = 0x12000, scoped, tag = 'internal scratch']
  #allocation2 [shape = 'f32[32,32]{1,0:T(8,128)}', space=vmem, size = 0x4000, scoped, tag = 'scratch operand']
  %s0 = inlined_call_operand.vmem [shape: f32[32,32], index: 0, kind: input, shape index: {}]
  %s1 = inlined_call_operand.hbm [shape: f32[32,32], index: 1, kind: input, shape index: {}]
  %s2 = inlined_call_operand.vmem [shape: bf16[32,64], index: 2, kind: input, shape index: {}]
  %s3 = inlined_call_operand.vmem [shape: f32[1,64], index: 3, kind: input, shape index: {}]
  %s4 = inlined_call_operand.hbm [shape: bf16[32,32], index: 4, kind: input, shape index: {}]
  %s5 = inlined_call_operand.vmem [shape: f32[1,32], index: 5, kind: input, shape index: {}]
  %s6 = inlined_call_operand.hbm [shape: bf16[32,32], index: 6, kind: input, shape index: {}]
  %s7 = inlined_call_operand.hbm [shape: f32[1,32], index: 7, kind: input, shape index: {}]
  %s8 = inlined_call_operand.hbm [shape: f32[1,32], index: 8, kind: input, shape index: {}]
  %s9 = inlined_call_operand.hbm [shape: f32[1,32], index: 9, kind: input, shape index: {}]
  %s10 = inlined_call_operand.vmem [shape: bf16[32,64], index: 10, kind: input, shape index: {}]
  %s11 = inlined_call_operand.vmem [shape: f32[1,64], index: 11, kind: input, shape index: {}]
  %s12 = inlined_call_operand.vmem [shape: bf16[64,32], index: 12, kind: input, shape index: {}]
  %s13 = inlined_call_operand.vmem [shape: f32[1,32], index: 13, kind: input, shape index: {}]
  %s14 = inlined_call_operand.vmem [shape: f32[1,32], index: 14, kind: input, shape index: {}]
  %s15 = inlined_call_operand.vmem [shape: f32[1,32], index: 15, kind: input, shape index: {}]
  %s16 = inlined_call_operand.hbm [shape: f32[32,32], index: 16, kind: output, shape index: {}]
  %s17 = sld [smem:[#allocation0]]
  $region98: #{tpu_custom_call.1} parent=0
    _
  %s19 = ssub.s32 1, %s17
  %s20 = scalar_select 0, %s19, %s17
  $region1: #{tpu_custom_call.1} parent=0
    #allocation3 [shape = 'u8[16384]{0}', space=vmem, size = 0x4000, scoped, tag = 'input window, operand 1, single buffered']
    #allocation4 [shape = 's32[1]{0}', space=sflag, size = 0x4, scoped, tag = 'scoped memory for tpu_custom_call.1']
    #allocation5 [shape = 's32[1]{0}', space=sflag, size = 0x4, scoped, tag = 'scoped memory for tpu_custom_call.1']
    #allocation6 [shape = 'u8[8192]{0}', space=vmem, size = 0x2000, scoped, tag = 'input window, operand 4, single buffered']
    #allocation7 [shape = 's32[1]{0}', space=sflag, size = 0x4, scoped, tag = 'scoped memory for tpu_custom_call.1']
    #allocation8 [shape = 'u8[8192]{0}', space=vmem, size = 0x2000, scoped, tag = 'input window, operand 6, single buffered']
    #allocation9 [shape = 'u8[512]{0}', space=vmem, size = 0x400, scoped, tag = 'input window, operand 7, single buffered']
    #allocation10 [shape = 's32[1]{0}', space=sflag, size = 0x4, scoped, tag = 'scoped memory for tpu_custom_call.1']
    #allocation11 [shape = 'u8[512]{0}', space=vmem, size = 0x400, scoped, tag = 'input window, operand 8, single buffered']
    #allocation12 [shape = 'u8[512]{0}', space=vmem, size = 0x400, scoped, tag = 'input window, operand 9, single buffered']
    #allocation13 [shape = 's32[1]{0}', space=sflag, size = 0x4, scoped, tag = 'scoped memory for tpu_custom_call.1']
    #allocation14 [shape = 'u8[16384]{0}', space=vmem, size = 0x4000, scoped, tag = 'output window, operand 0, single buffered']
    %21 = vsyncpa [#allocation4], 0
    %22 = vsyncpa [#allocation7], 0
    %23 = vsyncpa [#allocation10], 0
    %24 = vsyncpa [#allocation13], 0
    %25 = vsyncpa [#allocation5], 0
    // Predicated region
    $region2: #{tpu_custom_call.1} parent=1 // pred_check
      _
    $region3: #{tpu_custom_call.1} parent=1 // pred_check_branch
      %27 = sbr.rel (0) target = $region5
    $region4: #{tpu_custom_call.1} parent=1 // pred_region
      _
    $region5: #{tpu_custom_call.1} parent=1 // pred_fallthru
      _
    // Predicated region
    $region6: #{tpu_custom_call.1} parent=1 // pred_check
      _
    $region7: #{tpu_custom_call.1} parent=1 // pred_check_branch
      %29 = sbr.rel (0) target = $region9
    $region8: #{tpu_custom_call.1} parent=1 // pred_region
      %s31 = ssub.s32 512, 512
      %32 = vsyncadd [#allocation4], %s31
      %s33 = sshll.u32 [#allocation3], 4
      %s34 = int_to_ptr.vmem [resolvable:$true] %s33
      %39 = dma.hbm_to_vmem [thread:$0]  %s1, 512, %s34, [#allocation4], 128, 128, 8
    $region9: #{tpu_custom_call.1} parent=1 // pred_fallthru
      _
    // Predicated region
    $region10: #{tpu_custom_call.1} parent=1 // pred_check
      _
    $region11: #{tpu_custom_call.1} parent=1 // pred_check_branch
      %41 = sbr.rel (0) target = $region13
    $region12: #{tpu_custom_call.1} parent=1 // pred_region
      _
    $region13: #{tpu_custom_call.1} parent=1 // pred_fallthru
      _
    // Predicated region
    $region14: #{tpu_custom_call.1} parent=1 // pred_check
      _
    $region15: #{tpu_custom_call.1} parent=1 // pred_check_branch
      %43 = sbr.rel (0) target = $region17
    $region16: #{tpu_custom_call.1} parent=1 // pred_region
      _
    $region17: #{tpu_custom_call.1} parent=1 // pred_fallthru
      _
    // Predicated region
    $region18: #{tpu_custom_call.1} parent=1 // pred_check
      _
    $region19: #{tpu_custom_call.1} parent=1 // pred_check_branch
      %45 = sbr.rel (0) target = $region21
    $region20: #{tpu_custom_call.1} parent=1 // pred_region
      %s47 = ssub.s32 256, 256
      %48 = vsyncadd [#allocation7], %s47
      %s49 = sshll.u32 [#allocation6], 4
      %s50 = int_to_ptr.vmem [resolvable:$true] %s49
      %55 = dma.hbm_to_vmem [thread:$0]  %s4, 256, %s50, [#allocation7], 64, 64, 4
    $region21: #{tpu_custom_call.1} parent=1 // pred_fallthru
      _
    // Predicated region
    $region22: #{tpu_custom_call.1} parent=1 // pred_check
      _
    $region23: #{tpu_custom_call.1} parent=1 // pred_check_branch
      %57 = sbr.rel (0) target = $region25
    $region24: #{tpu_custom_call.1} parent=1 // pred_region
      _
    $region25: #{tpu_custom_call.1} parent=1 // pred_fallthru
      _
    // Predicated region
    $region26: #{tpu_custom_call.1} parent=1 // pred_check
      _
    $region27: #{tpu_custom_call.1} parent=1 // pred_check_branch
      %59 = sbr.rel (0) target = $region29
    $region28: #{tpu_custom_call.1} parent=1 // pred_region
      %s61 = ssub.s32 256, 256
      %62 = vsyncadd [#allocation7], %s61
      %s63 = sshll.u32 [#allocation8], 4
      %s64 = int_to_ptr.vmem [resolvable:$true] %s63
      %69 = dma.hbm_to_vmem [thread:$0]  %s6, 256, %s64, [#allocation7], 64, 64, 4
    $region29: #{tpu_custom_call.1} parent=1 // pred_fallthru
      _
    // Predicated region
    $region30: #{tpu_custom_call.1} parent=1 // pred_check
      _
    $region31: #{tpu_custom_call.1} parent=1 // pred_check_branch
      %71 = sbr.rel (0) target = $region33
    $region32: #{tpu_custom_call.1} parent=1 // pred_region
      %s73 = ssub.s32 16, 16
      %74 = vsyncadd [#allocation10], %s73
      %s76 = sshll.u32 [#allocation9], 4
      %s77 = int_to_ptr.vmem [resolvable:$true] %s76
      %79 = dma.hbm_to_vmem [thread:$0]  %s7, 16, %s77, [#allocation10]
    $region33: #{tpu_custom_call.1} parent=1 // pred_fallthru
      _
    // Predicated region
    $region34: #{tpu_custom_call.1} parent=1 // pred_check
      _
    $region35: #{tpu_custom_call.1} parent=1 // pred_check_branch
      %81 = sbr.rel (0) target = $region37
    $region36: #{tpu_custom_call.1} parent=1 // pred_region
      %s83 = ssub.s32 16, 16
      %84 = vsyncadd [#allocation10], %s83
      %s86 = sshll.u32 [#allocation11], 4
      %s87 = int_to_ptr.vmem [resolvable:$true] %s86
      %89 = dma.hbm_to_vmem [thread:$0]  %s8, 16, %s87, [#allocation10]
    $region37: #{tpu_custom_call.1} parent=1 // pred_fallthru
      _
    // Predicated region
    $region38: #{tpu_custom_call.1} parent=1 // pred_check
      _
    $region39: #{tpu_custom_call.1} parent=1 // pred_check_branch
      %91 = sbr.rel (0) target = $region41
    $region40: #{tpu_custom_call.1} parent=1 // pred_region
      %s93 = ssub.s32 16, 16
      %94 = vsyncadd [#allocation13], %s93
      %s96 = sshll.u32 [#allocation12], 4
      %s97 = int_to_ptr.vmem [resolvable:$true] %s96
      %99 = dma.hbm_to_vmem [thread:$0]  %s9, 16, %s97, [#allocation13]
    $region41: #{tpu_custom_call.1} parent=1 // pred_fallthru
      _
    // Predicated region
    $region42: #{tpu_custom_call.1} parent=1 // pred_check
      _
    $region43: #{tpu_custom_call.1} parent=1 // pred_check_branch
      %101 = sbr.rel (0) target = $region45
    $region44: #{tpu_custom_call.1} parent=1 // pred_region
      _
    $region45: #{tpu_custom_call.1} parent=1 // pred_fallthru
      _
    // Predicated region
    $region46: #{tpu_custom_call.1} parent=1 // pred_check
      _
    $region47: #{tpu_custom_call.1} parent=1 // pred_check_branch
      %103 = sbr.rel (0) target = $region49
    $region48: #{tpu_custom_call.1} parent=1 // pred_region
      _
    $region49: #{tpu_custom_call.1} parent=1 // pred_fallthru
      _
    // Predicated region
    $region50: #{tpu_custom_call.1} parent=1 // pred_check
      _
    $region51: #{tpu_custom_call.1} parent=1 // pred_check_branch
      %105 = sbr.rel (0) target = $region53
    $region52: #{tpu_custom_call.1} parent=1 // pred_region
      _
    $region53: #{tpu_custom_call.1} parent=1 // pred_fallthru
      _
    // Predicated region
    $region54: #{tpu_custom_call.1} parent=1 // pred_check
      _
    $region55: #{tpu_custom_call.1} parent=1 // pred_check_branch
      %107 = sbr.rel (0) target = $region57
    $region56: #{tpu_custom_call.1} parent=1 // pred_region
      _
    $region57: #{tpu_custom_call.1} parent=1 // pred_fallthru
      _
    // Predicated region
    $region58: #{tpu_custom_call.1} parent=1 // pred_check
      _
    $region59: #{tpu_custom_call.1} parent=1 // pred_check_branch
      %109 = sbr.rel (0) target = $region61
    $region60: #{tpu_custom_call.1} parent=1 // pred_region
      _
    $region61: #{tpu_custom_call.1} parent=1 // pred_fallthru
      _
    // Predicated region
    $region62: #{tpu_custom_call.1} parent=1 // pred_check
      _
    $region63: #{tpu_custom_call.1} parent=1 // pred_check_branch
      %111 = sbr.rel (0) target = $region65
    $region64: #{tpu_custom_call.1} parent=1 // pred_region
      _
    $region65: #{tpu_custom_call.1} parent=1 // pred_fallthru
      _
    // Predicated region
    $region66: #{tpu_custom_call.1} parent=1 // pred_check
      _
    $region67: #{tpu_custom_call.1} parent=1 // pred_check_branch
      %113 = sbr.rel (0) target = $region69
    $region68: #{tpu_custom_call.1} parent=1 // pred_region
      %114 = dma.done [#allocation4], 512
    $region69: #{tpu_custom_call.1} parent=1 // pred_fallthru
      _
    // Predicated region
    $region70: #{tpu_custom_call.1} parent=1 // pred_check
      _
    $region71: #{tpu_custom_call.1} parent=1 // pred_check_branch
      %116 = sbr.rel (0) target = $region73
    $region72: #{tpu_custom_call.1} parent=1 // pred_region
      %117 = dma.done [#allocation7], 256
    $region73: #{tpu_custom_call.1} parent=1 // pred_fallthru
      _
    // Predicated region
    $region74: #{tpu_custom_call.1} parent=1 // pred_check
      _
    $region75: #{tpu_custom_call.1} parent=1 // pred_check_branch
      %119 = sbr.rel (0) target = $region77
    $region76: #{tpu_custom_call.1} parent=1 // pred_region
      %120 = dma.done [#allocation7], 256
    $region77: #{tpu_custom_call.1} parent=1 // pred_fallthru
      _
    // Predicated region
    $region78: #{tpu_custom_call.1} parent=1 // pred_check
      _
    $region79: #{tpu_custom_call.1} parent=1 // pred_check_branch
      %122 = sbr.rel (0) target = $region81
    $region80: #{tpu_custom_call.1} parent=1 // pred_region
      %123 = dma.done [#allocation10], 16
    $region81: #{tpu_custom_call.1} parent=1 // pred_fallthru
      _
    // Predicated region
    $region82: #{tpu_custom_call.1} parent=1 // pred_check
      _
    $region83: #{tpu_custom_call.1} parent=1 // pred_check_branch
      %125 = sbr.rel (0) target = $region85
    $region84: #{tpu_custom_call.1} parent=1 // pred_region
      %126 = dma.done [#allocation10], 16
    $region85: #{tpu_custom_call.1} parent=1 // pred_fallthru
      _
    // Predicated region
    $region86: #{tpu_custom_call.1} parent=1 // pred_check
      _
    $region87: #{tpu_custom_call.1} parent=1 // pred_check_branch
      %128 = sbr.rel (0) target = $region89
    $region88: #{tpu_custom_call.1} parent=1 // pred_region
      %129 = dma.done [#allocation13], 16
    $region89: #{tpu_custom_call.1} parent=1 // pred_fallthru
      _
    %v131 = vld [vmem:[%s0] sm:$0xff]
    %v132 = vld [vmem:[%s0 + $0x8] sm:$0xff]
    %v133 = vld [vmem:[%s0 + $0x10] sm:$0xff]
    %v134 = vld [vmem:[%s0 + $0x18] sm:$0xff]
    %v135 = vld [vmem:[#allocation3] sm:$0xff]
    %v136 = vld [vmem:[#allocation3 + $0x8] sm:$0xff]
    %v137 = vld [vmem:[#allocation3 + $0x10] sm:$0xff]
    %v138 = vld [vmem:[#allocation3 + $0x18] sm:$0xff]
    %v139 = vadd.f32 %v131, %v135
    %v140 = vadd.f32 %v132, %v136
    %v141 = vadd.f32 %v133, %v137
    %v142 = vadd.f32 %v134, %v138
    %v143 = vpack.c.bf16 %v140, %v139
    %v144 = vpack.c.bf16 %v142, %v141
    %v145 = vpack.c.bf16 %v132, %v131
    %v146 = vpack.c.bf16 %v134, %v133
    %v147 = vld [vmem:[%s2] sm:$0xf]
    %v148 = vld [vmem:[%s2 + $0x4] sm:$0xf]
    %v149 = vld [vmem:[%s2 + $0x8] sm:$0xf]
    %v150 = vld [vmem:[%s2 + $0xc] sm:$0xf]
    %v151 = vld [vmem:[%s3] sm:$0x1]
    %v153 = vlaneseq
    %v154 = vshrl.u32 %v153, 7
    %v155 = vsub.s32 0, %v154
    %v156 = vrot.slane %v151, %v155
    %v162 = vunpack.c.l.b16 %v147
    %v163 = vunpack.c.l.b16 %v148
    %v164 = vunpack.c.l.b16 %v149
    %v165 = vunpack.c.l.b16 %v150
    %v166 = vpack.c.b16 %v163, %v162
    %v167 = vpack.c.b16 %v165, %v164
    %vm170 = vcmask 261120
    %v172 = vsel %vm170, %v143, 0
    %v175 = vsel %vm170, %v144, 0
    %177 = vmatprep.subr.bf16.mxu0 0
    %178 = vmatpush1.bf16.msra.mxu0 %v166
    %179 = vmatprep.subr.bf16.mxu0 0
    %180 = vmatpush1.bf16.msra.mxu0 %v167
    %181 = vmatprep.subr.bf16.mxu0 0
    %182 = vmatpush1.bf16.msra.mxu0 0
    %183 = vmatprep.subr.bf16.mxu0 0
    %184 = vmatpush1.bf16.msra.mxu0 0
    %185 = vmatprep.subr.bf16.mxu0 0
    %186 = vmatpush1.bf16.msra.mxu0 0
    %187 = vmatprep.subr.bf16.mxu0 0
    %188 = vmatpush1.bf16.msra.mxu0 0
    %189 = vmatprep.subr.bf16.mxu0 0
    %190 = vmatpush1.bf16.msra.mxu0 0
    %191 = vmatprep.subr.bf16.mxu0 0
    %192 = vmatpush1.bf16.msra.mxu0 0
    %193 = vmatprep.subr.bf16.mxu0 0
    %194 = vmatpush1.bf16.msra.mxu0 0
    %195 = vmatprep.subr.bf16.mxu0 0
    %196 = vmatpush1.bf16.msra.mxu0 0
    %197 = vmatprep.subr.bf16.mxu0 0
    %198 = vmatpush1.bf16.msra.mxu0 0
    %199 = vmatprep.subr.bf16.mxu0 0
    %200 = vmatpush1.bf16.msra.mxu0 0
    %201 = vmatprep.subr.bf16.mxu0 0
    %202 = vmatpush1.bf16.msra.mxu0 0
    %203 = vmatprep.subr.bf16.mxu0 0
    %204 = vmatpush1.bf16.msra.mxu0 0
    %205 = vmatprep.subr.bf16.mxu0 0
    %206 = vmatpush1.bf16.msra.mxu0 0
    %207 = vmatprep.subr.bf16.mxu0 0
    %208 = vmatpush1.bf16.msra.mxu0 0
    %209 = vmatprep.mubr.bf16.mxu0 0
    %210 = vmatmul.mubr.bf16.gmra.mrb[0].mxu0 %v172
    %v211 = vpop.f32.mrb[0].mxu0
    %v212 = vadd.f32 %v156, %v211
    %v213 = vpop.f32.mrb[0].mxu0
    %v214 = vpop.f32.mrb[0].mxu0
    %v215 = vadd.f32 %v156, %v214
    %v216 = vpop.f32.mrb[0].mxu0
    %217 = vmatprep.mubr.bf16.mxu0 0
    %218 = vmatmul.mubr.bf16.gmra.mrb[0].mxu0 %v175
    %v219 = vpop.f32.mrb[0].mxu0
    %v220 = vadd.f32 %v156, %v219
    %v221 = vpop.f32.mrb[0].mxu0
    %v222 = vpop.f32.mrb[0].mxu0
    %v223 = vadd.f32 %v156, %v222
    %v224 = vpop.f32.mrb[0].mxu0
    %225 = vdwg.mxu0
    %v226 = vld [vmem:[#allocation6] sm:$0xf]
    %v227 = vld [vmem:[#allocation6 + $0x4] sm:$0xf]
    %v228 = vld [vmem:[#allocation6 + $0x8] sm:$0xf]
    %v229 = vld [vmem:[#allocation6 + $0xc] sm:$0xf]
    %v230 = vld [vmem:[%s5] sm:$0x1]
    %v232 = vlaneseq
    %v233 = vshrl.u32 %v232, 7
    %v234 = vsub.s32 0, %v233
    %v235 = vrot.slane %v230, %v234
    %v241 = vunpack.c.l.b16 %v226
    %v242 = vunpack.c.l.b16 %v227
    %v243 = vunpack.c.l.b16 %v228
    %v244 = vunpack.c.l.b16 %v229
    %v245 = vpack.c.b16 %v242, %v241
    %v246 = vpack.c.b16 %v244, %v243
    %v250 = vsel %vm170, %v145, 0
    %v253 = vsel %vm170, %v146, 0
    %255 = vmatprep.subr.bf16.mxu0 0
    %256 = vmatpush1.bf16.msra.mxu0 %v245
    %257 = vmatprep.subr.bf16.mxu0 0
    %258 = vmatpush1.bf16.msra.mxu0 %v246
    %259 = vmatprep.subr.bf16.mxu0 0
    %260 = vmatpush1.bf16.msra.mxu0 0
    %261 = vmatprep.subr.bf16.mxu0 0
    %262 = vmatpush1.bf16.msra.mxu0 0
    %263 = vmatprep.subr.bf16.mxu0 0
    %264 = vmatpush1.bf16.msra.mxu0 0
    %265 = vmatprep.subr.bf16.mxu0 0
    %266 = vmatpush1.bf16.msra.mxu0 0
    %267 = vmatprep.subr.bf16.mxu0 0
    %268 = vmatpush1.bf16.msra.mxu0 0
    %269 = vmatprep.subr.bf16.mxu0 0
    %270 = vmatpush1.bf16.msra.mxu0 0
    %271 = vmatprep.subr.bf16.mxu0 0
    %272 = vmatpush1.bf16.msra.mxu0 0
    %273 = vmatprep.subr.bf16.mxu0 0
    %274 = vmatpush1.bf16.msra.mxu0 0
    %275 = vmatprep.subr.bf16.mxu0 0
    %276 = vmatpush1.bf16.msra.mxu0 0
    %277 = vmatprep.subr.bf16.mxu0 0
    %278 = vmatpush1.bf16.msra.mxu0 0
    %279 = vmatprep.subr.bf16.mxu0 0
    %280 = vmatpush1.bf16.msra.mxu0 0
    %281 = vmatprep.subr.bf16.mxu0 0
    %282 = vmatpush1.bf16.msra.mxu0 0
    %283 = vmatprep.subr.bf16.mxu0 0
    %284 = vmatpush1.bf16.msra.mxu0 0
    %285 = vmatprep.subr.bf16.mxu0 0
    %286 = vmatpush1.bf16.msra.mxu0 0
    %287 = vmatprep.mubr.bf16.mxu0 0
    %288 = vmatmul.mubr.bf16.gmra.mrb[0].mxu0 %v250
    %v289 = vpop.f32.mrb[0].mxu0
    %v290 = vadd.f32 %v235, %v289
    %v291 = vpop.f32.mrb[0].mxu0
    %v292 = vpop.f32.mrb[0].mxu0
    %v293 = vadd.f32 %v235, %v292
    %v294 = vpop.f32.mrb[0].mxu0
    %295 = vmatprep.mubr.bf16.mxu0 0
    %296 = vmatmul.mubr.bf16.gmra.mrb[0].mxu0 %v253
    %v297 = vpop.f32.mrb[0].mxu0
    %v298 = vadd.f32 %v235, %v297
    %v299 = vpop.f32.mrb[0].mxu0
    %v300 = vpop.f32.mrb[0].mxu0
    %v301 = vadd.f32 %v235, %v300
    %v302 = vpop.f32.mrb[0].mxu0
    %303 = vdwg.mxu0
    %v304 = vpack.c.bf16 %v215, %v212
    %v305 = vpack.c.bf16 %v223, %v220
    %v306 = vpack.c.bf16 %v293, %v290
    %v307 = vpack.c.bf16 %v301, %v298
    %309 = vrot.lane.b32.xlu0 %v304, 96
    %v310 = vpop.permute.xlu0 %309
    %vm311 = vcmask 64512
    %v313 = vsel %vm311, %v304, 0
    %v316 = vsel %vm311, %v310, 0
    %318 = vmatprep.subr.bf16.mxu0 0
    %319 = vmatpush1.bf16.xpose.msra.mxu0 %v316
    %320 = vmatprep.subr.bf16.mxu0 0
    %321 = vmatpush1.bf16.xpose.msra.mxu0 0
    %322 = vmatprep.subr.bf16.mxu0 0
    %323 = vmatpush1.bf16.xpose.msra.mxu0 0
    %324 = vmatprep.subr.bf16.mxu0 0
    %325 = vmatpush1.bf16.xpose.msra.mxu0 0
    %326 = vmatprep.subr.bf16.mxu0 0
    %327 = vmatpush1.bf16.xpose.msra.mxu0 0
    %328 = vmatprep.subr.bf16.mxu0 0
    %329 = vmatpush1.bf16.xpose.msra.mxu0 0
    %330 = vmatprep.subr.bf16.mxu0 0
    %331 = vmatpush1.bf16.xpose.msra.mxu0 0
    %332 = vmatprep.subr.bf16.mxu0 0
    %333 = vmatpush1.bf16.xpose.msra.mxu0 0
    %334 = vmatprep.subr.bf16.mxu0 0
    %335 = vmatpush1.bf16.xpose.msra.mxu0 0
    %336 = vmatprep.subr.bf16.mxu0 0
    %337 = vmatpush1.bf16.xpose.msra.mxu0 0
    %338 = vmatprep.subr.bf16.mxu0 0
    %339 = vmatpush1.bf16.xpose.msra.mxu0 0
    %340 = vmatprep.subr.bf16.mxu0 0
    %341 = vmatpush1.bf16.xpose.msra.mxu0 0
    %342 = vmatprep.subr.bf16.mxu0 0
    %343 = vmatpush1.bf16.xpose.msra.mxu0 0
    %344 = vmatprep.subr.bf16.mxu0 0
    %345 = vmatpush1.bf16.xpose.msra.mxu0 0
    %346 = vmatprep.subr.bf16.mxu0 0
    %347 = vmatpush1.bf16.xpose.msra.mxu0 0
    %348 = vmatprep.subr.bf16.mxu0 0
    %349 = vmatpush1.bf16.xpose.msra.mxu0 0
    %350 = vmatprep.mubr.bf16.mxu0 0
    %351 = vmatmul.mubr.bf16.gmra.mrb[0].mxu0 %v313
    %v352 = vpop.f32.mrb[0].mxu0
    %v353 = vadd.f32 0.0, %v352
    %v354 = vpop.f32.mrb[0].mxu0
    %v355 = vpop.f32.mrb[0].mxu0
    %v356 = vadd.f32 0.0, %v355
    %v357 = vpop.f32.mrb[0].mxu0
    %358 = vdwg.mxu0
    %360 = vrot.lane.b32.xlu0 %v305, 96
    %v361 = vpop.permute.xlu0 %360
    %v363 = vsel %vm311, %v305, 0
    %v366 = vsel %vm311, %v361, 0
    %368 = vmatprep.subr.bf16.mxu0 0
    %369 = vmatpush1.bf16.xpose.msra.mxu0 %v366
    %370 = vmatprep.subr.bf16.mxu0 0
    %371 = vmatpush1.bf16.xpose.msra.mxu0 0
    %372 = vmatprep.subr.bf16.mxu0 0
    %373 = vmatpush1.bf16.xpose.msra.mxu0 0
    %374 = vmatprep.subr.bf16.mxu0 0
    %375 = vmatpush1.bf16.xpose.msra.mxu0 0
    %376 = vmatprep.subr.bf16.mxu0 0
    %377 = vmatpush1.bf16.xpose.msra.mxu0 0
    %378 = vmatprep.subr.bf16.mxu0 0
    %379 = vmatpush1.bf16.xpose.msra.mxu0 0
    %380 = vmatprep.subr.bf16.mxu0 0
    %381 = vmatpush1.bf16.xpose.msra.mxu0 0
    %382 = vmatprep.subr.bf16.mxu0 0
    %383 = vmatpush1.bf16.xpose.msra.mxu0 0
    %384 = vmatprep.subr.bf16.mxu0 0
    %385 = vmatpush1.bf16.xpose.msra.mxu0 0
    %386 = vmatprep.subr.bf16.mxu0 0
    %387 = vmatpush1.bf16.xpose.msra.mxu0 0
    %388 = vmatprep.subr.bf16.mxu0 0
    %389 = vmatpush1.bf16.xpose.msra.mxu0 0
    %390 = vmatprep.subr.bf16.mxu0 0
    %391 = vmatpush1.bf16.xpose.msra.mxu0 0
    %392 = vmatprep.subr.bf16.mxu0 0
    %393 = vmatpush1.bf16.xpose.msra.mxu0 0
    %394 = vmatprep.subr.bf16.mxu0 0
    %395 = vmatpush1.bf16.xpose.msra.mxu0 0
    %396 = vmatprep.subr.bf16.mxu0 0
    %397 = vmatpush1.bf16.xpose.msra.mxu0 0
    %398 = vmatprep.subr.bf16.mxu0 0
    %399 = vmatpush1.bf16.xpose.msra.mxu0 0
    %400 = vmatprep.mubr.bf16.mxu0 0
    %401 = vmatmul.mubr.bf16.gmra.mrb[0].mxu0 %v363
    %v402 = vpop.f32.mrb[0].mxu0
    %v403 = vadd.f32 0.0, %v402
    %v404 = vpop.f32.mrb[0].mxu0
    %v405 = vpop.f32.mrb[0].mxu0
    %v406 = vadd.f32 0.0, %v405
    %v407 = vpop.f32.mrb[0].mxu0
    %408 = vdwg.mxu0
    %vm409 = vcmask 130048
    %v410 = vsel %vm409, %v353, -inf
    %411 = vmax.xlane.f32.xlu0 %v410
    %v412 = vpop.xlane.xlu0 %411
    %v413 = vsel %vm409, %v356, -inf
    %414 = vmax.xlane.f32.xlu0 %v413
    %v415 = vpop.xlane.xlu0 %414
    %v416 = vsel %vm409, %v403, -inf
    %417 = vmax.xlane.f32.xlu0 %v416
    %v418 = vpop.xlane.xlu0 %417
    %v419 = vsel %vm409, %v406, -inf
    %420 = vmax.xlane.f32.xlu0 %v419
    %v421 = vpop.xlane.xlu0 %420
    %v422 = vsub.f32 %v353, %v412
    %v423 = vsub.f32 %v356, %v415
    %v424 = vsub.f32 %v403, %v418
    %v425 = vsub.f32 %v406, %v421
    %v426 = vmul.f32 %v422, 1.442695
    %v427 = vpow.pop %v426
    %v428 = vmul.f32 %v423, 1.442695
    %v429 = vpow.pop %v428
    %v430 = vmul.f32 %v424, 1.442695
    %v431 = vpow.pop %v430
    %v432 = vmul.f32 %v425, 1.442695
    %v433 = vpow.pop %v432
    %v434 = vsel %vm409, %v427, 0.0
    %435 = vadd.xlane.f32.xlu0 %v434
    %v436 = vpop.xlane.xlu0 %435
    %v437 = vsel %vm409, %v429, 0.0
    %438 = vadd.xlane.f32.xlu0 %v437
    %v439 = vpop.xlane.xlu0 %438
    %v440 = vsel %vm409, %v431, 0.0
    %441 = vadd.xlane.f32.xlu0 %v440
    %v442 = vpop.xlane.xlu0 %441
    %v443 = vsel %vm409, %v433, 0.0
    %444 = vadd.xlane.f32.xlu0 %v443
    %v445 = vpop.xlane.xlu0 %444
    %v446 = vrcp.pop %v436
    %v447 = vrcp.pop %v439
    %v448 = vrcp.pop %v442
    %v449 = vrcp.pop %v445
    %v450 = vmul.f32 %v427, %v446
    %v451 = vmul.f32 %v429, %v447
    %v452 = vmul.f32 %v431, %v448
    %v453 = vmul.f32 %v433, %v449
    %v454 = vpack.c.bf16 %v451, %v450
    %v455 = vpack.c.bf16 %v453, %v452
    %v457 = vsel %vm409, %v454, 0
    %459 = vmatprep.subr.bf16.mxu0 0
    %460 = vmatpush1.bf16.msra.mxu0 %v306
    %461 = vmatprep.subr.bf16.mxu0 0
    %462 = vmatpush1.bf16.msra.mxu0 0
    %463 = vmatprep.subr.bf16.mxu0 0
    %464 = vmatpush1.bf16.msra.mxu0 0
    %465 = vmatprep.subr.bf16.mxu0 0
    %466 = vmatpush1.bf16.msra.mxu0 0
    %467 = vmatprep.subr.bf16.mxu0 0
    %468 = vmatpush1.bf16.msra.mxu0 0
    %469 = vmatprep.subr.bf16.mxu0 0
    %470 = vmatpush1.bf16.msra.mxu0 0
    %471 = vmatprep.subr.bf16.mxu0 0
    %472 = vmatpush1.bf16.msra.mxu0 0
    %473 = vmatprep.subr.bf16.mxu0 0
    %474 = vmatpush1.bf16.msra.mxu0 0
    %475 = vmatprep.subr.bf16.mxu0 0
    %476 = vmatpush1.bf16.msra.mxu0 0
    %477 = vmatprep.subr.bf16.mxu0 0
    %478 = vmatpush1.bf16.msra.mxu0 0
    %479 = vmatprep.subr.bf16.mxu0 0
    %480 = vmatpush1.bf16.msra.mxu0 0
    %481 = vmatprep.subr.bf16.mxu0 0
    %482 = vmatpush1.bf16.msra.mxu0 0
    %483 = vmatprep.subr.bf16.mxu0 0
    %484 = vmatpush1.bf16.msra.mxu0 0
    %485 = vmatprep.subr.bf16.mxu0 0
    %486 = vmatpush1.bf16.msra.mxu0 0
    %487 = vmatprep.subr.bf16.mxu0 0
    %488 = vmatpush1.bf16.msra.mxu0 0
    %489 = vmatprep.subr.bf16.mxu0 0
    %490 = vmatpush1.bf16.msra.mxu0 0
    %491 = vmatprep.mubr.bf16.mxu0 0
    %492 = vmatmul.mubr.bf16.gmra.mrb[0].mxu0 %v457
    %v493 = vpop.f32.mrb[0].mxu0
    %v494 = vadd.f32 0.0, %v493
    %v495 = vpop.f32.mrb[0].mxu0
    %v496 = vpop.f32.mrb[0].mxu0
    %v497 = vadd.f32 0.0, %v496
    %v498 = vpop.f32.mrb[0].mxu0
    %499 = vdwg.mxu0
    %v501 = vsel %vm409, %v455, 0
    %503 = vmatprep.subr.bf16.mxu0 0
    %504 = vmatpush1.bf16.msra.mxu0 %v307
    %505 = vmatprep.subr.bf16.mxu0 0
    %506 = vmatpush1.bf16.msra.mxu0 0
    %507 = vmatprep.subr.bf16.mxu0 0
    %508 = vmatpush1.bf16.msra.mxu0 0
    %509 = vmatprep.subr.bf16.mxu0 0
    %510 = vmatpush1.bf16.msra.mxu0 0
    %511 = vmatprep.subr.bf16.mxu0 0
    %512 = vmatpush1.bf16.msra.mxu0 0
    %513 = vmatprep.subr.bf16.mxu0 0
    %514 = vmatpush1.bf16.msra.mxu0 0
    %515 = vmatprep.subr.bf16.mxu0 0
    %516 = vmatpush1.bf16.msra.mxu0 0
    %517 = vmatprep.subr.bf16.mxu0 0
    %518 = vmatpush1.bf16.msra.mxu0 0
    %519 = vmatprep.subr.bf16.mxu0 0
    %520 = vmatpush1.bf16.msra.mxu0 0
    %521 = vmatprep.subr.bf16.mxu0 0
    %522 = vmatpush1.bf16.msra.mxu0 0
    %523 = vmatprep.subr.bf16.mxu0 0
    %524 = vmatpush1.bf16.msra.mxu0 0
    %525 = vmatprep.subr.bf16.mxu0 0
    %526 = vmatpush1.bf16.msra.mxu0 0
    %527 = vmatprep.subr.bf16.mxu0 0
    %528 = vmatpush1.bf16.msra.mxu0 0
    %529 = vmatprep.subr.bf16.mxu0 0
    %530 = vmatpush1.bf16.msra.mxu0 0
    %531 = vmatprep.subr.bf16.mxu0 0
    %532 = vmatpush1.bf16.msra.mxu0 0
    %533 = vmatprep.subr.bf16.mxu0 0
    %534 = vmatpush1.bf16.msra.mxu0 0
    %535 = vmatprep.mubr.bf16.mxu0 0
    %536 = vmatmul.mubr.bf16.gmra.mrb[0].mxu0 %v501
    %v537 = vpop.f32.mrb[0].mxu0
    %v538 = vadd.f32 0.0, %v537
    %v539 = vpop.f32.mrb[0].mxu0
    %v540 = vpop.f32.mrb[0].mxu0
    %v541 = vadd.f32 0.0, %v540
    %v542 = vpop.f32.mrb[0].mxu0
    %543 = vdwg.mxu0
    %544 = vst.msk [vmem:[#allocation2] sm:$0xff] %vm311, %v494
    %545 = vst.msk [vmem:[#allocation2 + $0x8] sm:$0xff] %vm311, %v497
    %546 = vst.msk [vmem:[#allocation2 + $0x10] sm:$0xff] %vm311, %v538
    %547 = vst.msk [vmem:[#allocation2 + $0x18] sm:$0xff] %vm311, %v541
    %548 = vrot.lane.b32.xlu0 %v304, 120
    %v549 = vpop.permute.xlu0 %548
    %550 = vrot.lane.b32.xlu0 %v304, 88
    %v551 = vpop.permute.xlu0 %550
    %v553 = vsel %vm311, %v549, 0
    %v556 = vsel %vm311, %v551, 0
    %558 = vmatprep.subr.bf16.mxu0 0
    %559 = vmatpush1.bf16.xpose.msra.mxu0 %v556
    %560 = vmatprep.subr.bf16.mxu0 0
    %561 = vmatpush1.bf16.xpose.msra.mxu0 0
    %562 = vmatprep.subr.bf16.mxu0 0
    %563 = vmatpush1.bf16.xpose.msra.mxu0 0
    %564 = vmatprep.subr.bf16.mxu0 0
    %565 = vmatpush1.bf16.xpose.msra.mxu0 0
    %566 = vmatprep.subr.bf16.mxu0 0
    %567 = vmatpush1.bf16.xpose.msra.mxu0 0
    %568 = vmatprep.subr.bf16.mxu0 0
    %569 = vmatpush1.bf16.xpose.msra.mxu0 0
    %570 = vmatprep.subr.bf16.mxu0 0
    %571 = vmatpush1.bf16.xpose.msra.mxu0 0
    %572 = vmatprep.subr.bf16.mxu0 0
    %573 = vmatpush1.bf16.xpose.msra.mxu0 0
    %574 = vmatprep.subr.bf16.mxu0 0
    %575 = vmatpush1.bf16.xpose.msra.mxu0 0
    %576 = vmatprep.subr.bf16.mxu0 0
    %577 = vmatpush1.bf16.xpose.msra.mxu0 0
    %578 = vmatprep.subr.bf16.mxu0 0
    %579 = vmatpush1.bf16.xpose.msra.mxu0 0
    %580 = vmatprep.subr.bf16.mxu0 0
    %581 = vmatpush1.bf16.xpose.msra.mxu0 0
    %582 = vmatprep.subr.bf16.mxu0 0
    %583 = vmatpush1.bf16.xpose.msra.mxu0 0
    %584 = vmatprep.subr.bf16.mxu0 0
    %585 = vmatpush1.bf16.xpose.msra.mxu0 0
    %586 = vmatprep.subr.bf16.mxu0 0
    %587 = vmatpush1.bf16.xpose.msra.mxu0 0
    %588 = vmatprep.subr.bf16.mxu0 0
    %589 = vmatpush1.bf16.xpose.msra.mxu0 0
    %590 = vmatprep.mubr.bf16.mxu0 0
    %591 = vmatmul.mubr.bf16.gmra.mrb[0].mxu0 %v553
    %v592 = vpop.f32.mrb[0].mxu0
    %v593 = vadd.f32 0.0, %v592
    %v594 = vpop.f32.mrb[0].mxu0
    %v595 = vpop.f32.mrb[0].mxu0
    %v596 = vadd.f32 0.0, %v595
    %v597 = vpop.f32.mrb[0].mxu0
    %598 = vdwg.mxu0
    %599 = vrot.lane.b32.xlu0 %v305, 120
    %v600 = vpop.permute.xlu0 %599
    %601 = vrot.lane.b32.xlu0 %v305, 88
    %v602 = vpop.permute.xlu0 %601
    %v604 = vsel %vm311, %v600, 0
    %v607 = vsel %vm311, %v602, 0
    %609 = vmatprep.subr.bf16.mxu0 0
    %610 = vmatpush1.bf16.xpose.msra.mxu0 %v607
    %611 = vmatprep.subr.bf16.mxu0 0
    %612 = vmatpush1.bf16.xpose.msra.mxu0 0
    %613 = vmatprep.subr.bf16.mxu0 0
    %614 = vmatpush1.bf16.xpose.msra.mxu0 0
    %615 = vmatprep.subr.bf16.mxu0 0
    %616 = vmatpush1.bf16.xpose.msra.mxu0 0
    %617 = vmatprep.subr.bf16.mxu0 0
    %618 = vmatpush1.bf16.xpose.msra.mxu0 0
    %619 = vmatprep.subr.bf16.mxu0 0
    %620 = vmatpush1.bf16.xpose.msra.mxu0 0
    %621 = vmatprep.subr.bf16.mxu0 0
    %622 = vmatpush1.bf16.xpose.msra.mxu0 0
    %623 = vmatprep.subr.bf16.mxu0 0
    %624 = vmatpush1.bf16.xpose.msra.mxu0 0
    %625 = vmatprep.subr.bf16.mxu0 0
    %626 = vmatpush1.bf16.xpose.msra.mxu0 0
    %627 = vmatprep.subr.bf16.mxu0 0
    %628 = vmatpush1.bf16.xpose.msra.mxu0 0
    %629 = vmatprep.subr.bf16.mxu0 0
    %630 = vmatpush1.bf16.xpose.msra.mxu0 0
    %631 = vmatprep.subr.bf16.mxu0 0
    %632 = vmatpush1.bf16.xpose.msra.mxu0 0
    %633 = vmatprep.subr.bf16.mxu0 0
    %634 = vmatpush1.bf16.xpose.msra.mxu0 0
    %635 = vmatprep.subr.bf16.mxu0 0
    %636 = vmatpush1.bf16.xpose.msra.mxu0 0
    %637 = vmatprep.subr.bf16.mxu0 0
    %638 = vmatpush1.bf16.xpose.msra.mxu0 0
    %639 = vmatprep.subr.bf16.mxu0 0
    %640 = vmatpush1.bf16.xpose.msra.mxu0 0
    %641 = vmatprep.mubr.bf16.mxu0 0
    %642 = vmatmul.mubr.bf16.gmra.mrb[0].mxu0 %v604
    %v643 = vpop.f32.mrb[0].mxu0
    %v644 = vadd.f32 0.0, %v643
    %v645 = vpop.f32.mrb[0].mxu0
    %v646 = vpop.f32.mrb[0].mxu0
    %v647 = vadd.f32 0.0, %v646
    %v648 = vpop.f32.mrb[0].mxu0
    %649 = vdwg.mxu0
    %v650 = vsel %vm409, %v593, -inf
    %651 = vmax.xlane.f32.xlu0 %v650
    %v652 = vpop.xlane.xlu0 %651
    %v653 = vsel %vm409, %v596, -inf
    %654 = vmax.xlane.f32.xlu0 %v653
    %v655 = vpop.xlane.xlu0 %654
    %v656 = vsel %vm409, %v644, -inf
    %657 = vmax.xlane.f32.xlu0 %v656
    %v658 = vpop.xlane.xlu0 %657
    %v659 = vsel %vm409, %v647, -inf
    %660 = vmax.xlane.f32.xlu0 %v659
    %v661 = vpop.xlane.xlu0 %660
    %v662 = vsub.f32 %v593, %v652
    %v663 = vsub.f32 %v596, %v655
    %v664 = vsub.f32 %v644, %v658
    %v665 = vsub.f32 %v647, %v661
    %v666 = vmul.f32 %v662, 1.442695
    %v667 = vpow.pop %v666
    %v668 = vmul.f32 %v663, 1.442695
    %v669 = vpow.pop %v668
    %v670 = vmul.f32 %v664, 1.442695
    %v671 = vpow.pop %v670
    %v672 = vmul.f32 %v665, 1.442695
    %v673 = vpow.pop %v672
    %v674 = vsel %vm409, %v667, 0.0
    %675 = vadd.xlane.f32.xlu0 %v674
    %v676 = vpop.xlane.xlu0 %675
    %v677 = vsel %vm409, %v669, 0.0
    %678 = vadd.xlane.f32.xlu0 %v677
    %v679 = vpop.xlane.xlu0 %678
    %v680 = vsel %vm409, %v671, 0.0
    %681 = vadd.xlane.f32.xlu0 %v680
    %v682 = vpop.xlane.xlu0 %681
    %v683 = vsel %vm409, %v673, 0.0
    %684 = vadd.xlane.f32.xlu0 %v683
    %v685 = vpop.xlane.xlu0 %684
    %v686 = vrcp.pop %v676
    %v687 = vrcp.pop %v679
    %v688 = vrcp.pop %v682
    %v689 = vrcp.pop %v685
    %v690 = vmul.f32 %v667, %v686
    %v691 = vmul.f32 %v669, %v687
    %v692 = vmul.f32 %v671, %v688
    %v693 = vmul.f32 %v673, %v689
    %v694 = vpack.c.bf16 %v691, %v690
    %v695 = vpack.c.bf16 %v693, %v692
    %697 = vrot.lane.b32.xlu0 %v306, 120
    %v698 = vpop.permute.xlu0 %697
    %v701 = vsel %vm409, %v694, 0
    %703 = vmatprep.subr.bf16.mxu0 0
    %704 = vmatpush1.bf16.msra.mxu0 %v698
    %705 = vmatprep.subr.bf16.mxu0 0
    %706 = vmatpush1.bf16.msra.mxu0 0
    %707 = vmatprep.subr.bf16.mxu0 0
    %708 = vmatpush1.bf16.msra.mxu0 0
    %709 = vmatprep.subr.bf16.mxu0 0
    %710 = vmatpush1.bf16.msra.mxu0 0
    %711 = vmatprep.subr.bf16.mxu0 0
    %712 = vmatpush1.bf16.msra.mxu0 0
    %713 = vmatprep.subr.bf16.mxu0 0
    %714 = vmatpush1.bf16.msra.mxu0 0
    %715 = vmatprep.subr.bf16.mxu0 0
    %716 = vmatpush1.bf16.msra.mxu0 0
    %717 = vmatprep.subr.bf16.mxu0 0
    %718 = vmatpush1.bf16.msra.mxu0 0
    %719 = vmatprep.subr.bf16.mxu0 0
    %720 = vmatpush1.bf16.msra.mxu0 0
    %721 = vmatprep.subr.bf16.mxu0 0
    %722 = vmatpush1.bf16.msra.mxu0 0
    %723 = vmatprep.subr.bf16.mxu0 0
    %724 = vmatpush1.bf16.msra.mxu0 0
    %725 = vmatprep.subr.bf16.mxu0 0
    %726 = vmatpush1.bf16.msra.mxu0 0
    %727 = vmatprep.subr.bf16.mxu0 0
    %728 = vmatpush1.bf16.msra.mxu0 0
    %729 = vmatprep.subr.bf16.mxu0 0
    %730 = vmatpush1.bf16.msra.mxu0 0
    %731 = vmatprep.subr.bf16.mxu0 0
    %732 = vmatpush1.bf16.msra.mxu0 0
    %733 = vmatprep.subr.bf16.mxu0 0
    %734 = vmatpush1.bf16.msra.mxu0 0
    %735 = vmatprep.mubr.bf16.mxu0 0
    %736 = vmatmul.mubr.bf16.gmra.mrb[0].mxu0 %v701
    %v737 = vpop.f32.mrb[0].mxu0
    %v738 = vadd.f32 0.0, %v737
    %v739 = vpop.f32.mrb[0].mxu0
    %v740 = vpop.f32.mrb[0].mxu0
    %v741 = vadd.f32 0.0, %v740
    %v742 = vpop.f32.mrb[0].mxu0
    %743 = vdwg.mxu0
    %745 = vrot.lane.b32.xlu0 %v307, 120
    %v746 = vpop.permute.xlu0 %745
    %v749 = vsel %vm409, %v695, 0
    %751 = vmatprep.subr.bf16.mxu0 0
    %752 = vmatpush1.bf16.msra.mxu0 %v746
    %753 = vmatprep.subr.bf16.mxu0 0
    %754 = vmatpush1.bf16.msra.mxu0 0
    %755 = vmatprep.subr.bf16.mxu0 0
    %756 = vmatpush1.bf16.msra.mxu0 0
    %757 = vmatprep.subr.bf16.mxu0 0
    %758 = vmatpush1.bf16.msra.mxu0 0
    %759 = vmatprep.subr.bf16.mxu0 0
    %760 = vmatpush1.bf16.msra.mxu0 0
    %761 = vmatprep.subr.bf16.mxu0 0
    %762 = vmatpush1.bf16.msra.mxu0 0
    %763 = vmatprep.subr.bf16.mxu0 0
    %764 = vmatpush1.bf16.msra.mxu0 0
    %765 = vmatprep.subr.bf16.mxu0 0
    %766 = vmatpush1.bf16.msra.mxu0 0
    %767 = vmatprep.subr.bf16.mxu0 0
    %768 = vmatpush1.bf16.msra.mxu0 0
    %769 = vmatprep.subr.bf16.mxu0 0
    %770 = vmatpush1.bf16.msra.mxu0 0
    %771 = vmatprep.subr.bf16.mxu0 0
    %772 = vmatpush1.bf16.msra.mxu0 0
    %773 = vmatprep.subr.bf16.mxu0 0
    %774 = vmatpush1.bf16.msra.mxu0 0
    %775 = vmatprep.subr.bf16.mxu0 0
    %776 = vmatpush1.bf16.msra.mxu0 0
    %777 = vmatprep.subr.bf16.mxu0 0
    %778 = vmatpush1.bf16.msra.mxu0 0
    %779 = vmatprep.subr.bf16.mxu0 0
    %780 = vmatpush1.bf16.msra.mxu0 0
    %781 = vmatprep.subr.bf16.mxu0 0
    %782 = vmatpush1.bf16.msra.mxu0 0
    %783 = vmatprep.mubr.bf16.mxu0 0
    %784 = vmatmul.mubr.bf16.gmra.mrb[0].mxu0 %v749
    %v785 = vpop.f32.mrb[0].mxu0
    %v786 = vadd.f32 0.0, %v785
    %v787 = vpop.f32.mrb[0].mxu0
    %v788 = vpop.f32.mrb[0].mxu0
    %v789 = vadd.f32 0.0, %v788
    %v790 = vpop.f32.mrb[0].mxu0
    %791 = vdwg.mxu0
    %796 = vrot.lane.b32.xlu0 %v738, 8
    %v797 = vpop.permute.xlu0 %796
    %798 = vrot.lane.b32.xlu0 %v741, 8
    %v799 = vpop.permute.xlu0 %798
    %800 = vrot.lane.b32.xlu0 %v786, 8
    %v801 = vpop.permute.xlu0 %800
    %802 = vrot.lane.b32.xlu0 %v789, 8
    %v803 = vpop.permute.xlu0 %802
    %vm808 = vcmask 130112
    %809 = vst.msk [vmem:[#allocation2] sm:$0xff] %vm808, %v797
    %810 = vst.msk [vmem:[#allocation2 + $0x8] sm:$0xff] %vm808, %v799
    %811 = vst.msk [vmem:[#allocation2 + $0x10] sm:$0xff] %vm808, %v801
    %812 = vst.msk [vmem:[#allocation2 + $0x18] sm:$0xff] %vm808, %v803
    %813 = vrot.lane.b32.xlu0 %v304, 112
    %v814 = vpop.permute.xlu0 %813
    %815 = vrot.lane.b32.xlu0 %v304, 80
    %v816 = vpop.permute.xlu0 %815
    %v818 = vsel %vm311, %v814, 0
    %v821 = vsel %vm311, %v816, 0
    %823 = vmatprep.subr.bf16.mxu0 0
    %824 = vmatpush1.bf16.xpose.msra.mxu0 %v821
    %825 = vmatprep.subr.bf16.mxu0 0
    %826 = vmatpush1.bf16.xpose.msra.mxu0 0
    %827 = vmatprep.subr.bf16.mxu0 0
    %828 = vmatpush1.bf16.xpose.msra.mxu0 0
    %829 = vmatprep.subr.bf16.mxu0 0
    %830 = vmatpush1.bf16.xpose.msra.mxu0 0
    %831 = vmatprep.subr.bf16.mxu0 0
    %832 = vmatpush1.bf16.xpose.msra.mxu0 0
    %833 = vmatprep.subr.bf16.mxu0 0
    %834 = vmatpush1.bf16.xpose.msra.mxu0 0
    %835 = vmatprep.subr.bf16.mxu0 0
    %836 = vmatpush1.bf16.xpose.msra.mxu0 0
    %837 = vmatprep.subr.bf16.mxu0 0
    %838 = vmatpush1.bf16.xpose.msra.mxu0 0
    %839 = vmatprep.subr.bf16.mxu0 0
    %840 = vmatpush1.bf16.xpose.msra.mxu0 0
    %841 = vmatprep.subr.bf16.mxu0 0
    %842 = vmatpush1.bf16.xpose.msra.mxu0 0
    %843 = vmatprep.subr.bf16.mxu0 0
    %844 = vmatpush1.bf16.xpose.msra.mxu0 0
    %845 = vmatprep.subr.bf16.mxu0 0
    %846 = vmatpush1.bf16.xpose.msra.mxu0 0
    %847 = vmatprep.subr.bf16.mxu0 0
    %848 = vmatpush1.bf16.xpose.msra.mxu0 0
    %849 = vmatprep.subr.bf16.mxu0 0
    %850 = vmatpush1.bf16.xpose.msra.mxu0 0
    %851 = vmatprep.subr.bf16.mxu0 0
    %852 = vmatpush1.bf16.xpose.msra.mxu0 0
    %853 = vmatprep.subr.bf16.mxu0 0
    %854 = vmatpush1.bf16.xpose.msra.mxu0 0
    %855 = vmatprep.mubr.bf16.mxu0 0
    %856 = vmatmul.mubr.bf16.gmra.mrb[0].mxu0 %v818
    %v857 = vpop.f32.mrb[0].mxu0
    %v858 = vadd.f32 0.0, %v857
    %v859 = vpop.f32.mrb[0].mxu0
    %v860 = vpop.f32.mrb[0].mxu0
    %v861 = vadd.f32 0.0, %v860
    %v862 = vpop.f32.mrb[0].mxu0
    %863 = vdwg.mxu0
    %864 = vrot.lane.b32.xlu0 %v305, 112
    %v865 = vpop.permute.xlu0 %864
    %866 = vrot.lane.b32.xlu0 %v305, 80
    %v867 = vpop.permute.xlu0 %866
    %v869 = vsel %vm311, %v865, 0
    %v872 = vsel %vm311, %v867, 0
    %874 = vmatprep.subr.bf16.mxu0 0
    %875 = vmatpush1.bf16.xpose.msra.mxu0 %v872
    %876 = vmatprep.subr.bf16.mxu0 0
    %877 = vmatpush1.bf16.xpose.msra.mxu0 0
    %878 = vmatprep.subr.bf16.mxu0 0
    %879 = vmatpush1.bf16.xpose.msra.mxu0 0
    %880 = vmatprep.subr.bf16.mxu0 0
    %881 = vmatpush1.bf16.xpose.msra.mxu0 0
    %882 = vmatprep.subr.bf16.mxu0 0
    %883 = vmatpush1.bf16.xpose.msra.mxu0 0
    %884 = vmatprep.subr.bf16.mxu0 0
    %885 = vmatpush1.bf16.xpose.msra.mxu0 0
    %886 = vmatprep.subr.bf16.mxu0 0
    %887 = vmatpush1.bf16.xpose.msra.mxu0 0
    %888 = vmatprep.subr.bf16.mxu0 0
    %889 = vmatpush1.bf16.xpose.msra.mxu0 0
    %890 = vmatprep.subr.bf16.mxu0 0
    %891 = vmatpush1.bf16.xpose.msra.mxu0 0
    %892 = vmatprep.subr.bf16.mxu0 0
    %893 = vmatpush1.bf16.xpose.msra.mxu0 0
    %894 = vmatprep.subr.bf16.mxu0 0
    %895 = vmatpush1.bf16.xpose.msra.mxu0 0
    %896 = vmatprep.subr.bf16.mxu0 0
    %897 = vmatpush1.bf16.xpose.msra.mxu0 0
    %898 = vmatprep.subr.bf16.mxu0 0
    %899 = vmatpush1.bf16.xpose.msra.mxu0 0
    %900 = vmatprep.subr.bf16.mxu0 0
    %901 = vmatpush1.bf16.xpose.msra.mxu0 0
    %902 = vmatprep.subr.bf16.mxu0 0
    %903 = vmatpush1.bf16.xpose.msra.mxu0 0
    %904 = vmatprep.subr.bf16.mxu0 0
    %905 = vmatpush1.bf16.xpose.msra.mxu0 0
    %906 = vmatprep.mubr.bf16.mxu0 0
    %907 = vmatmul.mubr.bf16.gmra.mrb[0].mxu0 %v869
    %v908 = vpop.f32.mrb[0].mxu0
    %v909 = vadd.f32 0.0, %v908
    %v910 = vpop.f32.mrb[0].mxu0
    %v911 = vpop.f32.mrb[0].mxu0
    %v912 = vadd.f32 0.0, %v911
    %v913 = vpop.f32.mrb[0].mxu0
    %914 = vdwg.mxu0
    %v915 = vsel %vm409, %v858, -inf
    %916 = vmax.xlane.f32.xlu0 %v915
    %v917 = vpop.xlane.xlu0 %916
    %v918 = vsel %vm409, %v861, -inf
    %919 = vmax.xlane.f32.xlu0 %v918
    %v920 = vpop.xlane.xlu0 %919
    %v921 = vsel %vm409, %v909, -inf
    %922 = vmax.xlane.f32.xlu0 %v921
    %v923 = vpop.xlane.xlu0 %922
    %v924 = vsel %vm409, %v912, -inf
    %925 = vmax.xlane.f32.xlu0 %v924
    %v926 = vpop.xlane.xlu0 %925
    %v927 = vsub.f32 %v858, %v917
    %v928 = vsub.f32 %v861, %v920
    %v929 = vsub.f32 %v909, %v923
    %v930 = vsub.f32 %v912, %v926
    %v931 = vmul.f32 %v927, 1.442695
    %v932 = vpow.pop %v931
    %v933 = vmul.f32 %v928, 1.442695
    %v934 = vpow.pop %v933
    %v935 = vmul.f32 %v929, 1.442695
    %v936 = vpow.pop %v935
    %v937 = vmul.f32 %v930, 1.442695
    %v938 = vpow.pop %v937
    %v939 = vsel %vm409, %v932, 0.0
    %940 = vadd.xlane.f32.xlu0 %v939
    %v941 = vpop.xlane.xlu0 %940
    %v942 = vsel %vm409, %v934, 0.0
    %943 = vadd.xlane.f32.xlu0 %v942
    %v944 = vpop.xlane.xlu0 %943
    %v945 = vsel %vm409, %v936, 0.0
    %946 = vadd.xlane.f32.xlu0 %v945
    %v947 = vpop.xlane.xlu0 %946
    %v948 = vsel %vm409, %v938, 0.0
    %949 = vadd.xlane.f32.xlu0 %v948
    %v950 = vpop.xlane.xlu0 %949
    %v951 = vrcp.pop %v941
    %v952 = vrcp.pop %v944
    %v953 = vrcp.pop %v947
    %v954 = vrcp.pop %v950
    %v955 = vmul.f32 %v932, %v951
    %v956 = vmul.f32 %v934, %v952
    %v957 = vmul.f32 %v936, %v953
    %v958 = vmul.f32 %v938, %v954
    %v959 = vpack.c.bf16 %v956, %v955
    %v960 = vpack.c.bf16 %v958, %v957
    %961 = vrot.lane.b32.xlu0 %v306, 112
    %v962 = vpop.permute.xlu0 %961
    %v965 = vsel %vm409, %v959, 0
    %967 = vmatprep.subr.bf16.mxu0 0
    %968 = vmatpush1.bf16.msra.mxu0 %v962
    %969 = vmatprep.subr.bf16.mxu0 0
    %970 = vmatpush1.bf16.msra.mxu0 0
    %971 = vmatprep.subr.bf16.mxu0 0
    %972 = vmatpush1.bf16.msra.mxu0 0
    %973 = vmatprep.subr.bf16.mxu0 0
    %974 = vmatpush1.bf16.msra.mxu0 0
    %975 = vmatprep.subr.bf16.mxu0 0
    %976 = vmatpush1.bf16.msra.mxu0 0
    %977 = vmatprep.subr.bf16.mxu0 0
    %978 = vmatpush1.bf16.msra.mxu0 0
    %979 = vmatprep.subr.bf16.mxu0 0
    %980 = vmatpush1.bf16.msra.mxu0 0
    %981 = vmatprep.subr.bf16.mxu0 0
    %982 = vmatpush1.bf16.msra.mxu0 0
    %983 = vmatprep.subr.bf16.mxu0 0
    %984 = vmatpush1.bf16.msra.mxu0 0
    %985 = vmatprep.subr.bf16.mxu0 0
    %986 = vmatpush1.bf16.msra.mxu0 0
    %987 = vmatprep.subr.bf16.mxu0 0
    %988 = vmatpush1.bf16.msra.mxu0 0
    %989 = vmatprep.subr.bf16.mxu0 0
    %990 = vmatpush1.bf16.msra.mxu0 0
    %991 = vmatprep.subr.bf16.mxu0 0
    %992 = vmatpush1.bf16.msra.mxu0 0
    %993 = vmatprep.subr.bf16.mxu0 0
    %994 = vmatpush1.bf16.msra.mxu0 0
    %995 = vmatprep.subr.bf16.mxu0 0
    %996 = vmatpush1.bf16.msra.mxu0 0
    %997 = vmatprep.subr.bf16.mxu0 0
    %998 = vmatpush1.bf16.msra.mxu0 0
    %999 = vmatprep.mubr.bf16.mxu0 0
    %1000 = vmatmul.mubr.bf16.gmra.mrb[0].mxu0 %v965
    %v1001 = vpop.f32.mrb[0].mxu0
    %v1002 = vadd.f32 0.0, %v1001
    %v1003 = vpop.f32.mrb[0].mxu0
    %v1004 = vpop.f32.mrb[0].mxu0
    %v1005 = vadd.f32 0.0, %v1004
    %v1006 = vpop.f32.mrb[0].mxu0
    %1007 = vdwg.mxu0
    %1008 = vrot.lane.b32.xlu0 %v307, 112
    %v1009 = vpop.permute.xlu0 %1008
    %v1012 = vsel %vm409, %v960, 0
    %1014 = vmatprep.subr.bf16.mxu0 0
    %1015 = vmatpush1.bf16.msra.mxu0 %v1009
    %1016 = vmatprep.subr.bf16.mxu0 0
    %1017 = vmatpush1.bf16.msra.mxu0 0
    %1018 = vmatprep.subr.bf16.mxu0 0
    %1019 = vmatpush1.bf16.msra.mxu0 0
    %1020 = vmatprep.subr.bf16.mxu0 0
    %1021 = vmatpush1.bf16.msra.mxu0 0
    %1022 = vmatprep.subr.bf16.mxu0 0
    %1023 = vmatpush1.bf16.msra.mxu0 0
    %1024 = vmatprep.subr.bf16.mxu0 0
    %1025 = vmatpush1.bf16.msra.mxu0 0
    %1026 = vmatprep.subr.bf16.mxu0 0
    %1027 = vmatpush1.bf16.msra.mxu0 0
    %1028 = vmatprep.subr.bf16.mxu0 0
    %1029 = vmatpush1.bf16.msra.mxu0 0
    %1030 = vmatprep.subr.bf16.mxu0 0
    %1031 = vmatpush1.bf16.msra.mxu0 0
    %1032 = vmatprep.subr.bf16.mxu0 0
    %1033 = vmatpush1.bf16.msra.mxu0 0
    %1034 = vmatprep.subr.bf16.mxu0 0
    %1035 = vmatpush1.bf16.msra.mxu0 0
    %1036 = vmatprep.subr.bf16.mxu0 0
    %1037 = vmatpush1.bf16.msra.mxu0 0
    %1038 = vmatprep.subr.bf16.mxu0 0
    %1039 = vmatpush1.bf16.msra.mxu0 0
    %1040 = vmatprep.subr.bf16.mxu0 0
    %1041 = vmatpush1.bf16.msra.mxu0 0
    %1042 = vmatprep.subr.bf16.mxu0 0
    %1043 = vmatpush1.bf16.msra.mxu0 0
    %1044 = vmatprep.subr.bf16.mxu0 0
    %1045 = vmatpush1.bf16.msra.mxu0 0
    %1046 = vmatprep.mubr.bf16.mxu0 0
    %1047 = vmatmul.mubr.bf16.gmra.mrb[0].mxu0 %v1012
    %v1048 = vpop.f32.mrb[0].mxu0
    %v1049 = vadd.f32 0.0, %v1048
    %v1050 = vpop.f32.mrb[0].mxu0
    %v1051 = vpop.f32.mrb[0].mxu0
    %v1052 = vadd.f32 0.0, %v1051
    %v1053 = vpop.f32.mrb[0].mxu0
    %1054 = vdwg.mxu0
    %1059 = vrot.lane.b32.xlu0 %v1002, 16
    %v1060 = vpop.permute.xlu0 %1059
    %1061 = vrot.lane.b32.xlu0 %v1005, 16
    %v1062 = vpop.permute.xlu0 %1061
    %1063 = vrot.lane.b32.xlu0 %v1049, 16
    %v1064 = vpop.permute.xlu0 %1063
    %1065 = vrot.lane.b32.xlu0 %v1052, 16
    %v1066 = vpop.permute.xlu0 %1065
    %vm1071 = vcmask 195712
    %1072 = vst.msk [vmem:[#allocation2] sm:$0xff] %vm1071, %v1060
    %1073 = vst.msk [vmem:[#allocation2 + $0x8] sm:$0xff] %vm1071, %v1062
    %1074 = vst.msk [vmem:[#allocation2 + $0x10] sm:$0xff] %vm1071, %v1064
    %1075 = vst.msk [vmem:[#allocation2 + $0x18] sm:$0xff] %vm1071, %v1066
    %1076 = vrot.lane.b32.xlu0 %v304, 104
    %v1077 = vpop.permute.xlu0 %1076
    %1078 = vrot.lane.b32.xlu0 %v304, 72
    %v1079 = vpop.permute.xlu0 %1078
    %v1081 = vsel %vm311, %v1077, 0
    %v1084 = vsel %vm311, %v1079, 0
    %1086 = vmatprep.subr.bf16.mxu0 0
    %1087 = vmatpush1.bf16.xpose.msra.mxu0 %v1084
    %1088 = vmatprep.subr.bf16.mxu0 0
    %1089 = vmatpush1.bf16.xpose.msra.mxu0 0
    %1090 = vmatprep.subr.bf16.mxu0 0
    %1091 = vmatpush1.bf16.xpose.msra.mxu0 0
    %1092 = vmatprep.subr.bf16.mxu0 0
    %1093 = vmatpush1.bf16.xpose.msra.mxu0 0
    %1094 = vmatprep.subr.bf16.mxu0 0
    %1095 = vmatpush1.bf16.xpose.msra.mxu0 0
    %1096 = vmatprep.subr.bf16.mxu0 0
    %1097 = vmatpush1.bf16.xpose.msra.mxu0 0
    %1098 = vmatprep.subr.bf16.mxu0 0
    %1099 = vmatpush1.bf16.xpose.msra.mxu0 0
    %1100 = vmatprep.subr.bf16.mxu0 0
    %1101 = vmatpush1.bf16.xpose.msra.mxu0 0
    %1102 = vmatprep.subr.bf16.mxu0 0
    %1103 = vmatpush1.bf16.xpose.msra.mxu0 0
    %1104 = vmatprep.subr.bf16.mxu0 0
    %1105 = vmatpush1.bf16.xpose.msra.mxu0 0
    %1106 = vmatprep.subr.bf16.mxu0 0
    %1107 = vmatpush1.bf16.xpose.msra.mxu0 0
    %1108 = vmatprep.subr.bf16.mxu0 0
    %1109 = vmatpush1.bf16.xpose.msra.mxu0 0
    %1110 = vmatprep.subr.bf16.mxu0 0
    %1111 = vmatpush1.bf16.xpose.msra.mxu0 0
    %1112 = vmatprep.subr.bf16.mxu0 0
    %1113 = vmatpush1.bf16.xpose.msra.mxu0 0
    %1114 = vmatprep.subr.bf16.mxu0 0
    %1115 = vmatpush1.bf16.xpose.msra.mxu0 0
    %1116 = vmatprep.subr.bf16.mxu0 0
    %1117 = vmatpush1.bf16.xpose.msra.mxu0 0
    %1118 = vmatprep.mubr.bf16.mxu0 0
    %1119 = vmatmul.mubr.bf16.gmra.mrb[0].mxu0 %v1081
    %v1120 = vpop.f32.mrb[0].mxu0
    %v1121 = vadd.f32 0.0, %v1120
    %v1122 = vpop.f32.mrb[0].mxu0
    %v1123 = vpop.f32.mrb[0].mxu0
    %v1124 = vadd.f32 0.0, %v1123
    %v1125 = vpop.f32.mrb[0].mxu0
    %1126 = vdwg.mxu0
    %1127 = vrot.lane.b32.xlu0 %v305, 104
    %v1128 = vpop.permute.xlu0 %1127
    %1129 = vrot.lane.b32.xlu0 %v305, 72
    %v1130 = vpop.permute.xlu0 %1129
    %v1132 = vsel %vm311, %v1128, 0
    %v1135 = vsel %vm311, %v1130, 0
    %1137 = vmatprep.subr.bf16.mxu0 0
    %1138 = vmatpush1.bf16.xpose.msra.mxu0 %v1135
    %1139 = vmatprep.subr.bf16.mxu0 0
    %1140 = vmatpush1.bf16.xpose.msra.mxu0 0
    %1141 = vmatprep.subr.bf16.mxu0 0
    %1142 = vmatpush1.bf16.xpose.msra.mxu0 0
    %1143 = vmatprep.subr.bf16.mxu0 0
    %1144 = vmatpush1.bf16.xpose.msra.mxu0 0
    %1145 = vmatprep.subr.bf16.mxu0 0
    %1146 = vmatpush1.bf16.xpose.msra.mxu0 0
    %1147 = vmatprep.subr.bf16.mxu0 0
    %1148 = vmatpush1.bf16.xpose.msra.mxu0 0
    %1149 = vmatprep.subr.bf16.mxu0 0
    %1150 = vmatpush1.bf16.xpose.msra.mxu0 0
    %1151 = vmatprep.subr.bf16.mxu0 0
    %1152 = vmatpush1.bf16.xpose.msra.mxu0 0
    %1153 = vmatprep.subr.bf16.mxu0 0
    %1154 = vmatpush1.bf16.xpose.msra.mxu0 0
    %1155 = vmatprep.subr.bf16.mxu0 0
    %1156 = vmatpush1.bf16.xpose.msra.mxu0 0
    %1157 = vmatprep.subr.bf16.mxu0 0
    %1158 = vmatpush1.bf16.xpose.msra.mxu0 0
    %1159 = vmatprep.subr.bf16.mxu0 0
    %1160 = vmatpush1.bf16.xpose.msra.mxu0 0
    %1161 = vmatprep.subr.bf16.mxu0 0
    %1162 = vmatpush1.bf16.xpose.msra.mxu0 0
    %1163 = vmatprep.subr.bf16.mxu0 0
    %1164 = vmatpush1.bf16.xpose.msra.mxu0 0
    %1165 = vmatprep.subr.bf16.mxu0 0
    %1166 = vmatpush1.bf16.xpose.msra.mxu0 0
    %1167 = vmatprep.subr.bf16.mxu0 0
    %1168 = vmatpush1.bf16.xpose.msra.mxu0 0
    %1169 = vmatprep.mubr.bf16.mxu0 0
    %1170 = vmatmul.mubr.bf16.gmra.mrb[0].mxu0 %v1132
    %v1171 = vpop.f32.mrb[0].mxu0
    %v1172 = vadd.f32 0.0, %v1171
    %v1173 = vpop.f32.mrb[0].mxu0
    %v1174 = vpop.f32.mrb[0].mxu0
    %v1175 = vadd.f32 0.0, %v1174
    %v1176 = vpop.f32.mrb[0].mxu0
    %1177 = vdwg.mxu0
    %v1178 = vsel %vm409, %v1121, -inf
    %1179 = vmax.xlane.f32.xlu0 %v1178
    %v1180 = vpop.xlane.xlu0 %1179
    %v1181 = vsel %vm409, %v1124, -inf
    %1182 = vmax.xlane.f32.xlu0 %v1181
    %v1183 = vpop.xlane.xlu0 %1182
    %v1184 = vsel %vm409, %v1172, -inf
    %1185 = vmax.xlane.f32.xlu0 %v1184
    %v1186 = vpop.xlane.xlu0 %1185
    %v1187 = vsel %vm409, %v1175, -inf
    %1188 = vmax.xlane.f32.xlu0 %v1187
    %v1189 = vpop.xlane.xlu0 %1188
    %v1190 = vsub.f32 %v1121, %v1180
    %v1191 = vsub.f32 %v1124, %v1183
    %v1192 = vsub.f32 %v1172, %v1186
    %v1193 = vsub.f32 %v1175, %v1189
    %v1194 = vmul.f32 %v1190, 1.442695
    %v1195 = vpow.pop %v1194
    %v1196 = vmul.f32 %v1191, 1.442695
    %v1197 = vpow.pop %v1196
    %v1198 = vmul.f32 %v1192, 1.442695
    %v1199 = vpow.pop %v1198
    %v1200 = vmul.f32 %v1193, 1.442695
    %v1201 = vpow.pop %v1200
    %v1202 = vsel %vm409, %v1195, 0.0
    %1203 = vadd.xlane.f32.xlu0 %v1202
    %v1204 = vpop.xlane.xlu0 %1203
    %v1205 = vsel %vm409, %v1197, 0.0
    %1206 = vadd.xlane.f32.xlu0 %v1205
    %v1207 = vpop.xlane.xlu0 %1206
    %v1208 = vsel %vm409, %v1199, 0.0
    %1209 = vadd.xlane.f32.xlu0 %v1208
    %v1210 = vpop.xlane.xlu0 %1209
    %v1211 = vsel %vm409, %v1201, 0.0
    %1212 = vadd.xlane.f32.xlu0 %v1211
    %v1213 = vpop.xlane.xlu0 %1212
    %v1214 = vrcp.pop %v1204
    %v1215 = vrcp.pop %v1207
    %v1216 = vrcp.pop %v1210
    %v1217 = vrcp.pop %v1213
    %v1218 = vmul.f32 %v1195, %v1214
    %v1219 = vmul.f32 %v1197, %v1215
    %v1220 = vmul.f32 %v1199, %v1216
    %v1221 = vmul.f32 %v1201, %v1217
    %v1222 = vpack.c.bf16 %v1219, %v1218
    %v1223 = vpack.c.bf16 %v1221, %v1220
    %1224 = vrot.lane.b32.xlu0 %v306, 104
    %v1225 = vpop.permute.xlu0 %1224
    %v1228 = vsel %vm409, %v1222, 0
    %1230 = vmatprep.subr.bf16.mxu0 0
    %1231 = vmatpush1.bf16.msra.mxu0 %v1225
    %1232 = vmatprep.subr.bf16.mxu0 0
    %1233 = vmatpush1.bf16.msra.mxu0 0
    %1234 = vmatprep.subr.bf16.mxu0 0
    %1235 = vmatpush1.bf16.msra.mxu0 0
    %1236 = vmatprep.subr.bf16.mxu0 0
    %1237 = vmatpush1.bf16.msra.mxu0 0
    %1238 = vmatprep.subr.bf16.mxu0 0
    %1239 = vmatpush1.bf16.msra.mxu0 0
    %1240 = vmatprep.subr.bf16.mxu0 0
    %1241 = vmatpush1.bf16.msra.mxu0 0
    %1242 = vmatprep.subr.bf16.mxu0 0
    %1243 = vmatpush1.bf16.msra.mxu0 0
    %1244 = vmatprep.subr.bf16.mxu0 0
    %1245 = vmatpush1.bf16.msra.mxu0 0
    %1246 = vmatprep.subr.bf16.mxu0 0
    %1247 = vmatpush1.bf16.msra.mxu0 0
    %1248 = vmatprep.subr.bf16.mxu0 0
    %1249 = vmatpush1.bf16.msra.mxu0 0
    %1250 = vmatprep.subr.bf16.mxu0 0
    %1251 = vmatpush1.bf16.msra.mxu0 0
    %1252 = vmatprep.subr.bf16.mxu0 0
    %1253 = vmatpush1.bf16.msra.mxu0 0
    %1254 = vmatprep.subr.bf16.mxu0 0
    %1255 = vmatpush1.bf16.msra.mxu0 0
    %1256 = vmatprep.subr.bf16.mxu0 0
    %1257 = vmatpush1.bf16.msra.mxu0 0
    %1258 = vmatprep.subr.bf16.mxu0 0
    %1259 = vmatpush1.bf16.msra.mxu0 0
    %1260 = vmatprep.subr.bf16.mxu0 0
    %1261 = vmatpush1.bf16.msra.mxu0 0
    %1262 = vmatprep.mubr.bf16.mxu0 0
    %1263 = vmatmul.mubr.bf16.gmra.mrb[0].mxu0 %v1228
    %v1264 = vpop.f32.mrb[0].mxu0
    %v1265 = vadd.f32 0.0, %v1264
    %v1266 = vpop.f32.mrb[0].mxu0
    %v1267 = vpop.f32.mrb[0].mxu0
    %v1268 = vadd.f32 0.0, %v1267
    %v1269 = vpop.f32.mrb[0].mxu0
    %1270 = vdwg.mxu0
    %1271 = vrot.lane.b32.xlu0 %v307, 104
    %v1272 = vpop.permute.xlu0 %1271
    %v1275 = vsel %vm409, %v1223, 0
    %1277 = vmatprep.subr.bf16.mxu0 0
    %1278 = vmatpush1.bf16.msra.mxu0 %v1272
    %1279 = vmatprep.subr.bf16.mxu0 0
    %1280 = vmatpush1.bf16.msra.mxu0 0
    %1281 = vmatprep.subr.bf16.mxu0 0
    %1282 = vmatpush1.bf16.msra.mxu0 0
    %1283 = vmatprep.subr.bf16.mxu0 0
    %1284 = vmatpush1.bf16.msra.mxu0 0
    %1285 = vmatprep.subr.bf16.mxu0 0
    %1286 = vmatpush1.bf16.msra.mxu0 0
    %1287 = vmatprep.subr.bf16.mxu0 0
    %1288 = vmatpush1.bf16.msra.mxu0 0
    %1289 = vmatprep.subr.bf16.mxu0 0
    %1290 = vmatpush1.bf16.msra.mxu0 0
    %1291 = vmatprep.subr.bf16.mxu0 0
    %1292 = vmatpush1.bf16.msra.mxu0 0
    %1293 = vmatprep.subr.bf16.mxu0 0
    %1294 = vmatpush1.bf16.msra.mxu0 0
    %1295 = vmatprep.subr.bf16.mxu0 0
    %1296 = vmatpush1.bf16.msra.mxu0 0
    %1297 = vmatprep.subr.bf16.mxu0 0
    %1298 = vmatpush1.bf16.msra.mxu0 0
    %1299 = vmatprep.subr.bf16.mxu0 0
    %1300 = vmatpush1.bf16.msra.mxu0 0
    %1301 = vmatprep.subr.bf16.mxu0 0
    %1302 = vmatpush1.bf16.msra.mxu0 0
    %1303 = vmatprep.subr.bf16.mxu0 0
    %1304 = vmatpush1.bf16.msra.mxu0 0
    %1305 = vmatprep.subr.bf16.mxu0 0
    %1306 = vmatpush1.bf16.msra.mxu0 0
    %1307 = vmatprep.subr.bf16.mxu0 0
    %1308 = vmatpush1.bf16.msra.mxu0 0
    %1309 = vmatprep.mubr.bf16.mxu0 0
    %1310 = vmatmul.mubr.bf16.gmra.mrb[0].mxu0 %v1275
    %v1311 = vpop.f32.mrb[0].mxu0
    %v1312 = vadd.f32 0.0, %v1311
    %v1313 = vpop.f32.mrb[0].mxu0
    %v1314 = vpop.f32.mrb[0].mxu0
    %v1315 = vadd.f32 0.0, %v1314
    %v1316 = vpop.f32.mrb[0].mxu0
    %1317 = vdwg.mxu0
    %1322 = vrot.lane.b32.xlu0 %v1265, 24
    %v1323 = vpop.permute.xlu0 %1322
    %1324 = vrot.lane.b32.xlu0 %v1268, 24
    %v1325 = vpop.permute.xlu0 %1324
    %1326 = vrot.lane.b32.xlu0 %v1312, 24
    %v1327 = vpop.permute.xlu0 %1326
    %1328 = vrot.lane.b32.xlu0 %v1315, 24
    %v1329 = vpop.permute.xlu0 %1328
    %vm1334 = vcmask 261312
    %1335 = vst.msk [vmem:[#allocation2] sm:$0xff] %vm1334, %v1323
    %1336 = vst.msk [vmem:[#allocation2 + $0x8] sm:$0xff] %vm1334, %v1325
    %1337 = vst.msk [vmem:[#allocation2 + $0x10] sm:$0xff] %vm1334, %v1327
    %1338 = vst.msk [vmem:[#allocation2 + $0x18] sm:$0xff] %vm1334, %v1329
    %v1339 = vld [vmem:[#allocation2] sm:$0xff]
    %v1340 = vld [vmem:[#allocation2 + $0x8] sm:$0xff]
    %v1341 = vld [vmem:[#allocation2 + $0x10] sm:$0xff]
    %v1342 = vld [vmem:[#allocation2 + $0x18] sm:$0xff]
    %v1343 = vpack.c.bf16 %v1340, %v1339
    %v1344 = vpack.c.bf16 %v1342, %v1341
    %v1345 = vld [vmem:[#allocation8] sm:$0xf]
    %v1346 = vld [vmem:[#allocation8 + $0x4] sm:$0xf]
    %v1347 = vld [vmem:[#allocation8 + $0x8] sm:$0xf]
    %v1348 = vld [vmem:[#allocation8 + $0xc] sm:$0xf]
    %v1349 = vld [vmem:[#allocation9] sm:$0x1]
    %v1351 = vlaneseq
    %v1352 = vshrl.u32 %v1351, 7
    %v1353 = vsub.s32 0, %v1352
    %v1354 = vrot.slane %v1349, %v1353
    %v1360 = vunpack.c.l.b16 %v1345
    %v1361 = vunpack.c.l.b16 %v1346
    %v1362 = vunpack.c.l.b16 %v1347
    %v1363 = vunpack.c.l.b16 %v1348
    %v1364 = vpack.c.b16 %v1361, %v1360
    %v1365 = vpack.c.b16 %v1363, %v1362
    %v1369 = vsel %vm170, %v1343, 0
    %v1372 = vsel %vm170, %v1344, 0
    %1374 = vmatprep.subr.bf16.mxu0 0
    %1375 = vmatpush1.bf16.msra.mxu0 %v1364
    %1376 = vmatprep.subr.bf16.mxu0 0
    %1377 = vmatpush1.bf16.msra.mxu0 %v1365
    %1378 = vmatprep.subr.bf16.mxu0 0
    %1379 = vmatpush1.bf16.msra.mxu0 0
    %1380 = vmatprep.subr.bf16.mxu0 0
    %1381 = vmatpush1.bf16.msra.mxu0 0
    %1382 = vmatprep.subr.bf16.mxu0 0
    %1383 = vmatpush1.bf16.msra.mxu0 0
    %1384 = vmatprep.subr.bf16.mxu0 0
    %1385 = vmatpush1.bf16.msra.mxu0 0
    %1386 = vmatprep.subr.bf16.mxu0 0
    %1387 = vmatpush1.bf16.msra.mxu0 0
    %1388 = vmatprep.subr.bf16.mxu0 0
    %1389 = vmatpush1.bf16.msra.mxu0 0
    %1390 = vmatprep.subr.bf16.mxu0 0
    %1391 = vmatpush1.bf16.msra.mxu0 0
    %1392 = vmatprep.subr.bf16.mxu0 0
    %1393 = vmatpush1.bf16.msra.mxu0 0
    %1394 = vmatprep.subr.bf16.mxu0 0
    %1395 = vmatpush1.bf16.msra.mxu0 0
    %1396 = vmatprep.subr.bf16.mxu0 0
    %1397 = vmatpush1.bf16.msra.mxu0 0
    %1398 = vmatprep.subr.bf16.mxu0 0
    %1399 = vmatpush1.bf16.msra.mxu0 0
    %1400 = vmatprep.subr.bf16.mxu0 0
    %1401 = vmatpush1.bf16.msra.mxu0 0
    %1402 = vmatprep.subr.bf16.mxu0 0
    %1403 = vmatpush1.bf16.msra.mxu0 0
    %1404 = vmatprep.subr.bf16.mxu0 0
    %1405 = vmatpush1.bf16.msra.mxu0 0
    %1406 = vmatprep.mubr.bf16.mxu0 0
    %1407 = vmatmul.mubr.bf16.gmra.mrb[0].mxu0 %v1369
    %v1408 = vpop.f32.mrb[0].mxu0
    %v1409 = vadd.f32 %v1354, %v1408
    %v1410 = vpop.f32.mrb[0].mxu0
    %v1411 = vpop.f32.mrb[0].mxu0
    %v1412 = vadd.f32 %v1354, %v1411
    %v1413 = vpop.f32.mrb[0].mxu0
    %1414 = vmatprep.mubr.bf16.mxu0 0
    %1415 = vmatmul.mubr.bf16.gmra.mrb[0].mxu0 %v1372
    %v1416 = vpop.f32.mrb[0].mxu0
    %v1417 = vadd.f32 %v1354, %v1416
    %v1418 = vpop.f32.mrb[0].mxu0
    %v1419 = vpop.f32.mrb[0].mxu0
    %v1420 = vadd.f32 %v1354, %v1419
    %v1421 = vpop.f32.mrb[0].mxu0
    %1422 = vdwg.mxu0
    %v1423 = vadd.f32 %v131, %v1409
    %v1424 = vadd.f32 %v132, %v1412
    %v1425 = vadd.f32 %v133, %v1417
    %v1426 = vadd.f32 %v134, %v1420
    %v1427 = vld [vmem:[#allocation11] sm:$0x1]
    %v1428 = vld [vmem:[#allocation12] sm:$0x1]
    %v1429 = vsel %vm170, %v1423, 0.0
    %1430 = vadd.xlane.f32.xlu0 %v1429
    %v1431 = vpop.xlane.xlu0 %1430
    %v1432 = vsel %vm170, %v1424, 0.0
    %1433 = vadd.xlane.f32.xlu0 %v1432
    %v1434 = vpop.xlane.xlu0 %1433
    %v1435 = vsel %vm170, %v1425, 0.0
    %1436 = vadd.xlane.f32.xlu0 %v1435
    %v1437 = vpop.xlane.xlu0 %1436
    %v1438 = vsel %vm170, %v1426, 0.0
    %1439 = vadd.xlane.f32.xlu0 %v1438
    %v1440 = vpop.xlane.xlu0 %1439
    %v1441 = vrcp.pop 32.0
    %v1442 = vmul.f32 %v1431, %v1441
    %v1443 = vmul.f32 %v1434, %v1441
    %v1444 = vmul.f32 %v1437, %v1441
    %v1445 = vmul.f32 %v1440, %v1441
    %v1446 = vsub.f32 %v1423, %v1442
    %v1447 = vsub.f32 %v1424, %v1443
    %v1448 = vsub.f32 %v1425, %v1444
    %v1449 = vsub.f32 %v1426, %v1445
    %v1450 = vmul.f32 %v1446, %v1446
    %v1451 = vmul.f32 %v1447, %v1447
    %v1452 = vmul.f32 %v1448, %v1448
    %v1453 = vmul.f32 %v1449, %v1449
    %v1454 = vsel %vm170, %v1450, 0.0
    %1455 = vadd.xlane.f32.xlu0 %v1454
    %v1456 = vpop.xlane.xlu0 %1455
    %v1457 = vsel %vm170, %v1451, 0.0
    %1458 = vadd.xlane.f32.xlu0 %v1457
    %v1459 = vpop.xlane.xlu0 %1458
    %v1460 = vsel %vm170, %v1452, 0.0
    %1461 = vadd.xlane.f32.xlu0 %v1460
    %v1462 = vpop.xlane.xlu0 %1461
    %v1463 = vsel %vm170, %v1453, 0.0
    %1464 = vadd.xlane.f32.xlu0 %v1463
    %v1465 = vpop.xlane.xlu0 %1464
    %v1466 = vmul.f32 %v1456, %v1441
    %v1467 = vmul.f32 %v1459, %v1441
    %v1468 = vmul.f32 %v1462, %v1441
    %v1469 = vmul.f32 %v1465, %v1441
    %v1470 = vadd.f32 %v1466, 1e-05
    %v1471 = vadd.f32 %v1467, 1e-05
    %v1472 = vadd.f32 %v1468, 1e-05
    %v1473 = vadd.f32 %v1469, 1e-05
    %v1474 = vrsqrt.pop %v1470
    %v1475 = vrsqrt.pop %v1471
    %v1476 = vrsqrt.pop %v1472
    %v1477 = vrsqrt.pop %v1473
    %v1478 = vmul.f32 %v1446, %v1474
    %v1479 = vmul.f32 %v1447, %v1475
    %v1480 = vmul.f32 %v1448, %v1476
    %v1481 = vmul.f32 %v1449, %v1477
    %v1483 = vlaneseq
    %v1484 = vshrl.u32 %v1483, 7
    %v1485 = vsub.s32 0, %v1484
    %v1486 = vrot.slane %v1427, %v1485
    %v1488 = vmul.f32 %v1478, %v1486
    %v1489 = vmul.f32 %v1479, %v1486
    %v1490 = vmul.f32 %v1480, %v1486
    %v1491 = vmul.f32 %v1481, %v1486
    %v1493 = vlaneseq
    %v1494 = vshrl.u32 %v1493, 7
    %v1495 = vsub.s32 0, %v1494
    %v1496 = vrot.slane %v1428, %v1495
    %v1498 = vadd.f32 %v1488, %v1496
    %v1499 = vadd.f32 %v1489, %v1496
    %v1500 = vadd.f32 %v1490, %v1496
    %v1501 = vadd.f32 %v1491, %v1496
    %v1502 = vpack.c.bf16 %v1499, %v1498
    %v1503 = vpack.c.bf16 %v1501, %v1500
    %v1504 = vld [vmem:[%s11] sm:$0x1]
    %v1505 = vld [vmem:[%s10] sm:$0xf]
    %v1506 = vld [vmem:[%s10 + $0x4] sm:$0xf]
    %v1507 = vld [vmem:[%s10 + $0x8] sm:$0xf]
    %v1508 = vld [vmem:[%s10 + $0xc] sm:$0xf]
    %v1510 = vlaneseq
    %v1511 = vshrl.u32 %v1510, 7
    %v1512 = vsub.s32 0, %v1511
    %v1513 = vrot.slane %v1504, %v1512
    %v1519 = vunpack.c.l.b16 %v1505
    %v1520 = vunpack.c.l.b16 %v1506
    %v1521 = vunpack.c.l.b16 %v1507
    %v1522 = vunpack.c.l.b16 %v1508
    %v1523 = vpack.c.b16 %v1520, %v1519
    %v1524 = vpack.c.b16 %v1522, %v1521
    %v1528 = vsel %vm170, %v1502, 0
    %v1531 = vsel %vm170, %v1503, 0
    %1533 = vmatprep.subr.bf16.mxu0 0
    %1534 = vmatpush1.bf16.msra.mxu0 %v1523
    %1535 = vmatprep.subr.bf16.mxu0 0
    %1536 = vmatpush1.bf16.msra.mxu0 %v1524
    %1537 = vmatprep.subr.bf16.mxu0 0
    %1538 = vmatpush1.bf16.msra.mxu0 0
    %1539 = vmatprep.subr.bf16.mxu0 0
    %1540 = vmatpush1.bf16.msra.mxu0 0
    %1541 = vmatprep.subr.bf16.mxu0 0
    %1542 = vmatpush1.bf16.msra.mxu0 0
    %1543 = vmatprep.subr.bf16.mxu0 0
    %1544 = vmatpush1.bf16.msra.mxu0 0
    %1545 = vmatprep.subr.bf16.mxu0 0
    %1546 = vmatpush1.bf16.msra.mxu0 0
    %1547 = vmatprep.subr.bf16.mxu0 0
    %1548 = vmatpush1.bf16.msra.mxu0 0
    %1549 = vmatprep.subr.bf16.mxu0 0
    %1550 = vmatpush1.bf16.msra.mxu0 0
    %1551 = vmatprep.subr.bf16.mxu0 0
    %1552 = vmatpush1.bf16.msra.mxu0 0
    %1553 = vmatprep.subr.bf16.mxu0 0
    %1554 = vmatpush1.bf16.msra.mxu0 0
    %1555 = vmatprep.subr.bf16.mxu0 0
    %1556 = vmatpush1.bf16.msra.mxu0 0
    %1557 = vmatprep.subr.bf16.mxu0 0
    %1558 = vmatpush1.bf16.msra.mxu0 0
    %1559 = vmatprep.subr.bf16.mxu0 0
    %1560 = vmatpush1.bf16.msra.mxu0 0
    %1561 = vmatprep.subr.bf16.mxu0 0
    %1562 = vmatpush1.bf16.msra.mxu0 0
    %1563 = vmatprep.subr.bf16.mxu0 0
    %1564 = vmatpush1.bf16.msra.mxu0 0
    %1565 = vmatprep.mubr.bf16.mxu0 0
    %1566 = vmatmul.mubr.bf16.gmra.mrb[0].mxu0 %v1528
    %v1567 = vpop.f32.mrb[0].mxu0
    %v1568 = vadd.f32 %v1513, %v1567
    %v1569 = vpop.f32.mrb[0].mxu0
    %v1570 = vpop.f32.mrb[0].mxu0
    %v1571 = vadd.f32 %v1513, %v1570
    %v1572 = vpop.f32.mrb[0].mxu0
    %1573 = vmatprep.mubr.bf16.mxu0 0
    %1574 = vmatmul.mubr.bf16.gmra.mrb[0].mxu0 %v1531
    %v1575 = vpop.f32.mrb[0].mxu0
    %v1576 = vadd.f32 %v1513, %v1575
    %v1577 = vpop.f32.mrb[0].mxu0
    %v1578 = vpop.f32.mrb[0].mxu0
    %v1579 = vadd.f32 %v1513, %v1578
    %v1580 = vpop.f32.mrb[0].mxu0
    %1581 = vdwg.mxu0
    %v1582 = vmax.f32 %v1568, 0.0
    %v1583 = vmax.f32 %v1571, 0.0
    %v1584 = vmax.f32 %v1576, 0.0
    %v1585 = vmax.f32 %v1579, 0.0
    %v1586 = vpack.c.bf16 %v1583, %v1582
    %v1587 = vpack.c.bf16 %v1585, %v1584
    %v1588 = vld [vmem:[%s12] sm:$0xf]
    %v1589 = vld [vmem:[%s12 + $0x4] sm:$0xf]
    %v1590 = vld [vmem:[%s12 + $0x8] sm:$0xf]
    %v1591 = vld [vmem:[%s12 + $0xc] sm:$0xf]
    %v1592 = vld [vmem:[%s12 + $0x10] sm:$0xf]
    %v1593 = vld [vmem:[%s12 + $0x14] sm:$0xf]
    %v1594 = vld [vmem:[%s12 + $0x18] sm:$0xf]
    %v1595 = vld [vmem:[%s12 + $0x1c] sm:$0xf]
    %v1596 = vld [vmem:[%s13] sm:$0x1]
    %v1598 = vlaneseq
    %v1599 = vshrl.u32 %v1598, 7
    %v1600 = vsub.s32 0, %v1599
    %v1601 = vrot.slane %v1596, %v1600
    %v1611 = vunpack.c.l.b16 %v1588
    %v1612 = vunpack.c.l.b16 %v1589
    %v1613 = vunpack.c.l.b16 %v1590
    %v1614 = vunpack.c.l.b16 %v1591
    %v1615 = vunpack.c.l.b16 %v1592
    %v1616 = vunpack.c.l.b16 %v1593
    %v1617 = vunpack.c.l.b16 %v1594
    %v1618 = vunpack.c.l.b16 %v1595
    %v1619 = vpack.c.b16 %v1612, %v1611
    %v1620 = vpack.c.b16 %v1614, %v1613
    %v1621 = vpack.c.b16 %v1616, %v1615
    %v1622 = vpack.c.b16 %v1618, %v1617
    %vm1627 = vcmask 523264
    %v1629 = vsel %vm1627, %v1586, 0
    %v1632 = vsel %vm1627, %v1587, 0
    %1634 = vmatprep.subr.bf16.mxu0 0
    %1635 = vmatpush1.bf16.msra.mxu0 %v1619
    %1636 = vmatprep.subr.bf16.mxu0 0
    %1637 = vmatpush1.bf16.msra.mxu0 %v1620
    %1638 = vmatprep.subr.bf16.mxu0 0
    %1639 = vmatpush1.bf16.msra.mxu0 %v1621
    %1640 = vmatprep.subr.bf16.mxu0 0
    %1641 = vmatpush1.bf16.msra.mxu0 %v1622
    %1642 = vmatprep.subr.bf16.mxu0 0
    %1643 = vmatpush1.bf16.msra.mxu0 0
    %1644 = vmatprep.subr.bf16.mxu0 0
    %1645 = vmatpush1.bf16.msra.mxu0 0
    %1646 = vmatprep.subr.bf16.mxu0 0
    %1647 = vmatpush1.bf16.msra.mxu0 0
    %1648 = vmatprep.subr.bf16.mxu0 0
    %1649 = vmatpush1.bf16.msra.mxu0 0
    %1650 = vmatprep.subr.bf16.mxu0 0
    %1651 = vmatpush1.bf16.msra.mxu0 0
    %1652 = vmatprep.subr.bf16.mxu0 0
    %1653 = vmatpush1.bf16.msra.mxu0 0
    %1654 = vmatprep.subr.bf16.mxu0 0
    %1655 = vmatpush1.bf16.msra.mxu0 0
    %1656 = vmatprep.subr.bf16.mxu0 0
    %1657 = vmatpush1.bf16.msra.mxu0 0
    %1658 = vmatprep.subr.bf16.mxu0 0
    %1659 = vmatpush1.bf16.msra.mxu0 0
    %1660 = vmatprep.subr.bf16.mxu0 0
    %1661 = vmatpush1.bf16.msra.mxu0 0
    %1662 = vmatprep.subr.bf16.mxu0 0
    %1663 = vmatpush1.bf16.msra.mxu0 0
    %1664 = vmatprep.subr.bf16.mxu0 0
    %1665 = vmatpush1.bf16.msra.mxu0 0
    %1666 = vmatprep.mubr.bf16.mxu0 0
    %1667 = vmatmul.mubr.bf16.gmra.mrb[0].mxu0 %v1629
    %v1668 = vpop.f32.mrb[0].mxu0
    %v1669 = vadd.f32 %v1601, %v1668
    %v1670 = vpop.f32.mrb[0].mxu0
    %v1671 = vpop.f32.mrb[0].mxu0
    %v1672 = vadd.f32 %v1601, %v1671
    %v1673 = vpop.f32.mrb[0].mxu0
    %1674 = vmatprep.mubr.bf16.mxu0 0
    %1675 = vmatmul.mubr.bf16.gmra.mrb[0].mxu0 %v1632
    %v1676 = vpop.f32.mrb[0].mxu0
    %v1677 = vadd.f32 %v1601, %v1676
    %v1678 = vpop.f32.mrb[0].mxu0
    %v1679 = vpop.f32.mrb[0].mxu0
    %v1680 = vadd.f32 %v1601, %v1679
    %v1681 = vpop.f32.mrb[0].mxu0
    %1682 = vdwg.mxu0
    %v1683 = vadd.f32 %v1498, %v1669
    %v1684 = vadd.f32 %v1499, %v1672
    %v1685 = vadd.f32 %v1500, %v1677
    %v1686 = vadd.f32 %v1501, %v1680
    %v1687 = vld [vmem:[%s14] sm:$0x1]
    %v1688 = vld [vmem:[%s15] sm:$0x1]
    %v1689 = vsel %vm170, %v1683, 0.0
    %1690 = vadd.xlane.f32.xlu0 %v1689
    %v1691 = vpop.xlane.xlu0 %1690
    %v1692 = vsel %vm170, %v1684, 0.0
    %1693 = vadd.xlane.f32.xlu0 %v1692
    %v1694 = vpop.xlane.xlu0 %1693
    %v1695 = vsel %vm170, %v1685, 0.0
    %1696 = vadd.xlane.f32.xlu0 %v1695
    %v1697 = vpop.xlane.xlu0 %1696
    %v1698 = vsel %vm170, %v1686, 0.0
    %1699 = vadd.xlane.f32.xlu0 %v1698
    %v1700 = vpop.xlane.xlu0 %1699
    %v1701 = vmul.f32 %v1691, %v1441
    %v1702 = vmul.f32 %v1694, %v1441
    %v1703 = vmul.f32 %v1697, %v1441
    %v1704 = vmul.f32 %v1700, %v1441
    %v1705 = vsub.f32 %v1683, %v1701
    %v1706 = vsub.f32 %v1684, %v1702
    %v1707 = vsub.f32 %v1685, %v1703
    %v1708 = vsub.f32 %v1686, %v1704
    %v1709 = vmul.f32 %v1705, %v1705
    %v1710 = vmul.f32 %v1706, %v1706
    %v1711 = vmul.f32 %v1707, %v1707
    %v1712 = vmul.f32 %v1708, %v1708
    %v1713 = vsel %vm170, %v1709, 0.0
    %1714 = vadd.xlane.f32.xlu0 %v1713
    %v1715 = vpop.xlane.xlu0 %1714
    %v1716 = vsel %vm170, %v1710, 0.0
    %1717 = vadd.xlane.f32.xlu0 %v1716
    %v1718 = vpop.xlane.xlu0 %1717
    %v1719 = vsel %vm170, %v1711, 0.0
    %1720 = vadd.xlane.f32.xlu0 %v1719
    %v1721 = vpop.xlane.xlu0 %1720
    %v1722 = vsel %vm170, %v1712, 0.0
    %1723 = vadd.xlane.f32.xlu0 %v1722
    %v1724 = vpop.xlane.xlu0 %1723
    %v1725 = vmul.f32 %v1715, %v1441
    %v1726 = vmul.f32 %v1718, %v1441
    %v1727 = vmul.f32 %v1721, %v1441
    %v1728 = vmul.f32 %v1724, %v1441
    %v1729 = vadd.f32 %v1725, 1e-05
    %v1730 = vadd.f32 %v1726, 1e-05
    %v1731 = vadd.f32 %v1727, 1e-05
    %v1732 = vadd.f32 %v1728, 1e-05
    %v1733 = vrsqrt.pop %v1729
    %v1734 = vrsqrt.pop %v1730
    %v1735 = vrsqrt.pop %v1731
    %v1736 = vrsqrt.pop %v1732
    %v1737 = vmul.f32 %v1705, %v1733
    %v1738 = vmul.f32 %v1706, %v1734
    %v1739 = vmul.f32 %v1707, %v1735
    %v1740 = vmul.f32 %v1708, %v1736
    %v1742 = vlaneseq
    %v1743 = vshrl.u32 %v1742, 7
    %v1744 = vsub.s32 0, %v1743
    %v1745 = vrot.slane %v1687, %v1744
    %v1747 = vmul.f32 %v1737, %v1745
    %v1748 = vmul.f32 %v1738, %v1745
    %v1749 = vmul.f32 %v1739, %v1745
    %v1750 = vmul.f32 %v1740, %v1745
    %v1752 = vlaneseq
    %v1753 = vshrl.u32 %v1752, 7
    %v1754 = vsub.s32 0, %v1753
    %v1755 = vrot.slane %v1688, %v1754
    %v1757 = vadd.f32 %v1747, %v1755
    %v1758 = vadd.f32 %v1748, %v1755
    %v1759 = vadd.f32 %v1749, %v1755
    %v1760 = vadd.f32 %v1750, %v1755
    %1761 = vst.msk [vmem:[#allocation14] sm:$0xff] %vm170, %v1757
    %1762 = vst.msk [vmem:[#allocation14 + $0x8] sm:$0xff] %vm170, %v1758
    %1763 = vst.msk [vmem:[#allocation14 + $0x10] sm:$0xff] %vm170, %v1759
    %1764 = vst.msk [vmem:[#allocation14 + $0x18] sm:$0xff] %vm170, %v1760
    // Predicated region
    $region90: #{tpu_custom_call.1} parent=1 // pred_check
      _
    $region91: #{tpu_custom_call.1} parent=1 // pred_check_branch
      %1766 = sbr.rel (0) target = $region93
    $region92: #{tpu_custom_call.1} parent=1 // pred_region
      %s1768 = ssub.s32 512, 512
      %1769 = vsyncadd [#allocation5], %s1768
      %s1770 = sshll.u32 [#allocation14], 4
      %s1771 = int_to_ptr.vmem [resolvable:$true] %s1770
      %1776 = dma.vmem_to_hbm [thread:$0]  %s1771, 512, %s16, [#allocation5], 128, 128, 8
    $region93: #{tpu_custom_call.1} parent=1 // pred_fallthru
      _
    // Predicated region
    $region94: #{tpu_custom_call.1} parent=1 // pred_check
      _
    $region95: #{tpu_custom_call.1} parent=1 // pred_check_branch
      %1778 = sbr.rel (0) target = $region97
    $region96: #{tpu_custom_call.1} parent=1 // pred_region
      %1779 = dma.done [#allocation5], 512
    $region97: #{tpu_custom_call.1} parent=1 // pred_fallthru
      _
    %1780 = vsyncpa [#allocation4], 1
    %1781 = vsyncpa [#allocation7], 1
    %1782 = vsyncpa [#allocation10], 1
    %1783 = vsyncpa [#allocation13], 1
    %1784 = vsyncpa [#allocation5], 1

</llo_original>
